<compile_context>
chip_gen: v5e
topology: v5e:2x2
jax: 0.10.0
libtpu: 0.0.40
codegen_flags: <defaults>
</compile_context>

<pallas_src>
import math
import jax
import jax.numpy as jnp
from jax import lax
from jax.experimental import pallas as pl
from jax.experimental.pallas import tpu as pltpu

# ---------------- model hyper-parameters (small, consistent with the module) ----
MODEL_DIM = 32          # model_dimension (divisible by 8 heads)
NUM_HEADS = 8
HEAD_DIM = MODEL_DIM // NUM_HEADS
NUM_LAYERS = 2
SRC_VOCAB = 16
OUT_VOCAB = 16
FF_DIM = 4 * MODEL_DIM  # width_mult=4
EPS = 1e-5              # nn.LayerNorm default eps
MAX_SEQ = 64            # positional-encoding table length (>= any S we use)
SQRT_D = math.sqrt(MODEL_DIM)
INV_SQRT_HD = 1.0 / math.sqrt(HEAD_DIM)
# dropout_probability = 0.0 -> all dropouts are identity (omitted)


# ---------------------------- in-kernel helpers ---------------------------------

def _layernorm(x, g, b):
    # PyTorch LayerNorm: biased variance, eps inside rsqrt.
    mu = jnp.mean(x, axis=-1, keepdims=True)
    xc = x - mu
    var = jnp.mean(xc * xc, axis=-1, keepdims=True)
    return xc * lax.rsqrt(var + EPS) * g + b


def _mm(a, w):
    # MXU matmul: bf16 operands (weights already stored bf16), f32 accumulation.
    return jnp.dot(a.astype(jnp.bfloat16), w, preferred_element_type=jnp.float32)


# ---------------------------- fused forward kernel ------------------------------

def _trans_block_kernel(
        x_ref, emb_w_ref, emb_b_ref, pe_ref,
        ln1_g_ref, ln1_b_ref, wqkv_ref, bqkv_ref, wo_ref, bo_ref,
        ln2_g_ref, ln2_b_ref, w1_ref, b1_ref, w2_ref, b2_ref,
        lnf_g_ref, lnf_b_ref, out_w_ref, out_b_ref,
        o_ref):
    # One grid step == one batch element. All activations stay in VMEM/vregs.
    x = x_ref[0]                                                        # (S, V)

    # Embedding: (x @ W + b) * sqrt(D), then add positional encoding (dropout p=0).
    h = (_mm(x, emb_w_ref[...]) + emb_b_ref[...]) * SQRT_D + pe_ref[...]  # (S, D)

    for l in range(NUM_LAYERS):                     # static unroll over layers
        # ---- sublayer 0: h + MHA(LayerNorm(h)), mask=None ----
        n = _layernorm(h, ln1_g_ref[l], ln1_b_ref[l])                   # (S, D)
        qkv = _mm(n, wqkv_ref[l]) + bqkv_ref[l]                         # (S, 3D)

        attn_proj = jnp.zeros_like(h)                                   # (S, D)
        for hh in range(NUM_HEADS):                 # static unroll over heads
            c = hh * HEAD_DIM
            q = qkv[:, c:c + HEAD_DIM]                                  # (S, Dh)
            k = qkv[:, MODEL_DIM + c:MODEL_DIM + c + HEAD_DIM]          # (S, Dh)
            v = qkv[:, 2 * MODEL_DIM + c:2 * MODEL_DIM + c + HEAD_DIM]  # (S, Dh)
            # scores = q @ k^T / sqrt(Dh)  (contract last axes, no transpose)
            s = lax.dot_general(q, k, (((1,), (1,)), ((), ())),
                                preferred_element_type=jnp.float32) * INV_SQRT_HD
            m = jnp.max(s, axis=-1, keepdims=True)
            e = jnp.exp(s - m)
            p = e * pl.reciprocal(jnp.sum(e, axis=-1, keepdims=True), approx=True)
            head_out = jnp.dot(p, v, preferred_element_type=jnp.float32)  # (S, Dh)
            # merge-heads + out-projection fused:
            #   concat_h(head_out) @ Wo == sum_h head_out_h @ Wo[rows of head h]
            attn_proj = attn_proj + _mm(head_out, wo_ref[l, hh])        # (S, D)
        h = h + attn_proj + bo_ref[l]                                   # residual

        # ---- sublayer 1: h + FFN(LayerNorm(h)) ----
        n = _layernorm(h, ln2_g_ref[l], ln2_b_ref[l])
        ffn = jnp.maximum(_mm(n, w1_ref[l]) + b1_ref[l], 0.0)           # (S, F)
        h = h + _mm(ffn, w2_ref[l]) + b2_ref[l]                         # residual

    # final LayerNorm + output projection to out_vocab_size
    nf = _layernorm(h, lnf_g_ref[...], lnf_b_ref[...])
    o_ref[0] = _mm(nf, out_w_ref[...]) + out_b_ref[...]                 # (S, Vout)


# ---------------------------- pallas_call wrapper --------------------------------

def _full_spec(shape):
    n = len(shape)
    return pl.BlockSpec(shape, lambda b, n=n: (0,) * n)


@jax.jit
def trans_block_forward(params, x):
    B, S, V = x.shape
    pe = params["pe_table"][:S]                     # (S, D), precomputed table

    weights = (
        params["emb_w"], params["emb_b"], pe,
        params["ln1_g"], params["ln1_b"], params["wqkv"], params["bqkv"],
        params["wo_h"], params["bo"],
        params["ln2_g"], params["ln2_b"], params["w1"], params["b1"],
        params["w2"], params["b2"],
        params["lnf_g"], params["lnf_b"], params["out_w"], params["out_b"],
    )

    in_specs = [pl.BlockSpec((1, S, V), lambda b: (b, 0, 0))]
    in_specs += [_full_spec(w.shape) for w in weights]

    return pl.pallas_call(
        _trans_block_kernel,
        out_shape=jax.ShapeDtypeStruct((B, S, OUT_VOCAB), jnp.float32),
        grid=(B,),
        in_specs=in_specs,
        out_specs=pl.BlockSpec((1, S, OUT_VOCAB), lambda b: (b, 0, 0)),
        compiler_params=pltpu.CompilerParams(
            dimension_semantics=("parallel",)),     # shard batch across TCs (v7x)
    )(x, *weights)


# ---------------------------- parameter init -------------------------------------

def make_pe_table(S, D):
    pos = jnp.arange(S, dtype=jnp.float32)[:, None]
    freqs = jnp.power(10000.0, -jnp.arange(0, D, 2, dtype=jnp.float32) / D)
    args = pos * freqs
    pe = jnp.zeros((S, D), jnp.float32)
    pe = pe.at[:, 0::2].set(jnp.sin(args))
    pe = pe.at[:, 1::2].set(jnp.cos(args))
    return pe


def init_params(key):
    keys = iter(jax.random.split(key, 64))

    def rnd(shape, scale=0.05):
        return scale * jax.random.normal(next(keys), shape, jnp.float32)

    ln1_g, ln1_b, wqkv, bqkv, wo_h, bo = [], [], [], [], [], []
    ln2_g, ln2_b, w1, b1, w2, b2 = [], [], [], [], [], []
    for _ in range(NUM_LAYERS):
        ln1_g.append(1.0 + rnd((1, MODEL_DIM)))
        ln1_b.append(rnd((1, MODEL_DIM)))
        wq, wk, wv = (rnd((MODEL_DIM, MODEL_DIM)) for _ in range(3))
        wqkv.append(jnp.concatenate([wq, wk, wv], axis=1))          # (D, 3D) fused
        bqkv.append(jnp.concatenate(
            [rnd((1, MODEL_DIM)), rnd((1, MODEL_DIM)), rnd((1, MODEL_DIM))], axis=1))
        wo = rnd((MODEL_DIM, MODEL_DIM))
        wo_h.append(wo.reshape(NUM_HEADS, HEAD_DIM, MODEL_DIM))     # per-head rows of Wo
        bo.append(rnd((1, MODEL_DIM)))
        ln2_g.append(1.0 + rnd((1, MODEL_DIM)))
        ln2_b.append(rnd((1, MODEL_DIM)))
        w1.append(rnd((MODEL_DIM, FF_DIM)))
        b1.append(rnd((1, FF_DIM)))
        w2.append(rnd((FF_DIM, MODEL_DIM)))
        b2.append(rnd((1, MODEL_DIM)))

    bf16 = jnp.bfloat16
    params = {
        # matmul weights stored bf16 (MXU operands); biases / LN / PE stay f32
        "emb_w": rnd((SRC_VOCAB, MODEL_DIM)).astype(bf16),
        "emb_b": rnd((1, MODEL_DIM)),
        "pe_table": make_pe_table(MAX_SEQ, MODEL_DIM),
        "ln1_g": jnp.stack(ln1_g), "ln1_b": jnp.stack(ln1_b),
        "wqkv": jnp.stack(wqkv).astype(bf16), "bqkv": jnp.stack(bqkv),
        "wo_h": jnp.stack(wo_h).astype(bf16), "bo": jnp.stack(bo),
        "ln2_g": jnp.stack(ln2_g), "ln2_b": jnp.stack(ln2_b),
        "w1": jnp.stack(w1).astype(bf16), "b1": jnp.stack(b1),
        "w2": jnp.stack(w2).astype(bf16), "b2": jnp.stack(b2),
        "lnf_g": 1.0 + rnd((1, MODEL_DIM)), "lnf_b": rnd((1, MODEL_DIM)),
        "out_w": rnd((MODEL_DIM, OUT_VOCAB)).astype(bf16),
        "out_b": rnd((1, OUT_VOCAB)),
    }
    return params


if __name__ == "__main__":
    key = jax.random.PRNGKey(0)
    k_params, k_x = jax.random.split(key)

    params = init_params(k_params)
    B, S = 2, 8
    # token_ids_batch is fed to nn.Linear in the reference, i.e. a dense (B,S,V) tensor
    x = jax.random.normal(k_x, (B, S, SRC_VOCAB), jnp.float32)

    out = trans_block_forward(params, x)
    jax.block_until_ready(out)

    assert out.shape == (B, S, OUT_VOCAB)
    assert bool(jnp.all(jnp.isfinite(out)))
    print("KERNEL_OK")
</pallas_src>

<mosaic_0001>
module attributes {stable_mosaic.version = 11 : i64} {
  func.func @_trans_block_kernel(%arg0: i32, %arg1: memref<1x8x16xf32, #tpu.memory_space<vmem>>, %arg2: memref<16x32xbf16, #tpu.memory_space<vmem>>, %arg3: memref<1x32xf32, #tpu.memory_space<vmem>>, %arg4: memref<8x32xf32, #tpu.memory_space<vmem>>, %arg5: memref<2x1x32xf32, #tpu.memory_space<vmem>>, %arg6: memref<2x1x32xf32, #tpu.memory_space<vmem>>, %arg7: memref<2x32x96xbf16, #tpu.memory_space<vmem>>, %arg8: memref<2x1x96xf32, #tpu.memory_space<vmem>>, %arg9: memref<2x8x4x32xbf16, #tpu.memory_space<vmem>>, %arg10: memref<2x1x32xf32, #tpu.memory_space<vmem>>, %arg11: memref<2x1x32xf32, #tpu.memory_space<vmem>>, %arg12: memref<2x1x32xf32, #tpu.memory_space<vmem>>, %arg13: memref<2x32x128xbf16, #tpu.memory_space<vmem>>, %arg14: memref<2x1x128xf32, #tpu.memory_space<vmem>>, %arg15: memref<2x128x32xbf16, #tpu.memory_space<vmem>>, %arg16: memref<2x1x32xf32, #tpu.memory_space<vmem>>, %arg17: memref<1x32xf32, #tpu.memory_space<vmem>>, %arg18: memref<1x32xf32, #tpu.memory_space<vmem>>, %arg19: memref<32x16xbf16, #tpu.memory_space<vmem>>, %arg20: memref<1x16xf32, #tpu.memory_space<vmem>>, %arg21: memref<1x8x16xf32, #tpu.memory_space<vmem>>) attributes {dimension_semantics = [#tpu.dimension_semantics<parallel>], iteration_bounds = array<i64: 2>, scalar_prefetch = 0 : i64, scratch_operands = 0 : i64, tpu.core_type = #tpu.core_type<tc>, window_params = [{transform_indices = @transform_0, window_bounds = array<i64: 1, 8, 16>}, {pipeline_mode = #tpu.pipeline_mode<synchronous>, transform_indices = @transform_1, window_bounds = array<i64: 16, 32>}, {pipeline_mode = #tpu.pipeline_mode<synchronous>, transform_indices = @transform_2, window_bounds = array<i64: 1, 32>}, {pipeline_mode = #tpu.pipeline_mode<synchronous>, transform_indices = @transform_3, window_bounds = array<i64: 8, 32>}, {pipeline_mode = #tpu.pipeline_mode<synchronous>, transform_indices = @transform_4, window_bounds = array<i64: 2, 1, 32>}, {pipeline_mode = #tpu.pipeline_mode<synchronous>, transform_indices = @transform_5, window_bounds = array<i64: 2, 1, 32>}, {pipeline_mode = #tpu.pipeline_mode<synchronous>, transform_indices = @transform_6, window_bounds = array<i64: 2, 32, 96>}, {pipeline_mode = #tpu.pipeline_mode<synchronous>, transform_indices = @transform_7, window_bounds = array<i64: 2, 1, 96>}, {pipeline_mode = #tpu.pipeline_mode<synchronous>, transform_indices = @transform_8, window_bounds = array<i64: 2, 8, 4, 32>}, {pipeline_mode = #tpu.pipeline_mode<synchronous>, transform_indices = @transform_9, window_bounds = array<i64: 2, 1, 32>}, {pipeline_mode = #tpu.pipeline_mode<synchronous>, transform_indices = @transform_10, window_bounds = array<i64: 2, 1, 32>}, {pipeline_mode = #tpu.pipeline_mode<synchronous>, transform_indices = @transform_11, window_bounds = array<i64: 2, 1, 32>}, {pipeline_mode = #tpu.pipeline_mode<synchronous>, transform_indices = @transform_12, window_bounds = array<i64: 2, 32, 128>}, {pipeline_mode = #tpu.pipeline_mode<synchronous>, transform_indices = @transform_13, window_bounds = array<i64: 2, 1, 128>}, {pipeline_mode = #tpu.pipeline_mode<synchronous>, transform_indices = @transform_14, window_bounds = array<i64: 2, 128, 32>}, {pipeline_mode = #tpu.pipeline_mode<synchronous>, transform_indices = @transform_15, window_bounds = array<i64: 2, 1, 32>}, {pipeline_mode = #tpu.pipeline_mode<synchronous>, transform_indices = @transform_16, window_bounds = array<i64: 1, 32>}, {pipeline_mode = #tpu.pipeline_mode<synchronous>, transform_indices = @transform_17, window_bounds = array<i64: 1, 32>}, {pipeline_mode = #tpu.pipeline_mode<synchronous>, transform_indices = @transform_18, window_bounds = array<i64: 32, 16>}, {pipeline_mode = #tpu.pipeline_mode<synchronous>, transform_indices = @transform_19, window_bounds = array<i64: 1, 16>}, {transform_indices = @transform_20, window_bounds = array<i64: 1, 8, 16>}]} {
    %c0 = arith.constant 0 : index
    %c0_0 = arith.constant 0 : index
    %c0_1 = arith.constant 0 : index
    %0 = vector.load %arg1[%c0, %c0_0, %c0_1] : memref<1x8x16xf32, #tpu.memory_space<vmem>>, vector<1x8x16xf32>
    %1 = vector.shape_cast %0 : vector<1x8x16xf32> to vector<8x16xf32>
    %c0_2 = arith.constant 0 : index
    %c0_3 = arith.constant 0 : index
    %2 = vector.load %arg2[%c0_2, %c0_3] : memref<16x32xbf16, #tpu.memory_space<vmem>>, vector<16x32xbf16>
    %3 = arith.truncf %1 : vector<8x16xf32> to vector<8x16xbf16>
    %cst = arith.constant dense<0.000000e+00> : vector<8x32xf32>
    %4 = tpu.matmul %3, %2, %cst {dimension_numbers = #tpu.dot_dimension_numbers<[1], [0], [0], [1], [0, 0, 1, 1], [], []>} : vector<8x16xbf16>, vector<16x32xbf16>, vector<8x32xf32> -> vector<8x32xf32>
    %c0_4 = arith.constant 0 : index
    %c0_5 = arith.constant 0 : index
    %5 = vector.load %arg3[%c0_4, %c0_5] : memref<1x32xf32, #tpu.memory_space<vmem>>, vector<1x32xf32>
    %6 = vector.broadcast %5 : vector<1x32xf32> to vector<8x32xf32>
    %7 = arith.addf %4, %6 : vector<8x32xf32>
    %cst_6 = arith.constant 5.65685415 : f32
    %8 = vector.broadcast %cst_6 : f32 to vector<8x32xf32>
    %9 = arith.mulf %7, %8 : vector<8x32xf32>
    %c0_7 = arith.constant 0 : index
    %c0_8 = arith.constant 0 : index
    %10 = vector.load %arg4[%c0_7, %c0_8] : memref<8x32xf32, #tpu.memory_space<vmem>>, vector<8x32xf32>
    %11 = arith.addf %9, %10 : vector<8x32xf32>
    %c0_9 = arith.constant 0 : index
    %c0_10 = arith.constant 0 : index
    %c0_11 = arith.constant 0 : index
    %12 = vector.load %arg5[%c0_9, %c0_10, %c0_11] : memref<2x1x32xf32, #tpu.memory_space<vmem>>, vector<1x1x32xf32>
    %13 = vector.shape_cast %12 : vector<1x1x32xf32> to vector<1x32xf32>
    %c0_12 = arith.constant 0 : index
    %c0_13 = arith.constant 0 : index
    %c0_14 = arith.constant 0 : index
    %14 = vector.load %arg6[%c0_12, %c0_13, %c0_14] : memref<2x1x32xf32, #tpu.memory_space<vmem>>, vector<1x1x32xf32>
    %15 = vector.shape_cast %14 : vector<1x1x32xf32> to vector<1x32xf32>
    %cst_15 = arith.constant dense<0.000000e+00> : vector<8xf32>
    %16 = vector.multi_reduction <add>, %11, %cst_15 [1] : vector<8x32xf32> to vector<8xf32>
    %17 = vector.shape_cast %16 : vector<8xf32> to vector<8x1xf32>
    %cst_16 = arith.constant 3.200000e+01 : f32
    %18 = vector.broadcast %cst_16 : f32 to vector<8x1xf32>
    %19 = arith.divf %17, %18 : vector<8x1xf32>
    %20 = vector.broadcast %19 : vector<8x1xf32> to vector<8x32xf32>
    %21 = arith.subf %11, %20 : vector<8x32xf32>
    %22 = arith.mulf %21, %21 : vector<8x32xf32>
    %cst_17 = arith.constant dense<0.000000e+00> : vector<8xf32>
    %23 = vector.multi_reduction <add>, %22, %cst_17 [1] : vector<8x32xf32> to vector<8xf32>
    %24 = vector.shape_cast %23 : vector<8xf32> to vector<8x1xf32>
    %cst_18 = arith.constant 3.200000e+01 : f32
    %25 = vector.broadcast %cst_18 : f32 to vector<8x1xf32>
    %26 = arith.divf %24, %25 : vector<8x1xf32>
    %cst_19 = arith.constant 9.99999974E-6 : f32
    %27 = vector.broadcast %cst_19 : f32 to vector<8x1xf32>
    %28 = arith.addf %26, %27 : vector<8x1xf32>
    %29 = math.rsqrt %28 : vector<8x1xf32>
    %30 = vector.broadcast %29 : vector<8x1xf32> to vector<8x32xf32>
    %31 = arith.mulf %21, %30 : vector<8x32xf32>
    %32 = vector.broadcast %13 : vector<1x32xf32> to vector<8x32xf32>
    %33 = arith.mulf %31, %32 : vector<8x32xf32>
    %34 = vector.broadcast %15 : vector<1x32xf32> to vector<8x32xf32>
    %35 = arith.addf %33, %34 : vector<8x32xf32>
    %c0_20 = arith.constant 0 : index
    %c0_21 = arith.constant 0 : index
    %c0_22 = arith.constant 0 : index
    %36 = vector.load %arg7[%c0_20, %c0_21, %c0_22] : memref<2x32x96xbf16, #tpu.memory_space<vmem>>, vector<1x32x96xbf16>
    %37 = vector.shape_cast %36 : vector<1x32x96xbf16> to vector<32x96xbf16>
    %38 = arith.truncf %35 : vector<8x32xf32> to vector<8x32xbf16>
    %cst_23 = arith.constant dense<0.000000e+00> : vector<8x96xf32>
    %39 = tpu.matmul %38, %37, %cst_23 {dimension_numbers = #tpu.dot_dimension_numbers<[1], [0], [0], [1], [0, 0, 1, 1], [], []>} : vector<8x32xbf16>, vector<32x96xbf16>, vector<8x96xf32> -> vector<8x96xf32>
    %c0_24 = arith.constant 0 : index
    %c0_25 = arith.constant 0 : index
    %c0_26 = arith.constant 0 : index
    %40 = vector.load %arg8[%c0_24, %c0_25, %c0_26] : memref<2x1x96xf32, #tpu.memory_space<vmem>>, vector<1x1x96xf32>
    %41 = vector.shape_cast %40 : vector<1x1x96xf32> to vector<1x96xf32>
    %42 = vector.broadcast %41 : vector<1x96xf32> to vector<8x96xf32>
    %43 = arith.addf %39, %42 : vector<8x96xf32>
    %cst_27 = arith.constant 0.000000e+00 : f32
    %44 = vector.broadcast %cst_27 : f32 to vector<8x32xf32>
    %45 = vector.extract_strided_slice %43 {offsets = [0, 0], sizes = [8, 4], strides = [1, 1]} : vector<8x96xf32> to vector<8x4xf32>
    %46 = vector.extract_strided_slice %43 {offsets = [0, 32], sizes = [8, 4], strides = [1, 1]} : vector<8x96xf32> to vector<8x4xf32>
    %47 = vector.extract_strided_slice %43 {offsets = [0, 64], sizes = [8, 4], strides = [1, 1]} : vector<8x96xf32> to vector<8x4xf32>
    %cst_28 = arith.constant dense<0.000000e+00> : vector<8x8xf32>
    %48 = tpu.matmul %45, %46, %cst_28 {dimension_numbers = #tpu.dot_dimension_numbers<[1], [1], [0], [0], [0, 0, 1, 0], [], []>} : vector<8x4xf32>, vector<8x4xf32>, vector<8x8xf32> -> vector<8x8xf32>
    %cst_29 = arith.constant 5.000000e-01 : f32
    %49 = vector.broadcast %cst_29 : f32 to vector<8x8xf32>
    %50 = arith.mulf %48, %49 : vector<8x8xf32>
    %cst_30 = arith.constant dense<0xFF800000> : vector<8xf32>
    %51 = vector.multi_reduction <maximumf>, %50, %cst_30 [1] : vector<8x8xf32> to vector<8xf32>
    %52 = vector.shape_cast %51 : vector<8xf32> to vector<8x1xf32>
    %53 = vector.broadcast %52 : vector<8x1xf32> to vector<8x8xf32>
    %54 = arith.subf %50, %53 : vector<8x8xf32>
    %55 = math.exp %54 : vector<8x8xf32>
    %cst_31 = arith.constant dense<0.000000e+00> : vector<8xf32>
    %56 = vector.multi_reduction <add>, %55, %cst_31 [1] : vector<8x8xf32> to vector<8xf32>
    %57 = vector.shape_cast %56 : vector<8xf32> to vector<8x1xf32>
    %58 = tpu.reciprocal %57 {approx = true} : vector<8x1xf32> -> vector<8x1xf32>
    %59 = vector.broadcast %58 : vector<8x1xf32> to vector<8x8xf32>
    %60 = arith.mulf %55, %59 : vector<8x8xf32>
    %cst_32 = arith.constant dense<0.000000e+00> : vector<8x4xf32>
    %61 = tpu.matmul %60, %47, %cst_32 {dimension_numbers = #tpu.dot_dimension_numbers<[1], [0], [0], [1], [0, 0, 1, 1], [], []>} : vector<8x8xf32>, vector<8x4xf32>, vector<8x4xf32> -> vector<8x4xf32>
    %c0_33 = arith.constant 0 : index
    %c0_34 = arith.constant 0 : index
    %c0_35 = arith.constant 0 : index
    %c0_36 = arith.constant 0 : index
    %62 = vector.load %arg9[%c0_33, %c0_34, %c0_35, %c0_36] : memref<2x8x4x32xbf16, #tpu.memory_space<vmem>>, vector<1x1x4x32xbf16>
    %63 = vector.shape_cast %62 : vector<1x1x4x32xbf16> to vector<4x32xbf16>
    %64 = arith.truncf %61 : vector<8x4xf32> to vector<8x4xbf16>
    %cst_37 = arith.constant dense<0.000000e+00> : vector<8x32xf32>
    %65 = tpu.matmul %64, %63, %cst_37 {dimension_numbers = #tpu.dot_dimension_numbers<[1], [0], [0], [1], [0, 0, 1, 1], [], []>} : vector<8x4xbf16>, vector<4x32xbf16>, vector<8x32xf32> -> vector<8x32xf32>
    %66 = arith.addf %44, %65 : vector<8x32xf32>
    %67 = vector.extract_strided_slice %43 {offsets = [0, 4], sizes = [8, 4], strides = [1, 1]} : vector<8x96xf32> to vector<8x4xf32>
    %68 = vector.extract_strided_slice %43 {offsets = [0, 36], sizes = [8, 4], strides = [1, 1]} : vector<8x96xf32> to vector<8x4xf32>
    %69 = vector.extract_strided_slice %43 {offsets = [0, 68], sizes = [8, 4], strides = [1, 1]} : vector<8x96xf32> to vector<8x4xf32>
    %cst_38 = arith.constant dense<0.000000e+00> : vector<8x8xf32>
    %70 = tpu.matmul %67, %68, %cst_38 {dimension_numbers = #tpu.dot_dimension_numbers<[1], [1], [0], [0], [0, 0, 1, 0], [], []>} : vector<8x4xf32>, vector<8x4xf32>, vector<8x8xf32> -> vector<8x8xf32>
    %cst_39 = arith.constant 5.000000e-01 : f32
    %71 = vector.broadcast %cst_39 : f32 to vector<8x8xf32>
    %72 = arith.mulf %70, %71 : vector<8x8xf32>
    %cst_40 = arith.constant dense<0xFF800000> : vector<8xf32>
    %73 = vector.multi_reduction <maximumf>, %72, %cst_40 [1] : vector<8x8xf32> to vector<8xf32>
    %74 = vector.shape_cast %73 : vector<8xf32> to vector<8x1xf32>
    %75 = vector.broadcast %74 : vector<8x1xf32> to vector<8x8xf32>
    %76 = arith.subf %72, %75 : vector<8x8xf32>
    %77 = math.exp %76 : vector<8x8xf32>
    %cst_41 = arith.constant dense<0.000000e+00> : vector<8xf32>
    %78 = vector.multi_reduction <add>, %77, %cst_41 [1] : vector<8x8xf32> to vector<8xf32>
    %79 = vector.shape_cast %78 : vector<8xf32> to vector<8x1xf32>
    %80 = tpu.reciprocal %79 {approx = true} : vector<8x1xf32> -> vector<8x1xf32>
    %81 = vector.broadcast %80 : vector<8x1xf32> to vector<8x8xf32>
    %82 = arith.mulf %77, %81 : vector<8x8xf32>
    %cst_42 = arith.constant dense<0.000000e+00> : vector<8x4xf32>
    %83 = tpu.matmul %82, %69, %cst_42 {dimension_numbers = #tpu.dot_dimension_numbers<[1], [0], [0], [1], [0, 0, 1, 1], [], []>} : vector<8x8xf32>, vector<8x4xf32>, vector<8x4xf32> -> vector<8x4xf32>
    %c0_43 = arith.constant 0 : index
    %c1 = arith.constant 1 : index
    %c0_44 = arith.constant 0 : index
    %c0_45 = arith.constant 0 : index
    %84 = vector.load %arg9[%c0_43, %c1, %c0_44, %c0_45] : memref<2x8x4x32xbf16, #tpu.memory_space<vmem>>, vector<1x1x4x32xbf16>
    %85 = vector.shape_cast %84 : vector<1x1x4x32xbf16> to vector<4x32xbf16>
    %86 = arith.truncf %83 : vector<8x4xf32> to vector<8x4xbf16>
    %cst_46 = arith.constant dense<0.000000e+00> : vector<8x32xf32>
    %87 = tpu.matmul %86, %85, %cst_46 {dimension_numbers = #tpu.dot_dimension_numbers<[1], [0], [0], [1], [0, 0, 1, 1], [], []>} : vector<8x4xbf16>, vector<4x32xbf16>, vector<8x32xf32> -> vector<8x32xf32>
    %88 = arith.addf %66, %87 : vector<8x32xf32>
    %89 = vector.extract_strided_slice %43 {offsets = [0, 8], sizes = [8, 4], strides = [1, 1]} : vector<8x96xf32> to vector<8x4xf32>
    %90 = vector.extract_strided_slice %43 {offsets = [0, 40], sizes = [8, 4], strides = [1, 1]} : vector<8x96xf32> to vector<8x4xf32>
    %91 = vector.extract_strided_slice %43 {offsets = [0, 72], sizes = [8, 4], strides = [1, 1]} : vector<8x96xf32> to vector<8x4xf32>
    %cst_47 = arith.constant dense<0.000000e+00> : vector<8x8xf32>
    %92 = tpu.matmul %89, %90, %cst_47 {dimension_numbers = #tpu.dot_dimension_numbers<[1], [1], [0], [0], [0, 0, 1, 0], [], []>} : vector<8x4xf32>, vector<8x4xf32>, vector<8x8xf32> -> vector<8x8xf32>
    %cst_48 = arith.constant 5.000000e-01 : f32
    %93 = vector.broadcast %cst_48 : f32 to vector<8x8xf32>
    %94 = arith.mulf %92, %93 : vector<8x8xf32>
    %cst_49 = arith.constant dense<0xFF800000> : vector<8xf32>
    %95 = vector.multi_reduction <maximumf>, %94, %cst_49 [1] : vector<8x8xf32> to vector<8xf32>
    %96 = vector.shape_cast %95 : vector<8xf32> to vector<8x1xf32>
    %97 = vector.broadcast %96 : vector<8x1xf32> to vector<8x8xf32>
    %98 = arith.subf %94, %97 : vector<8x8xf32>
    %99 = math.exp %98 : vector<8x8xf32>
    %cst_50 = arith.constant dense<0.000000e+00> : vector<8xf32>
    %100 = vector.multi_reduction <add>, %99, %cst_50 [1] : vector<8x8xf32> to vector<8xf32>
    %101 = vector.shape_cast %100 : vector<8xf32> to vector<8x1xf32>
    %102 = tpu.reciprocal %101 {approx = true} : vector<8x1xf32> -> vector<8x1xf32>
    %103 = vector.broadcast %102 : vector<8x1xf32> to vector<8x8xf32>
    %104 = arith.mulf %99, %103 : vector<8x8xf32>
    %cst_51 = arith.constant dense<0.000000e+00> : vector<8x4xf32>
    %105 = tpu.matmul %104, %91, %cst_51 {dimension_numbers = #tpu.dot_dimension_numbers<[1], [0], [0], [1], [0, 0, 1, 1], [], []>} : vector<8x8xf32>, vector<8x4xf32>, vector<8x4xf32> -> vector<8x4xf32>
    %c0_52 = arith.constant 0 : index
    %c2 = arith.constant 2 : index
    %c0_53 = arith.constant 0 : index
    %c0_54 = arith.constant 0 : index
    %106 = vector.load %arg9[%c0_52, %c2, %c0_53, %c0_54] : memref<2x8x4x32xbf16, #tpu.memory_space<vmem>>, vector<1x1x4x32xbf16>
    %107 = vector.shape_cast %106 : vector<1x1x4x32xbf16> to vector<4x32xbf16>
    %108 = arith.truncf %105 : vector<8x4xf32> to vector<8x4xbf16>
    %cst_55 = arith.constant dense<0.000000e+00> : vector<8x32xf32>
    %109 = tpu.matmul %108, %107, %cst_55 {dimension_numbers = #tpu.dot_dimension_numbers<[1], [0], [0], [1], [0, 0, 1, 1], [], []>} : vector<8x4xbf16>, vector<4x32xbf16>, vector<8x32xf32> -> vector<8x32xf32>
    %110 = arith.addf %88, %109 : vector<8x32xf32>
    %111 = vector.extract_strided_slice %43 {offsets = [0, 12], sizes = [8, 4], strides = [1, 1]} : vector<8x96xf32> to vector<8x4xf32>
    %112 = vector.extract_strided_slice %43 {offsets = [0, 44], sizes = [8, 4], strides = [1, 1]} : vector<8x96xf32> to vector<8x4xf32>
    %113 = vector.extract_strided_slice %43 {offsets = [0, 76], sizes = [8, 4], strides = [1, 1]} : vector<8x96xf32> to vector<8x4xf32>
    %cst_56 = arith.constant dense<0.000000e+00> : vector<8x8xf32>
    %114 = tpu.matmul %111, %112, %cst_56 {dimension_numbers = #tpu.dot_dimension_numbers<[1], [1], [0], [0], [0, 0, 1, 0], [], []>} : vector<8x4xf32>, vector<8x4xf32>, vector<8x8xf32> -> vector<8x8xf32>
    %cst_57 = arith.constant 5.000000e-01 : f32
    %115 = vector.broadcast %cst_57 : f32 to vector<8x8xf32>
    %116 = arith.mulf %114, %115 : vector<8x8xf32>
    %cst_58 = arith.constant dense<0xFF800000> : vector<8xf32>
    %117 = vector.multi_reduction <maximumf>, %116, %cst_58 [1] : vector<8x8xf32> to vector<8xf32>
    %118 = vector.shape_cast %117 : vector<8xf32> to vector<8x1xf32>
    %119 = vector.broadcast %118 : vector<8x1xf32> to vector<8x8xf32>
    %120 = arith.subf %116, %119 : vector<8x8xf32>
    %121 = math.exp %120 : vector<8x8xf32>
    %cst_59 = arith.constant dense<0.000000e+00> : vector<8xf32>
    %122 = vector.multi_reduction <add>, %121, %cst_59 [1] : vector<8x8xf32> to vector<8xf32>
    %123 = vector.shape_cast %122 : vector<8xf32> to vector<8x1xf32>
    %124 = tpu.reciprocal %123 {approx = true} : vector<8x1xf32> -> vector<8x1xf32>
    %125 = vector.broadcast %124 : vector<8x1xf32> to vector<8x8xf32>
    %126 = arith.mulf %121, %125 : vector<8x8xf32>
    %cst_60 = arith.constant dense<0.000000e+00> : vector<8x4xf32>
    %127 = tpu.matmul %126, %113, %cst_60 {dimension_numbers = #tpu.dot_dimension_numbers<[1], [0], [0], [1], [0, 0, 1, 1], [], []>} : vector<8x8xf32>, vector<8x4xf32>, vector<8x4xf32> -> vector<8x4xf32>
    %c0_61 = arith.constant 0 : index
    %c3 = arith.constant 3 : index
    %c0_62 = arith.constant 0 : index
    %c0_63 = arith.constant 0 : index
    %128 = vector.load %arg9[%c0_61, %c3, %c0_62, %c0_63] : memref<2x8x4x32xbf16, #tpu.memory_space<vmem>>, vector<1x1x4x32xbf16>
    %129 = vector.shape_cast %128 : vector<1x1x4x32xbf16> to vector<4x32xbf16>
    %130 = arith.truncf %127 : vector<8x4xf32> to vector<8x4xbf16>
    %cst_64 = arith.constant dense<0.000000e+00> : vector<8x32xf32>
    %131 = tpu.matmul %130, %129, %cst_64 {dimension_numbers = #tpu.dot_dimension_numbers<[1], [0], [0], [1], [0, 0, 1, 1], [], []>} : vector<8x4xbf16>, vector<4x32xbf16>, vector<8x32xf32> -> vector<8x32xf32>
    %132 = arith.addf %110, %131 : vector<8x32xf32>
    %133 = vector.extract_strided_slice %43 {offsets = [0, 16], sizes = [8, 4], strides = [1, 1]} : vector<8x96xf32> to vector<8x4xf32>
    %134 = vector.extract_strided_slice %43 {offsets = [0, 48], sizes = [8, 4], strides = [1, 1]} : vector<8x96xf32> to vector<8x4xf32>
    %135 = vector.extract_strided_slice %43 {offsets = [0, 80], sizes = [8, 4], strides = [1, 1]} : vector<8x96xf32> to vector<8x4xf32>
    %cst_65 = arith.constant dense<0.000000e+00> : vector<8x8xf32>
    %136 = tpu.matmul %133, %134, %cst_65 {dimension_numbers = #tpu.dot_dimension_numbers<[1], [1], [0], [0], [0, 0, 1, 0], [], []>} : vector<8x4xf32>, vector<8x4xf32>, vector<8x8xf32> -> vector<8x8xf32>
    %cst_66 = arith.constant 5.000000e-01 : f32
    %137 = vector.broadcast %cst_66 : f32 to vector<8x8xf32>
    %138 = arith.mulf %136, %137 : vector<8x8xf32>
    %cst_67 = arith.constant dense<0xFF800000> : vector<8xf32>
    %139 = vector.multi_reduction <maximumf>, %138, %cst_67 [1] : vector<8x8xf32> to vector<8xf32>
    %140 = vector.shape_cast %139 : vector<8xf32> to vector<8x1xf32>
    %141 = vector.broadcast %140 : vector<8x1xf32> to vector<8x8xf32>
    %142 = arith.subf %138, %141 : vector<8x8xf32>
    %143 = math.exp %142 : vector<8x8xf32>
    %cst_68 = arith.constant dense<0.000000e+00> : vector<8xf32>
    %144 = vector.multi_reduction <add>, %143, %cst_68 [1] : vector<8x8xf32> to vector<8xf32>
    %145 = vector.shape_cast %144 : vector<8xf32> to vector<8x1xf32>
    %146 = tpu.reciprocal %145 {approx = true} : vector<8x1xf32> -> vector<8x1xf32>
    %147 = vector.broadcast %146 : vector<8x1xf32> to vector<8x8xf32>
    %148 = arith.mulf %143, %147 : vector<8x8xf32>
    %cst_69 = arith.constant dense<0.000000e+00> : vector<8x4xf32>
    %149 = tpu.matmul %148, %135, %cst_69 {dimension_numbers = #tpu.dot_dimension_numbers<[1], [0], [0], [1], [0, 0, 1, 1], [], []>} : vector<8x8xf32>, vector<8x4xf32>, vector<8x4xf32> -> vector<8x4xf32>
    %c0_70 = arith.constant 0 : index
    %c4 = arith.constant 4 : index
    %c0_71 = arith.constant 0 : index
    %c0_72 = arith.constant 0 : index
    %150 = vector.load %arg9[%c0_70, %c4, %c0_71, %c0_72] : memref<2x8x4x32xbf16, #tpu.memory_space<vmem>>, vector<1x1x4x32xbf16>
    %151 = vector.shape_cast %150 : vector<1x1x4x32xbf16> to vector<4x32xbf16>
    %152 = arith.truncf %149 : vector<8x4xf32> to vector<8x4xbf16>
    %cst_73 = arith.constant dense<0.000000e+00> : vector<8x32xf32>
    %153 = tpu.matmul %152, %151, %cst_73 {dimension_numbers = #tpu.dot_dimension_numbers<[1], [0], [0], [1], [0, 0, 1, 1], [], []>} : vector<8x4xbf16>, vector<4x32xbf16>, vector<8x32xf32> -> vector<8x32xf32>
    %154 = arith.addf %132, %153 : vector<8x32xf32>
    %155 = vector.extract_strided_slice %43 {offsets = [0, 20], sizes = [8, 4], strides = [1, 1]} : vector<8x96xf32> to vector<8x4xf32>
    %156 = vector.extract_strided_slice %43 {offsets = [0, 52], sizes = [8, 4], strides = [1, 1]} : vector<8x96xf32> to vector<8x4xf32>
    %157 = vector.extract_strided_slice %43 {offsets = [0, 84], sizes = [8, 4], strides = [1, 1]} : vector<8x96xf32> to vector<8x4xf32>
    %cst_74 = arith.constant dense<0.000000e+00> : vector<8x8xf32>
    %158 = tpu.matmul %155, %156, %cst_74 {dimension_numbers = #tpu.dot_dimension_numbers<[1], [1], [0], [0], [0, 0, 1, 0], [], []>} : vector<8x4xf32>, vector<8x4xf32>, vector<8x8xf32> -> vector<8x8xf32>
    %cst_75 = arith.constant 5.000000e-01 : f32
    %159 = vector.broadcast %cst_75 : f32 to vector<8x8xf32>
    %160 = arith.mulf %158, %159 : vector<8x8xf32>
    %cst_76 = arith.constant dense<0xFF800000> : vector<8xf32>
    %161 = vector.multi_reduction <maximumf>, %160, %cst_76 [1] : vector<8x8xf32> to vector<8xf32>
    %162 = vector.shape_cast %161 : vector<8xf32> to vector<8x1xf32>
    %163 = vector.broadcast %162 : vector<8x1xf32> to vector<8x8xf32>
    %164 = arith.subf %160, %163 : vector<8x8xf32>
    %165 = math.exp %164 : vector<8x8xf32>
    %cst_77 = arith.constant dense<0.000000e+00> : vector<8xf32>
    %166 = vector.multi_reduction <add>, %165, %cst_77 [1] : vector<8x8xf32> to vector<8xf32>
    %167 = vector.shape_cast %166 : vector<8xf32> to vector<8x1xf32>
    %168 = tpu.reciprocal %167 {approx = true} : vector<8x1xf32> -> vector<8x1xf32>
    %169 = vector.broadcast %168 : vector<8x1xf32> to vector<8x8xf32>
    %170 = arith.mulf %165, %169 : vector<8x8xf32>
    %cst_78 = arith.constant dense<0.000000e+00> : vector<8x4xf32>
    %171 = tpu.matmul %170, %157, %cst_78 {dimension_numbers = #tpu.dot_dimension_numbers<[1], [0], [0], [1], [0, 0, 1, 1], [], []>} : vector<8x8xf32>, vector<8x4xf32>, vector<8x4xf32> -> vector<8x4xf32>
    %c0_79 = arith.constant 0 : index
    %c5 = arith.constant 5 : index
    %c0_80 = arith.constant 0 : index
    %c0_81 = arith.constant 0 : index
    %172 = vector.load %arg9[%c0_79, %c5, %c0_80, %c0_81] : memref<2x8x4x32xbf16, #tpu.memory_space<vmem>>, vector<1x1x4x32xbf16>
    %173 = vector.shape_cast %172 : vector<1x1x4x32xbf16> to vector<4x32xbf16>
    %174 = arith.truncf %171 : vector<8x4xf32> to vector<8x4xbf16>
    %cst_82 = arith.constant dense<0.000000e+00> : vector<8x32xf32>
    %175 = tpu.matmul %174, %173, %cst_82 {dimension_numbers = #tpu.dot_dimension_numbers<[1], [0], [0], [1], [0, 0, 1, 1], [], []>} : vector<8x4xbf16>, vector<4x32xbf16>, vector<8x32xf32> -> vector<8x32xf32>
    %176 = arith.addf %154, %175 : vector<8x32xf32>
    %177 = vector.extract_strided_slice %43 {offsets = [0, 24], sizes = [8, 4], strides = [1, 1]} : vector<8x96xf32> to vector<8x4xf32>
    %178 = vector.extract_strided_slice %43 {offsets = [0, 56], sizes = [8, 4], strides = [1, 1]} : vector<8x96xf32> to vector<8x4xf32>
    %179 = vector.extract_strided_slice %43 {offsets = [0, 88], sizes = [8, 4], strides = [1, 1]} : vector<8x96xf32> to vector<8x4xf32>
    %cst_83 = arith.constant dense<0.000000e+00> : vector<8x8xf32>
    %180 = tpu.matmul %177, %178, %cst_83 {dimension_numbers = #tpu.dot_dimension_numbers<[1], [1], [0], [0], [0, 0, 1, 0], [], []>} : vector<8x4xf32>, vector<8x4xf32>, vector<8x8xf32> -> vector<8x8xf32>
    %cst_84 = arith.constant 5.000000e-01 : f32
    %181 = vector.broadcast %cst_84 : f32 to vector<8x8xf32>
    %182 = arith.mulf %180, %181 : vector<8x8xf32>
    %cst_85 = arith.constant dense<0xFF800000> : vector<8xf32>
    %183 = vector.multi_reduction <maximumf>, %182, %cst_85 [1] : vector<8x8xf32> to vector<8xf32>
    %184 = vector.shape_cast %183 : vector<8xf32> to vector<8x1xf32>
    %185 = vector.broadcast %184 : vector<8x1xf32> to vector<8x8xf32>
    %186 = arith.subf %182, %185 : vector<8x8xf32>
    %187 = math.exp %186 : vector<8x8xf32>
    %cst_86 = arith.constant dense<0.000000e+00> : vector<8xf32>
    %188 = vector.multi_reduction <add>, %187, %cst_86 [1] : vector<8x8xf32> to vector<8xf32>
    %189 = vector.shape_cast %188 : vector<8xf32> to vector<8x1xf32>
    %190 = tpu.reciprocal %189 {approx = true} : vector<8x1xf32> -> vector<8x1xf32>
    %191 = vector.broadcast %190 : vector<8x1xf32> to vector<8x8xf32>
    %192 = arith.mulf %187, %191 : vector<8x8xf32>
    %cst_87 = arith.constant dense<0.000000e+00> : vector<8x4xf32>
    %193 = tpu.matmul %192, %179, %cst_87 {dimension_numbers = #tpu.dot_dimension_numbers<[1], [0], [0], [1], [0, 0, 1, 1], [], []>} : vector<8x8xf32>, vector<8x4xf32>, vector<8x4xf32> -> vector<8x4xf32>
    %c0_88 = arith.constant 0 : index
    %c6 = arith.constant 6 : index
    %c0_89 = arith.constant 0 : index
    %c0_90 = arith.constant 0 : index
    %194 = vector.load %arg9[%c0_88, %c6, %c0_89, %c0_90] : memref<2x8x4x32xbf16, #tpu.memory_space<vmem>>, vector<1x1x4x32xbf16>
    %195 = vector.shape_cast %194 : vector<1x1x4x32xbf16> to vector<4x32xbf16>
    %196 = arith.truncf %193 : vector<8x4xf32> to vector<8x4xbf16>
    %cst_91 = arith.constant dense<0.000000e+00> : vector<8x32xf32>
    %197 = tpu.matmul %196, %195, %cst_91 {dimension_numbers = #tpu.dot_dimension_numbers<[1], [0], [0], [1], [0, 0, 1, 1], [], []>} : vector<8x4xbf16>, vector<4x32xbf16>, vector<8x32xf32> -> vector<8x32xf32>
    %198 = arith.addf %176, %197 : vector<8x32xf32>
    %199 = vector.extract_strided_slice %43 {offsets = [0, 28], sizes = [8, 4], strides = [1, 1]} : vector<8x96xf32> to vector<8x4xf32>
    %200 = vector.extract_strided_slice %43 {offsets = [0, 60], sizes = [8, 4], strides = [1, 1]} : vector<8x96xf32> to vector<8x4xf32>
    %201 = vector.extract_strided_slice %43 {offsets = [0, 92], sizes = [8, 4], strides = [1, 1]} : vector<8x96xf32> to vector<8x4xf32>
    %cst_92 = arith.constant dense<0.000000e+00> : vector<8x8xf32>
    %202 = tpu.matmul %199, %200, %cst_92 {dimension_numbers = #tpu.dot_dimension_numbers<[1], [1], [0], [0], [0, 0, 1, 0], [], []>} : vector<8x4xf32>, vector<8x4xf32>, vector<8x8xf32> -> vector<8x8xf32>
    %cst_93 = arith.constant 5.000000e-01 : f32
    %203 = vector.broadcast %cst_93 : f32 to vector<8x8xf32>
    %204 = arith.mulf %202, %203 : vector<8x8xf32>
    %cst_94 = arith.constant dense<0xFF800000> : vector<8xf32>
    %205 = vector.multi_reduction <maximumf>, %204, %cst_94 [1] : vector<8x8xf32> to vector<8xf32>
    %206 = vector.shape_cast %205 : vector<8xf32> to vector<8x1xf32>
    %207 = vector.broadcast %206 : vector<8x1xf32> to vector<8x8xf32>
    %208 = arith.subf %204, %207 : vector<8x8xf32>
    %209 = math.exp %208 : vector<8x8xf32>
    %cst_95 = arith.constant dense<0.000000e+00> : vector<8xf32>
    %210 = vector.multi_reduction <add>, %209, %cst_95 [1] : vector<8x8xf32> to vector<8xf32>
    %211 = vector.shape_cast %210 : vector<8xf32> to vector<8x1xf32>
    %212 = tpu.reciprocal %211 {approx = true} : vector<8x1xf32> -> vector<8x1xf32>
    %213 = vector.broadcast %212 : vector<8x1xf32> to vector<8x8xf32>
    %214 = arith.mulf %209, %213 : vector<8x8xf32>
    %cst_96 = arith.constant dense<0.000000e+00> : vector<8x4xf32>
    %215 = tpu.matmul %214, %201, %cst_96 {dimension_numbers = #tpu.dot_dimension_numbers<[1], [0], [0], [1], [0, 0, 1, 1], [], []>} : vector<8x8xf32>, vector<8x4xf32>, vector<8x4xf32> -> vector<8x4xf32>
    %c0_97 = arith.constant 0 : index
    %c7 = arith.constant 7 : index
    %c0_98 = arith.constant 0 : index
    %c0_99 = arith.constant 0 : index
    %216 = vector.load %arg9[%c0_97, %c7, %c0_98, %c0_99] : memref<2x8x4x32xbf16, #tpu.memory_space<vmem>>, vector<1x1x4x32xbf16>
    %217 = vector.shape_cast %216 : vector<1x1x4x32xbf16> to vector<4x32xbf16>
    %218 = arith.truncf %215 : vector<8x4xf32> to vector<8x4xbf16>
    %cst_100 = arith.constant dense<0.000000e+00> : vector<8x32xf32>
    %219 = tpu.matmul %218, %217, %cst_100 {dimension_numbers = #tpu.dot_dimension_numbers<[1], [0], [0], [1], [0, 0, 1, 1], [], []>} : vector<8x4xbf16>, vector<4x32xbf16>, vector<8x32xf32> -> vector<8x32xf32>
    %220 = arith.addf %198, %219 : vector<8x32xf32>
    %221 = arith.addf %11, %220 : vector<8x32xf32>
    %c0_101 = arith.constant 0 : index
    %c0_102 = arith.constant 0 : index
    %c0_103 = arith.constant 0 : index
    %222 = vector.load %arg10[%c0_101, %c0_102, %c0_103] : memref<2x1x32xf32, #tpu.memory_space<vmem>>, vector<1x1x32xf32>
    %223 = vector.shape_cast %222 : vector<1x1x32xf32> to vector<1x32xf32>
    %224 = vector.broadcast %223 : vector<1x32xf32> to vector<8x32xf32>
    %225 = arith.addf %221, %224 : vector<8x32xf32>
    %c0_104 = arith.constant 0 : index
    %c0_105 = arith.constant 0 : index
    %c0_106 = arith.constant 0 : index
    %226 = vector.load %arg11[%c0_104, %c0_105, %c0_106] : memref<2x1x32xf32, #tpu.memory_space<vmem>>, vector<1x1x32xf32>
    %227 = vector.shape_cast %226 : vector<1x1x32xf32> to vector<1x32xf32>
    %c0_107 = arith.constant 0 : index
    %c0_108 = arith.constant 0 : index
    %c0_109 = arith.constant 0 : index
    %228 = vector.load %arg12[%c0_107, %c0_108, %c0_109] : memref<2x1x32xf32, #tpu.memory_space<vmem>>, vector<1x1x32xf32>
    %229 = vector.shape_cast %228 : vector<1x1x32xf32> to vector<1x32xf32>
    %cst_110 = arith.constant dense<0.000000e+00> : vector<8xf32>
    %230 = vector.multi_reduction <add>, %225, %cst_110 [1] : vector<8x32xf32> to vector<8xf32>
    %231 = vector.shape_cast %230 : vector<8xf32> to vector<8x1xf32>
    %cst_111 = arith.constant 3.200000e+01 : f32
    %232 = vector.broadcast %cst_111 : f32 to vector<8x1xf32>
    %233 = arith.divf %231, %232 : vector<8x1xf32>
    %234 = vector.broadcast %233 : vector<8x1xf32> to vector<8x32xf32>
    %235 = arith.subf %225, %234 : vector<8x32xf32>
    %236 = arith.mulf %235, %235 : vector<8x32xf32>
    %cst_112 = arith.constant dense<0.000000e+00> : vector<8xf32>
    %237 = vector.multi_reduction <add>, %236, %cst_112 [1] : vector<8x32xf32> to vector<8xf32>
    %238 = vector.shape_cast %237 : vector<8xf32> to vector<8x1xf32>
    %cst_113 = arith.constant 3.200000e+01 : f32
    %239 = vector.broadcast %cst_113 : f32 to vector<8x1xf32>
    %240 = arith.divf %238, %239 : vector<8x1xf32>
    %cst_114 = arith.constant 9.99999974E-6 : f32
    %241 = vector.broadcast %cst_114 : f32 to vector<8x1xf32>
    %242 = arith.addf %240, %241 : vector<8x1xf32>
    %243 = math.rsqrt %242 : vector<8x1xf32>
    %244 = vector.broadcast %243 : vector<8x1xf32> to vector<8x32xf32>
    %245 = arith.mulf %235, %244 : vector<8x32xf32>
    %246 = vector.broadcast %227 : vector<1x32xf32> to vector<8x32xf32>
    %247 = arith.mulf %245, %246 : vector<8x32xf32>
    %248 = vector.broadcast %229 : vector<1x32xf32> to vector<8x32xf32>
    %249 = arith.addf %247, %248 : vector<8x32xf32>
    %c0_115 = arith.constant 0 : index
    %c0_116 = arith.constant 0 : index
    %c0_117 = arith.constant 0 : index
    %250 = vector.load %arg13[%c0_115, %c0_116, %c0_117] : memref<2x32x128xbf16, #tpu.memory_space<vmem>>, vector<1x32x128xbf16>
    %251 = vector.shape_cast %250 : vector<1x32x128xbf16> to vector<32x128xbf16>
    %252 = arith.truncf %249 : vector<8x32xf32> to vector<8x32xbf16>
    %cst_118 = arith.constant dense<0.000000e+00> : vector<8x128xf32>
    %253 = tpu.matmul %252, %251, %cst_118 {dimension_numbers = #tpu.dot_dimension_numbers<[1], [0], [0], [1], [0, 0, 1, 1], [], []>} : vector<8x32xbf16>, vector<32x128xbf16>, vector<8x128xf32> -> vector<8x128xf32>
    %c0_119 = arith.constant 0 : index
    %c0_120 = arith.constant 0 : index
    %c0_121 = arith.constant 0 : index
    %254 = vector.load %arg14[%c0_119, %c0_120, %c0_121] : memref<2x1x128xf32, #tpu.memory_space<vmem>>, vector<1x1x128xf32>
    %255 = vector.shape_cast %254 : vector<1x1x128xf32> to vector<1x128xf32>
    %256 = vector.broadcast %255 : vector<1x128xf32> to vector<8x128xf32>
    %257 = arith.addf %253, %256 : vector<8x128xf32>
    %cst_122 = arith.constant 0.000000e+00 : f32
    %258 = vector.broadcast %cst_122 : f32 to vector<8x128xf32>
    %259 = arith.maximumf %257, %258 : vector<8x128xf32>
    %c0_123 = arith.constant 0 : index
    %c0_124 = arith.constant 0 : index
    %c0_125 = arith.constant 0 : index
    %260 = vector.load %arg15[%c0_123, %c0_124, %c0_125] : memref<2x128x32xbf16, #tpu.memory_space<vmem>>, vector<1x128x32xbf16>
    %261 = vector.shape_cast %260 : vector<1x128x32xbf16> to vector<128x32xbf16>
    %262 = arith.truncf %259 : vector<8x128xf32> to vector<8x128xbf16>
    %cst_126 = arith.constant dense<0.000000e+00> : vector<8x32xf32>
    %263 = tpu.matmul %262, %261, %cst_126 {dimension_numbers = #tpu.dot_dimension_numbers<[1], [0], [0], [1], [0, 0, 1, 1], [], []>} : vector<8x128xbf16>, vector<128x32xbf16>, vector<8x32xf32> -> vector<8x32xf32>
    %264 = arith.addf %225, %263 : vector<8x32xf32>
    %c0_127 = arith.constant 0 : index
    %c0_128 = arith.constant 0 : index
    %c0_129 = arith.constant 0 : index
    %265 = vector.load %arg16[%c0_127, %c0_128, %c0_129] : memref<2x1x32xf32, #tpu.memory_space<vmem>>, vector<1x1x32xf32>
    %266 = vector.shape_cast %265 : vector<1x1x32xf32> to vector<1x32xf32>
    %267 = vector.broadcast %266 : vector<1x32xf32> to vector<8x32xf32>
    %268 = arith.addf %264, %267 : vector<8x32xf32>
    %c1_130 = arith.constant 1 : index
    %c0_131 = arith.constant 0 : index
    %c0_132 = arith.constant 0 : index
    %269 = vector.load %arg5[%c1_130, %c0_131, %c0_132] : memref<2x1x32xf32, #tpu.memory_space<vmem>>, vector<1x1x32xf32>
    %270 = vector.shape_cast %269 : vector<1x1x32xf32> to vector<1x32xf32>
    %c1_133 = arith.constant 1 : index
    %c0_134 = arith.constant 0 : index
    %c0_135 = arith.constant 0 : index
    %271 = vector.load %arg6[%c1_133, %c0_134, %c0_135] : memref<2x1x32xf32, #tpu.memory_space<vmem>>, vector<1x1x32xf32>
    %272 = vector.shape_cast %271 : vector<1x1x32xf32> to vector<1x32xf32>
    %cst_136 = arith.constant dense<0.000000e+00> : vector<8xf32>
    %273 = vector.multi_reduction <add>, %268, %cst_136 [1] : vector<8x32xf32> to vector<8xf32>
    %274 = vector.shape_cast %273 : vector<8xf32> to vector<8x1xf32>
    %cst_137 = arith.constant 3.200000e+01 : f32
    %275 = vector.broadcast %cst_137 : f32 to vector<8x1xf32>
    %276 = arith.divf %274, %275 : vector<8x1xf32>
    %277 = vector.broadcast %276 : vector<8x1xf32> to vector<8x32xf32>
    %278 = arith.subf %268, %277 : vector<8x32xf32>
    %279 = arith.mulf %278, %278 : vector<8x32xf32>
    %cst_138 = arith.constant dense<0.000000e+00> : vector<8xf32>
    %280 = vector.multi_reduction <add>, %279, %cst_138 [1] : vector<8x32xf32> to vector<8xf32>
    %281 = vector.shape_cast %280 : vector<8xf32> to vector<8x1xf32>
    %cst_139 = arith.constant 3.200000e+01 : f32
    %282 = vector.broadcast %cst_139 : f32 to vector<8x1xf32>
    %283 = arith.divf %281, %282 : vector<8x1xf32>
    %cst_140 = arith.constant 9.99999974E-6 : f32
    %284 = vector.broadcast %cst_140 : f32 to vector<8x1xf32>
    %285 = arith.addf %283, %284 : vector<8x1xf32>
    %286 = math.rsqrt %285 : vector<8x1xf32>
    %287 = vector.broadcast %286 : vector<8x1xf32> to vector<8x32xf32>
    %288 = arith.mulf %278, %287 : vector<8x32xf32>
    %289 = vector.broadcast %270 : vector<1x32xf32> to vector<8x32xf32>
    %290 = arith.mulf %288, %289 : vector<8x32xf32>
    %291 = vector.broadcast %272 : vector<1x32xf32> to vector<8x32xf32>
    %292 = arith.addf %290, %291 : vector<8x32xf32>
    %c1_141 = arith.constant 1 : index
    %c0_142 = arith.constant 0 : index
    %c0_143 = arith.constant 0 : index
    %293 = vector.load %arg7[%c1_141, %c0_142, %c0_143] : memref<2x32x96xbf16, #tpu.memory_space<vmem>>, vector<1x32x96xbf16>
    %294 = vector.shape_cast %293 : vector<1x32x96xbf16> to vector<32x96xbf16>
    %295 = arith.truncf %292 : vector<8x32xf32> to vector<8x32xbf16>
    %cst_144 = arith.constant dense<0.000000e+00> : vector<8x96xf32>
    %296 = tpu.matmul %295, %294, %cst_144 {dimension_numbers = #tpu.dot_dimension_numbers<[1], [0], [0], [1], [0, 0, 1, 1], [], []>} : vector<8x32xbf16>, vector<32x96xbf16>, vector<8x96xf32> -> vector<8x96xf32>
    %c1_145 = arith.constant 1 : index
    %c0_146 = arith.constant 0 : index
    %c0_147 = arith.constant 0 : index
    %297 = vector.load %arg8[%c1_145, %c0_146, %c0_147] : memref<2x1x96xf32, #tpu.memory_space<vmem>>, vector<1x1x96xf32>
    %298 = vector.shape_cast %297 : vector<1x1x96xf32> to vector<1x96xf32>
    %299 = vector.broadcast %298 : vector<1x96xf32> to vector<8x96xf32>
    %300 = arith.addf %296, %299 : vector<8x96xf32>
    %cst_148 = arith.constant 0.000000e+00 : f32
    %301 = vector.broadcast %cst_148 : f32 to vector<8x32xf32>
    %302 = vector.extract_strided_slice %300 {offsets = [0, 0], sizes = [8, 4], strides = [1, 1]} : vector<8x96xf32> to vector<8x4xf32>
    %303 = vector.extract_strided_slice %300 {offsets = [0, 32], sizes = [8, 4], strides = [1, 1]} : vector<8x96xf32> to vector<8x4xf32>
    %304 = vector.extract_strided_slice %300 {offsets = [0, 64], sizes = [8, 4], strides = [1, 1]} : vector<8x96xf32> to vector<8x4xf32>
    %cst_149 = arith.constant dense<0.000000e+00> : vector<8x8xf32>
    %305 = tpu.matmul %302, %303, %cst_149 {dimension_numbers = #tpu.dot_dimension_numbers<[1], [1], [0], [0], [0, 0, 1, 0], [], []>} : vector<8x4xf32>, vector<8x4xf32>, vector<8x8xf32> -> vector<8x8xf32>
    %cst_150 = arith.constant 5.000000e-01 : f32
    %306 = vector.broadcast %cst_150 : f32 to vector<8x8xf32>
    %307 = arith.mulf %305, %306 : vector<8x8xf32>
    %cst_151 = arith.constant dense<0xFF800000> : vector<8xf32>
    %308 = vector.multi_reduction <maximumf>, %307, %cst_151 [1] : vector<8x8xf32> to vector<8xf32>
    %309 = vector.shape_cast %308 : vector<8xf32> to vector<8x1xf32>
    %310 = vector.broadcast %309 : vector<8x1xf32> to vector<8x8xf32>
    %311 = arith.subf %307, %310 : vector<8x8xf32>
    %312 = math.exp %311 : vector<8x8xf32>
    %cst_152 = arith.constant dense<0.000000e+00> : vector<8xf32>
    %313 = vector.multi_reduction <add>, %312, %cst_152 [1] : vector<8x8xf32> to vector<8xf32>
    %314 = vector.shape_cast %313 : vector<8xf32> to vector<8x1xf32>
    %315 = tpu.reciprocal %314 {approx = true} : vector<8x1xf32> -> vector<8x1xf32>
    %316 = vector.broadcast %315 : vector<8x1xf32> to vector<8x8xf32>
    %317 = arith.mulf %312, %316 : vector<8x8xf32>
    %cst_153 = arith.constant dense<0.000000e+00> : vector<8x4xf32>
    %318 = tpu.matmul %317, %304, %cst_153 {dimension_numbers = #tpu.dot_dimension_numbers<[1], [0], [0], [1], [0, 0, 1, 1], [], []>} : vector<8x8xf32>, vector<8x4xf32>, vector<8x4xf32> -> vector<8x4xf32>
    %c1_154 = arith.constant 1 : index
    %c0_155 = arith.constant 0 : index
    %c0_156 = arith.constant 0 : index
    %c0_157 = arith.constant 0 : index
    %319 = vector.load %arg9[%c1_154, %c0_155, %c0_156, %c0_157] : memref<2x8x4x32xbf16, #tpu.memory_space<vmem>>, vector<1x1x4x32xbf16>
    %320 = vector.shape_cast %319 : vector<1x1x4x32xbf16> to vector<4x32xbf16>
    %321 = arith.truncf %318 : vector<8x4xf32> to vector<8x4xbf16>
    %cst_158 = arith.constant dense<0.000000e+00> : vector<8x32xf32>
    %322 = tpu.matmul %321, %320, %cst_158 {dimension_numbers = #tpu.dot_dimension_numbers<[1], [0], [0], [1], [0, 0, 1, 1], [], []>} : vector<8x4xbf16>, vector<4x32xbf16>, vector<8x32xf32> -> vector<8x32xf32>
    %323 = arith.addf %301, %322 : vector<8x32xf32>
    %324 = vector.extract_strided_slice %300 {offsets = [0, 4], sizes = [8, 4], strides = [1, 1]} : vector<8x96xf32> to vector<8x4xf32>
    %325 = vector.extract_strided_slice %300 {offsets = [0, 36], sizes = [8, 4], strides = [1, 1]} : vector<8x96xf32> to vector<8x4xf32>
    %326 = vector.extract_strided_slice %300 {offsets = [0, 68], sizes = [8, 4], strides = [1, 1]} : vector<8x96xf32> to vector<8x4xf32>
    %cst_159 = arith.constant dense<0.000000e+00> : vector<8x8xf32>
    %327 = tpu.matmul %324, %325, %cst_159 {dimension_numbers = #tpu.dot_dimension_numbers<[1], [1], [0], [0], [0, 0, 1, 0], [], []>} : vector<8x4xf32>, vector<8x4xf32>, vector<8x8xf32> -> vector<8x8xf32>
    %cst_160 = arith.constant 5.000000e-01 : f32
    %328 = vector.broadcast %cst_160 : f32 to vector<8x8xf32>
    %329 = arith.mulf %327, %328 : vector<8x8xf32>
    %cst_161 = arith.constant dense<0xFF800000> : vector<8xf32>
    %330 = vector.multi_reduction <maximumf>, %329, %cst_161 [1] : vector<8x8xf32> to vector<8xf32>
    %331 = vector.shape_cast %330 : vector<8xf32> to vector<8x1xf32>
    %332 = vector.broadcast %331 : vector<8x1xf32> to vector<8x8xf32>
    %333 = arith.subf %329, %332 : vector<8x8xf32>
    %334 = math.exp %333 : vector<8x8xf32>
    %cst_162 = arith.constant dense<0.000000e+00> : vector<8xf32>
    %335 = vector.multi_reduction <add>, %334, %cst_162 [1] : vector<8x8xf32> to vector<8xf32>
    %336 = vector.shape_cast %335 : vector<8xf32> to vector<8x1xf32>
    %337 = tpu.reciprocal %336 {approx = true} : vector<8x1xf32> -> vector<8x1xf32>
    %338 = vector.broadcast %337 : vector<8x1xf32> to vector<8x8xf32>
    %339 = arith.mulf %334, %338 : vector<8x8xf32>
    %cst_163 = arith.constant dense<0.000000e+00> : vector<8x4xf32>
    %340 = tpu.matmul %339, %326, %cst_163 {dimension_numbers = #tpu.dot_dimension_numbers<[1], [0], [0], [1], [0, 0, 1, 1], [], []>} : vector<8x8xf32>, vector<8x4xf32>, vector<8x4xf32> -> vector<8x4xf32>
    %c1_164 = arith.constant 1 : index
    %c1_165 = arith.constant 1 : index
    %c0_166 = arith.constant 0 : index
    %c0_167 = arith.constant 0 : index
    %341 = vector.load %arg9[%c1_164, %c1_165, %c0_166, %c0_167] : memref<2x8x4x32xbf16, #tpu.memory_space<vmem>>, vector<1x1x4x32xbf16>
    %342 = vector.shape_cast %341 : vector<1x1x4x32xbf16> to vector<4x32xbf16>
    %343 = arith.truncf %340 : vector<8x4xf32> to vector<8x4xbf16>
    %cst_168 = arith.constant dense<0.000000e+00> : vector<8x32xf32>
    %344 = tpu.matmul %343, %342, %cst_168 {dimension_numbers = #tpu.dot_dimension_numbers<[1], [0], [0], [1], [0, 0, 1, 1], [], []>} : vector<8x4xbf16>, vector<4x32xbf16>, vector<8x32xf32> -> vector<8x32xf32>
    %345 = arith.addf %323, %344 : vector<8x32xf32>
    %346 = vector.extract_strided_slice %300 {offsets = [0, 8], sizes = [8, 4], strides = [1, 1]} : vector<8x96xf32> to vector<8x4xf32>
    %347 = vector.extract_strided_slice %300 {offsets = [0, 40], sizes = [8, 4], strides = [1, 1]} : vector<8x96xf32> to vector<8x4xf32>
    %348 = vector.extract_strided_slice %300 {offsets = [0, 72], sizes = [8, 4], strides = [1, 1]} : vector<8x96xf32> to vector<8x4xf32>
    %cst_169 = arith.constant dense<0.000000e+00> : vector<8x8xf32>
    %349 = tpu.matmul %346, %347, %cst_169 {dimension_numbers = #tpu.dot_dimension_numbers<[1], [1], [0], [0], [0, 0, 1, 0], [], []>} : vector<8x4xf32>, vector<8x4xf32>, vector<8x8xf32> -> vector<8x8xf32>
    %cst_170 = arith.constant 5.000000e-01 : f32
    %350 = vector.broadcast %cst_170 : f32 to vector<8x8xf32>
    %351 = arith.mulf %349, %350 : vector<8x8xf32>
    %cst_171 = arith.constant dense<0xFF800000> : vector<8xf32>
    %352 = vector.multi_reduction <maximumf>, %351, %cst_171 [1] : vector<8x8xf32> to vector<8xf32>
    %353 = vector.shape_cast %352 : vector<8xf32> to vector<8x1xf32>
    %354 = vector.broadcast %353 : vector<8x1xf32> to vector<8x8xf32>
    %355 = arith.subf %351, %354 : vector<8x8xf32>
    %356 = math.exp %355 : vector<8x8xf32>
    %cst_172 = arith.constant dense<0.000000e+00> : vector<8xf32>
    %357 = vector.multi_reduction <add>, %356, %cst_172 [1] : vector<8x8xf32> to vector<8xf32>
    %358 = vector.shape_cast %357 : vector<8xf32> to vector<8x1xf32>
    %359 = tpu.reciprocal %358 {approx = true} : vector<8x1xf32> -> vector<8x1xf32>
    %360 = vector.broadcast %359 : vector<8x1xf32> to vector<8x8xf32>
    %361 = arith.mulf %356, %360 : vector<8x8xf32>
    %cst_173 = arith.constant dense<0.000000e+00> : vector<8x4xf32>
    %362 = tpu.matmul %361, %348, %cst_173 {dimension_numbers = #tpu.dot_dimension_numbers<[1], [0], [0], [1], [0, 0, 1, 1], [], []>} : vector<8x8xf32>, vector<8x4xf32>, vector<8x4xf32> -> vector<8x4xf32>
    %c1_174 = arith.constant 1 : index
    %c2_175 = arith.constant 2 : index
    %c0_176 = arith.constant 0 : index
    %c0_177 = arith.constant 0 : index
    %363 = vector.load %arg9[%c1_174, %c2_175, %c0_176, %c0_177] : memref<2x8x4x32xbf16, #tpu.memory_space<vmem>>, vector<1x1x4x32xbf16>
    %364 = vector.shape_cast %363 : vector<1x1x4x32xbf16> to vector<4x32xbf16>
    %365 = arith.truncf %362 : vector<8x4xf32> to vector<8x4xbf16>
    %cst_178 = arith.constant dense<0.000000e+00> : vector<8x32xf32>
    %366 = tpu.matmul %365, %364, %cst_178 {dimension_numbers = #tpu.dot_dimension_numbers<[1], [0], [0], [1], [0, 0, 1, 1], [], []>} : vector<8x4xbf16>, vector<4x32xbf16>, vector<8x32xf32> -> vector<8x32xf32>
    %367 = arith.addf %345, %366 : vector<8x32xf32>
    %368 = vector.extract_strided_slice %300 {offsets = [0, 12], sizes = [8, 4], strides = [1, 1]} : vector<8x96xf32> to vector<8x4xf32>
    %369 = vector.extract_strided_slice %300 {offsets = [0, 44], sizes = [8, 4], strides = [1, 1]} : vector<8x96xf32> to vector<8x4xf32>
    %370 = vector.extract_strided_slice %300 {offsets = [0, 76], sizes = [8, 4], strides = [1, 1]} : vector<8x96xf32> to vector<8x4xf32>
    %cst_179 = arith.constant dense<0.000000e+00> : vector<8x8xf32>
    %371 = tpu.matmul %368, %369, %cst_179 {dimension_numbers = #tpu.dot_dimension_numbers<[1], [1], [0], [0], [0, 0, 1, 0], [], []>} : vector<8x4xf32>, vector<8x4xf32>, vector<8x8xf32> -> vector<8x8xf32>
    %cst_180 = arith.constant 5.000000e-01 : f32
    %372 = vector.broadcast %cst_180 : f32 to vector<8x8xf32>
    %373 = arith.mulf %371, %372 : vector<8x8xf32>
    %cst_181 = arith.constant dense<0xFF800000> : vector<8xf32>
    %374 = vector.multi_reduction <maximumf>, %373, %cst_181 [1] : vector<8x8xf32> to vector<8xf32>
    %375 = vector.shape_cast %374 : vector<8xf32> to vector<8x1xf32>
    %376 = vector.broadcast %375 : vector<8x1xf32> to vector<8x8xf32>
    %377 = arith.subf %373, %376 : vector<8x8xf32>
    %378 = math.exp %377 : vector<8x8xf32>
    %cst_182 = arith.constant dense<0.000000e+00> : vector<8xf32>
    %379 = vector.multi_reduction <add>, %378, %cst_182 [1] : vector<8x8xf32> to vector<8xf32>
    %380 = vector.shape_cast %379 : vector<8xf32> to vector<8x1xf32>
    %381 = tpu.reciprocal %380 {approx = true} : vector<8x1xf32> -> vector<8x1xf32>
    %382 = vector.broadcast %381 : vector<8x1xf32> to vector<8x8xf32>
    %383 = arith.mulf %378, %382 : vector<8x8xf32>
    %cst_183 = arith.constant dense<0.000000e+00> : vector<8x4xf32>
    %384 = tpu.matmul %383, %370, %cst_183 {dimension_numbers = #tpu.dot_dimension_numbers<[1], [0], [0], [1], [0, 0, 1, 1], [], []>} : vector<8x8xf32>, vector<8x4xf32>, vector<8x4xf32> -> vector<8x4xf32>
    %c1_184 = arith.constant 1 : index
    %c3_185 = arith.constant 3 : index
    %c0_186 = arith.constant 0 : index
    %c0_187 = arith.constant 0 : index
    %385 = vector.load %arg9[%c1_184, %c3_185, %c0_186, %c0_187] : memref<2x8x4x32xbf16, #tpu.memory_space<vmem>>, vector<1x1x4x32xbf16>
    %386 = vector.shape_cast %385 : vector<1x1x4x32xbf16> to vector<4x32xbf16>
    %387 = arith.truncf %384 : vector<8x4xf32> to vector<8x4xbf16>
    %cst_188 = arith.constant dense<0.000000e+00> : vector<8x32xf32>
    %388 = tpu.matmul %387, %386, %cst_188 {dimension_numbers = #tpu.dot_dimension_numbers<[1], [0], [0], [1], [0, 0, 1, 1], [], []>} : vector<8x4xbf16>, vector<4x32xbf16>, vector<8x32xf32> -> vector<8x32xf32>
    %389 = arith.addf %367, %388 : vector<8x32xf32>
    %390 = vector.extract_strided_slice %300 {offsets = [0, 16], sizes = [8, 4], strides = [1, 1]} : vector<8x96xf32> to vector<8x4xf32>
    %391 = vector.extract_strided_slice %300 {offsets = [0, 48], sizes = [8, 4], strides = [1, 1]} : vector<8x96xf32> to vector<8x4xf32>
    %392 = vector.extract_strided_slice %300 {offsets = [0, 80], sizes = [8, 4], strides = [1, 1]} : vector<8x96xf32> to vector<8x4xf32>
    %cst_189 = arith.constant dense<0.000000e+00> : vector<8x8xf32>
    %393 = tpu.matmul %390, %391, %cst_189 {dimension_numbers = #tpu.dot_dimension_numbers<[1], [1], [0], [0], [0, 0, 1, 0], [], []>} : vector<8x4xf32>, vector<8x4xf32>, vector<8x8xf32> -> vector<8x8xf32>
    %cst_190 = arith.constant 5.000000e-01 : f32
    %394 = vector.broadcast %cst_190 : f32 to vector<8x8xf32>
    %395 = arith.mulf %393, %394 : vector<8x8xf32>
    %cst_191 = arith.constant dense<0xFF800000> : vector<8xf32>
    %396 = vector.multi_reduction <maximumf>, %395, %cst_191 [1] : vector<8x8xf32> to vector<8xf32>
    %397 = vector.shape_cast %396 : vector<8xf32> to vector<8x1xf32>
    %398 = vector.broadcast %397 : vector<8x1xf32> to vector<8x8xf32>
    %399 = arith.subf %395, %398 : vector<8x8xf32>
    %400 = math.exp %399 : vector<8x8xf32>
    %cst_192 = arith.constant dense<0.000000e+00> : vector<8xf32>
    %401 = vector.multi_reduction <add>, %400, %cst_192 [1] : vector<8x8xf32> to vector<8xf32>
    %402 = vector.shape_cast %401 : vector<8xf32> to vector<8x1xf32>
    %403 = tpu.reciprocal %402 {approx = true} : vector<8x1xf32> -> vector<8x1xf32>
    %404 = vector.broadcast %403 : vector<8x1xf32> to vector<8x8xf32>
    %405 = arith.mulf %400, %404 : vector<8x8xf32>
    %cst_193 = arith.constant dense<0.000000e+00> : vector<8x4xf32>
    %406 = tpu.matmul %405, %392, %cst_193 {dimension_numbers = #tpu.dot_dimension_numbers<[1], [0], [0], [1], [0, 0, 1, 1], [], []>} : vector<8x8xf32>, vector<8x4xf32>, vector<8x4xf32> -> vector<8x4xf32>
    %c1_194 = arith.constant 1 : index
    %c4_195 = arith.constant 4 : index
    %c0_196 = arith.constant 0 : index
    %c0_197 = arith.constant 0 : index
    %407 = vector.load %arg9[%c1_194, %c4_195, %c0_196, %c0_197] : memref<2x8x4x32xbf16, #tpu.memory_space<vmem>>, vector<1x1x4x32xbf16>
    %408 = vector.shape_cast %407 : vector<1x1x4x32xbf16> to vector<4x32xbf16>
    %409 = arith.truncf %406 : vector<8x4xf32> to vector<8x4xbf16>
    %cst_198 = arith.constant dense<0.000000e+00> : vector<8x32xf32>
    %410 = tpu.matmul %409, %408, %cst_198 {dimension_numbers = #tpu.dot_dimension_numbers<[1], [0], [0], [1], [0, 0, 1, 1], [], []>} : vector<8x4xbf16>, vector<4x32xbf16>, vector<8x32xf32> -> vector<8x32xf32>
    %411 = arith.addf %389, %410 : vector<8x32xf32>
    %412 = vector.extract_strided_slice %300 {offsets = [0, 20], sizes = [8, 4], strides = [1, 1]} : vector<8x96xf32> to vector<8x4xf32>
    %413 = vector.extract_strided_slice %300 {offsets = [0, 52], sizes = [8, 4], strides = [1, 1]} : vector<8x96xf32> to vector<8x4xf32>
    %414 = vector.extract_strided_slice %300 {offsets = [0, 84], sizes = [8, 4], strides = [1, 1]} : vector<8x96xf32> to vector<8x4xf32>
    %cst_199 = arith.constant dense<0.000000e+00> : vector<8x8xf32>
    %415 = tpu.matmul %412, %413, %cst_199 {dimension_numbers = #tpu.dot_dimension_numbers<[1], [1], [0], [0], [0, 0, 1, 0], [], []>} : vector<8x4xf32>, vector<8x4xf32>, vector<8x8xf32> -> vector<8x8xf32>
    %cst_200 = arith.constant 5.000000e-01 : f32
    %416 = vector.broadcast %cst_200 : f32 to vector<8x8xf32>
    %417 = arith.mulf %415, %416 : vector<8x8xf32>
    %cst_201 = arith.constant dense<0xFF800000> : vector<8xf32>
    %418 = vector.multi_reduction <maximumf>, %417, %cst_201 [1] : vector<8x8xf32> to vector<8xf32>
    %419 = vector.shape_cast %418 : vector<8xf32> to vector<8x1xf32>
    %420 = vector.broadcast %419 : vector<8x1xf32> to vector<8x8xf32>
    %421 = arith.subf %417, %420 : vector<8x8xf32>
    %422 = math.exp %421 : vector<8x8xf32>
    %cst_202 = arith.constant dense<0.000000e+00> : vector<8xf32>
    %423 = vector.multi_reduction <add>, %422, %cst_202 [1] : vector<8x8xf32> to vector<8xf32>
    %424 = vector.shape_cast %423 : vector<8xf32> to vector<8x1xf32>
    %425 = tpu.reciprocal %424 {approx = true} : vector<8x1xf32> -> vector<8x1xf32>
    %426 = vector.broadcast %425 : vector<8x1xf32> to vector<8x8xf32>
    %427 = arith.mulf %422, %426 : vector<8x8xf32>
    %cst_203 = arith.constant dense<0.000000e+00> : vector<8x4xf32>
    %428 = tpu.matmul %427, %414, %cst_203 {dimension_numbers = #tpu.dot_dimension_numbers<[1], [0], [0], [1], [0, 0, 1, 1], [], []>} : vector<8x8xf32>, vector<8x4xf32>, vector<8x4xf32> -> vector<8x4xf32>
    %c1_204 = arith.constant 1 : index
    %c5_205 = arith.constant 5 : index
    %c0_206 = arith.constant 0 : index
    %c0_207 = arith.constant 0 : index
    %429 = vector.load %arg9[%c1_204, %c5_205, %c0_206, %c0_207] : memref<2x8x4x32xbf16, #tpu.memory_space<vmem>>, vector<1x1x4x32xbf16>
    %430 = vector.shape_cast %429 : vector<1x1x4x32xbf16> to vector<4x32xbf16>
    %431 = arith.truncf %428 : vector<8x4xf32> to vector<8x4xbf16>
    %cst_208 = arith.constant dense<0.000000e+00> : vector<8x32xf32>
    %432 = tpu.matmul %431, %430, %cst_208 {dimension_numbers = #tpu.dot_dimension_numbers<[1], [0], [0], [1], [0, 0, 1, 1], [], []>} : vector<8x4xbf16>, vector<4x32xbf16>, vector<8x32xf32> -> vector<8x32xf32>
    %433 = arith.addf %411, %432 : vector<8x32xf32>
    %434 = vector.extract_strided_slice %300 {offsets = [0, 24], sizes = [8, 4], strides = [1, 1]} : vector<8x96xf32> to vector<8x4xf32>
    %435 = vector.extract_strided_slice %300 {offsets = [0, 56], sizes = [8, 4], strides = [1, 1]} : vector<8x96xf32> to vector<8x4xf32>
    %436 = vector.extract_strided_slice %300 {offsets = [0, 88], sizes = [8, 4], strides = [1, 1]} : vector<8x96xf32> to vector<8x4xf32>
    %cst_209 = arith.constant dense<0.000000e+00> : vector<8x8xf32>
    %437 = tpu.matmul %434, %435, %cst_209 {dimension_numbers = #tpu.dot_dimension_numbers<[1], [1], [0], [0], [0, 0, 1, 0], [], []>} : vector<8x4xf32>, vector<8x4xf32>, vector<8x8xf32> -> vector<8x8xf32>
    %cst_210 = arith.constant 5.000000e-01 : f32
    %438 = vector.broadcast %cst_210 : f32 to vector<8x8xf32>
    %439 = arith.mulf %437, %438 : vector<8x8xf32>
    %cst_211 = arith.constant dense<0xFF800000> : vector<8xf32>
    %440 = vector.multi_reduction <maximumf>, %439, %cst_211 [1] : vector<8x8xf32> to vector<8xf32>
    %441 = vector.shape_cast %440 : vector<8xf32> to vector<8x1xf32>
    %442 = vector.broadcast %441 : vector<8x1xf32> to vector<8x8xf32>
    %443 = arith.subf %439, %442 : vector<8x8xf32>
    %444 = math.exp %443 : vector<8x8xf32>
    %cst_212 = arith.constant dense<0.000000e+00> : vector<8xf32>
    %445 = vector.multi_reduction <add>, %444, %cst_212 [1] : vector<8x8xf32> to vector<8xf32>
    %446 = vector.shape_cast %445 : vector<8xf32> to vector<8x1xf32>
    %447 = tpu.reciprocal %446 {approx = true} : vector<8x1xf32> -> vector<8x1xf32>
    %448 = vector.broadcast %447 : vector<8x1xf32> to vector<8x8xf32>
    %449 = arith.mulf %444, %448 : vector<8x8xf32>
    %cst_213 = arith.constant dense<0.000000e+00> : vector<8x4xf32>
    %450 = tpu.matmul %449, %436, %cst_213 {dimension_numbers = #tpu.dot_dimension_numbers<[1], [0], [0], [1], [0, 0, 1, 1], [], []>} : vector<8x8xf32>, vector<8x4xf32>, vector<8x4xf32> -> vector<8x4xf32>
    %c1_214 = arith.constant 1 : index
    %c6_215 = arith.constant 6 : index
    %c0_216 = arith.constant 0 : index
    %c0_217 = arith.constant 0 : index
    %451 = vector.load %arg9[%c1_214, %c6_215, %c0_216, %c0_217] : memref<2x8x4x32xbf16, #tpu.memory_space<vmem>>, vector<1x1x4x32xbf16>
    %452 = vector.shape_cast %451 : vector<1x1x4x32xbf16> to vector<4x32xbf16>
    %453 = arith.truncf %450 : vector<8x4xf32> to vector<8x4xbf16>
    %cst_218 = arith.constant dense<0.000000e+00> : vector<8x32xf32>
    %454 = tpu.matmul %453, %452, %cst_218 {dimension_numbers = #tpu.dot_dimension_numbers<[1], [0], [0], [1], [0, 0, 1, 1], [], []>} : vector<8x4xbf16>, vector<4x32xbf16>, vector<8x32xf32> -> vector<8x32xf32>
    %455 = arith.addf %433, %454 : vector<8x32xf32>
    %456 = vector.extract_strided_slice %300 {offsets = [0, 28], sizes = [8, 4], strides = [1, 1]} : vector<8x96xf32> to vector<8x4xf32>
    %457 = vector.extract_strided_slice %300 {offsets = [0, 60], sizes = [8, 4], strides = [1, 1]} : vector<8x96xf32> to vector<8x4xf32>
    %458 = vector.extract_strided_slice %300 {offsets = [0, 92], sizes = [8, 4], strides = [1, 1]} : vector<8x96xf32> to vector<8x4xf32>
    %cst_219 = arith.constant dense<0.000000e+00> : vector<8x8xf32>
    %459 = tpu.matmul %456, %457, %cst_219 {dimension_numbers = #tpu.dot_dimension_numbers<[1], [1], [0], [0], [0, 0, 1, 0], [], []>} : vector<8x4xf32>, vector<8x4xf32>, vector<8x8xf32> -> vector<8x8xf32>
    %cst_220 = arith.constant 5.000000e-01 : f32
    %460 = vector.broadcast %cst_220 : f32 to vector<8x8xf32>
    %461 = arith.mulf %459, %460 : vector<8x8xf32>
    %cst_221 = arith.constant dense<0xFF800000> : vector<8xf32>
    %462 = vector.multi_reduction <maximumf>, %461, %cst_221 [1] : vector<8x8xf32> to vector<8xf32>
    %463 = vector.shape_cast %462 : vector<8xf32> to vector<8x1xf32>
    %464 = vector.broadcast %463 : vector<8x1xf32> to vector<8x8xf32>
    %465 = arith.subf %461, %464 : vector<8x8xf32>
    %466 = math.exp %465 : vector<8x8xf32>
    %cst_222 = arith.constant dense<0.000000e+00> : vector<8xf32>
    %467 = vector.multi_reduction <add>, %466, %cst_222 [1] : vector<8x8xf32> to vector<8xf32>
    %468 = vector.shape_cast %467 : vector<8xf32> to vector<8x1xf32>
    %469 = tpu.reciprocal %468 {approx = true} : vector<8x1xf32> -> vector<8x1xf32>
    %470 = vector.broadcast %469 : vector<8x1xf32> to vector<8x8xf32>
    %471 = arith.mulf %466, %470 : vector<8x8xf32>
    %cst_223 = arith.constant dense<0.000000e+00> : vector<8x4xf32>
    %472 = tpu.matmul %471, %458, %cst_223 {dimension_numbers = #tpu.dot_dimension_numbers<[1], [0], [0], [1], [0, 0, 1, 1], [], []>} : vector<8x8xf32>, vector<8x4xf32>, vector<8x4xf32> -> vector<8x4xf32>
    %c1_224 = arith.constant 1 : index
    %c7_225 = arith.constant 7 : index
    %c0_226 = arith.constant 0 : index
    %c0_227 = arith.constant 0 : index
    %473 = vector.load %arg9[%c1_224, %c7_225, %c0_226, %c0_227] : memref<2x8x4x32xbf16, #tpu.memory_space<vmem>>, vector<1x1x4x32xbf16>
    %474 = vector.shape_cast %473 : vector<1x1x4x32xbf16> to vector<4x32xbf16>
    %475 = arith.truncf %472 : vector<8x4xf32> to vector<8x4xbf16>
    %cst_228 = arith.constant dense<0.000000e+00> : vector<8x32xf32>
    %476 = tpu.matmul %475, %474, %cst_228 {dimension_numbers = #tpu.dot_dimension_numbers<[1], [0], [0], [1], [0, 0, 1, 1], [], []>} : vector<8x4xbf16>, vector<4x32xbf16>, vector<8x32xf32> -> vector<8x32xf32>
    %477 = arith.addf %455, %476 : vector<8x32xf32>
    %478 = arith.addf %268, %477 : vector<8x32xf32>
    %c1_229 = arith.constant 1 : index
    %c0_230 = arith.constant 0 : index
    %c0_231 = arith.constant 0 : index
    %479 = vector.load %arg10[%c1_229, %c0_230, %c0_231] : memref<2x1x32xf32, #tpu.memory_space<vmem>>, vector<1x1x32xf32>
    %480 = vector.shape_cast %479 : vector<1x1x32xf32> to vector<1x32xf32>
    %481 = vector.broadcast %480 : vector<1x32xf32> to vector<8x32xf32>
    %482 = arith.addf %478, %481 : vector<8x32xf32>
    %c1_232 = arith.constant 1 : index
    %c0_233 = arith.constant 0 : index
    %c0_234 = arith.constant 0 : index
    %483 = vector.load %arg11[%c1_232, %c0_233, %c0_234] : memref<2x1x32xf32, #tpu.memory_space<vmem>>, vector<1x1x32xf32>
    %484 = vector.shape_cast %483 : vector<1x1x32xf32> to vector<1x32xf32>
    %c1_235 = arith.constant 1 : index
    %c0_236 = arith.constant 0 : index
    %c0_237 = arith.constant 0 : index
    %485 = vector.load %arg12[%c1_235, %c0_236, %c0_237] : memref<2x1x32xf32, #tpu.memory_space<vmem>>, vector<1x1x32xf32>
    %486 = vector.shape_cast %485 : vector<1x1x32xf32> to vector<1x32xf32>
    %cst_238 = arith.constant dense<0.000000e+00> : vector<8xf32>
    %487 = vector.multi_reduction <add>, %482, %cst_238 [1] : vector<8x32xf32> to vector<8xf32>
    %488 = vector.shape_cast %487 : vector<8xf32> to vector<8x1xf32>
    %cst_239 = arith.constant 3.200000e+01 : f32
    %489 = vector.broadcast %cst_239 : f32 to vector<8x1xf32>
    %490 = arith.divf %488, %489 : vector<8x1xf32>
    %491 = vector.broadcast %490 : vector<8x1xf32> to vector<8x32xf32>
    %492 = arith.subf %482, %491 : vector<8x32xf32>
    %493 = arith.mulf %492, %492 : vector<8x32xf32>
    %cst_240 = arith.constant dense<0.000000e+00> : vector<8xf32>
    %494 = vector.multi_reduction <add>, %493, %cst_240 [1] : vector<8x32xf32> to vector<8xf32>
    %495 = vector.shape_cast %494 : vector<8xf32> to vector<8x1xf32>
    %cst_241 = arith.constant 3.200000e+01 : f32
    %496 = vector.broadcast %cst_241 : f32 to vector<8x1xf32>
    %497 = arith.divf %495, %496 : vector<8x1xf32>
    %cst_242 = arith.constant 9.99999974E-6 : f32
    %498 = vector.broadcast %cst_242 : f32 to vector<8x1xf32>
    %499 = arith.addf %497, %498 : vector<8x1xf32>
    %500 = math.rsqrt %499 : vector<8x1xf32>
    %501 = vector.broadcast %500 : vector<8x1xf32> to vector<8x32xf32>
    %502 = arith.mulf %492, %501 : vector<8x32xf32>
    %503 = vector.broadcast %484 : vector<1x32xf32> to vector<8x32xf32>
    %504 = arith.mulf %502, %503 : vector<8x32xf32>
    %505 = vector.broadcast %486 : vector<1x32xf32> to vector<8x32xf32>
    %506 = arith.addf %504, %505 : vector<8x32xf32>
    %c1_243 = arith.constant 1 : index
    %c0_244 = arith.constant 0 : index
    %c0_245 = arith.constant 0 : index
    %507 = vector.load %arg13[%c1_243, %c0_244, %c0_245] : memref<2x32x128xbf16, #tpu.memory_space<vmem>>, vector<1x32x128xbf16>
    %508 = vector.shape_cast %507 : vector<1x32x128xbf16> to vector<32x128xbf16>
    %509 = arith.truncf %506 : vector<8x32xf32> to vector<8x32xbf16>
    %cst_246 = arith.constant dense<0.000000e+00> : vector<8x128xf32>
    %510 = tpu.matmul %509, %508, %cst_246 {dimension_numbers = #tpu.dot_dimension_numbers<[1], [0], [0], [1], [0, 0, 1, 1], [], []>} : vector<8x32xbf16>, vector<32x128xbf16>, vector<8x128xf32> -> vector<8x128xf32>
    %c1_247 = arith.constant 1 : index
    %c0_248 = arith.constant 0 : index
    %c0_249 = arith.constant 0 : index
    %511 = vector.load %arg14[%c1_247, %c0_248, %c0_249] : memref<2x1x128xf32, #tpu.memory_space<vmem>>, vector<1x1x128xf32>
    %512 = vector.shape_cast %511 : vector<1x1x128xf32> to vector<1x128xf32>
    %513 = vector.broadcast %512 : vector<1x128xf32> to vector<8x128xf32>
    %514 = arith.addf %510, %513 : vector<8x128xf32>
    %cst_250 = arith.constant 0.000000e+00 : f32
    %515 = vector.broadcast %cst_250 : f32 to vector<8x128xf32>
    %516 = arith.maximumf %514, %515 : vector<8x128xf32>
    %c1_251 = arith.constant 1 : index
    %c0_252 = arith.constant 0 : index
    %c0_253 = arith.constant 0 : index
    %517 = vector.load %arg15[%c1_251, %c0_252, %c0_253] : memref<2x128x32xbf16, #tpu.memory_space<vmem>>, vector<1x128x32xbf16>
    %518 = vector.shape_cast %517 : vector<1x128x32xbf16> to vector<128x32xbf16>
    %519 = arith.truncf %516 : vector<8x128xf32> to vector<8x128xbf16>
    %cst_254 = arith.constant dense<0.000000e+00> : vector<8x32xf32>
    %520 = tpu.matmul %519, %518, %cst_254 {dimension_numbers = #tpu.dot_dimension_numbers<[1], [0], [0], [1], [0, 0, 1, 1], [], []>} : vector<8x128xbf16>, vector<128x32xbf16>, vector<8x32xf32> -> vector<8x32xf32>
    %521 = arith.addf %482, %520 : vector<8x32xf32>
    %c1_255 = arith.constant 1 : index
    %c0_256 = arith.constant 0 : index
    %c0_257 = arith.constant 0 : index
    %522 = vector.load %arg16[%c1_255, %c0_256, %c0_257] : memref<2x1x32xf32, #tpu.memory_space<vmem>>, vector<1x1x32xf32>
    %523 = vector.shape_cast %522 : vector<1x1x32xf32> to vector<1x32xf32>
    %524 = vector.broadcast %523 : vector<1x32xf32> to vector<8x32xf32>
    %525 = arith.addf %521, %524 : vector<8x32xf32>
    %c0_258 = arith.constant 0 : index
    %c0_259 = arith.constant 0 : index
    %526 = vector.load %arg17[%c0_258, %c0_259] : memref<1x32xf32, #tpu.memory_space<vmem>>, vector<1x32xf32>
    %c0_260 = arith.constant 0 : index
    %c0_261 = arith.constant 0 : index
    %527 = vector.load %arg18[%c0_260, %c0_261] : memref<1x32xf32, #tpu.memory_space<vmem>>, vector<1x32xf32>
    %cst_262 = arith.constant dense<0.000000e+00> : vector<8xf32>
    %528 = vector.multi_reduction <add>, %525, %cst_262 [1] : vector<8x32xf32> to vector<8xf32>
    %529 = vector.shape_cast %528 : vector<8xf32> to vector<8x1xf32>
    %cst_263 = arith.constant 3.200000e+01 : f32
    %530 = vector.broadcast %cst_263 : f32 to vector<8x1xf32>
    %531 = arith.divf %529, %530 : vector<8x1xf32>
    %532 = vector.broadcast %531 : vector<8x1xf32> to vector<8x32xf32>
    %533 = arith.subf %525, %532 : vector<8x32xf32>
    %534 = arith.mulf %533, %533 : vector<8x32xf32>
    %cst_264 = arith.constant dense<0.000000e+00> : vector<8xf32>
    %535 = vector.multi_reduction <add>, %534, %cst_264 [1] : vector<8x32xf32> to vector<8xf32>
    %536 = vector.shape_cast %535 : vector<8xf32> to vector<8x1xf32>
    %cst_265 = arith.constant 3.200000e+01 : f32
    %537 = vector.broadcast %cst_265 : f32 to vector<8x1xf32>
    %538 = arith.divf %536, %537 : vector<8x1xf32>
    %cst_266 = arith.constant 9.99999974E-6 : f32
    %539 = vector.broadcast %cst_266 : f32 to vector<8x1xf32>
    %540 = arith.addf %538, %539 : vector<8x1xf32>
    %541 = math.rsqrt %540 : vector<8x1xf32>
    %542 = vector.broadcast %541 : vector<8x1xf32> to vector<8x32xf32>
    %543 = arith.mulf %533, %542 : vector<8x32xf32>
    %544 = vector.broadcast %526 : vector<1x32xf32> to vector<8x32xf32>
    %545 = arith.mulf %543, %544 : vector<8x32xf32>
    %546 = vector.broadcast %527 : vector<1x32xf32> to vector<8x32xf32>
    %547 = arith.addf %545, %546 : vector<8x32xf32>
    %c0_267 = arith.constant 0 : index
    %c0_268 = arith.constant 0 : index
    %548 = vector.load %arg19[%c0_267, %c0_268] : memref<32x16xbf16, #tpu.memory_space<vmem>>, vector<32x16xbf16>
    %549 = arith.truncf %547 : vector<8x32xf32> to vector<8x32xbf16>
    %cst_269 = arith.constant dense<0.000000e+00> : vector<8x16xf32>
    %550 = tpu.matmul %549, %548, %cst_269 {dimension_numbers = #tpu.dot_dimension_numbers<[1], [0], [0], [1], [0, 0, 1, 1], [], []>} : vector<8x32xbf16>, vector<32x16xbf16>, vector<8x16xf32> -> vector<8x16xf32>
    %c0_270 = arith.constant 0 : index
    %c0_271 = arith.constant 0 : index
    %551 = vector.load %arg20[%c0_270, %c0_271] : memref<1x16xf32, #tpu.memory_space<vmem>>, vector<1x16xf32>
    %552 = vector.broadcast %551 : vector<1x16xf32> to vector<8x16xf32>
    %553 = arith.addf %550, %552 : vector<8x16xf32>
    %c0_272 = arith.constant 0 : index
    %c0_273 = arith.constant 0 : index
    %c0_274 = arith.constant 0 : index
    %554 = vector.load %arg21[%c0_272, %c0_273, %c0_274] : memref<1x8x16xf32, #tpu.memory_space<vmem>>, vector<1x8x16xf32>
    %555 = vector.shape_cast %554 : vector<1x8x16xf32> to vector<8x16xf32>
    %556 = vector.shape_cast %553 : vector<8x16xf32> to vector<1x8x16xf32>
    tpu.vector_store %arg21[%c0_272, %c0_273, %c0_274], %556 {strides = array<i32>} : memref<1x8x16xf32, #tpu.memory_space<vmem>>, vector<1x8x16xf32>,
    return
  }
  func.func @transform_0(%arg0: i32) -> (i32, i32, i32) {
    %c0_i32 = arith.constant 0 : i32
    %c0_i32_0 = arith.constant 0 : i32
    %c0_i32_1 = arith.constant 0 : i32
    return %arg0, %c0_i32, %c0_i32_0 : i32, i32, i32
  }
  func.func @transform_1(%arg0: i32) -> (i32, i32) {
    %c0_i32 = arith.constant 0 : i32
    %c0_i32_0 = arith.constant 0 : i32
    %c0_i32_1 = arith.constant 0 : i32
    return %c0_i32, %c0_i32_0 : i32, i32
  }
  func.func @transform_2(%arg0: i32) -> (i32, i32) {
    %c0_i32 = arith.constant 0 : i32
    %c0_i32_0 = arith.constant 0 : i32
    %c0_i32_1 = arith.constant 0 : i32
    return %c0_i32, %c0_i32_0 : i32, i32
  }
  func.func @transform_3(%arg0: i32) -> (i32, i32) {
    %c0_i32 = arith.constant 0 : i32
    %c0_i32_0 = arith.constant 0 : i32
    %c0_i32_1 = arith.constant 0 : i32
    return %c0_i32, %c0_i32_0 : i32, i32
  }
  func.func @transform_4(%arg0: i32) -> (i32, i32, i32) {
    %c0_i32 = arith.constant 0 : i32
    %c0_i32_0 = arith.constant 0 : i32
    %c0_i32_1 = arith.constant 0 : i32
    %c0_i32_2 = arith.constant 0 : i32
    return %c0_i32, %c0_i32_0, %c0_i32_1 : i32, i32, i32
  }
  func.func @transform_5(%arg0: i32) -> (i32, i32, i32) {
    %c0_i32 = arith.constant 0 : i32
    %c0_i32_0 = arith.constant 0 : i32
    %c0_i32_1 = arith.constant 0 : i32
    %c0_i32_2 = arith.constant 0 : i32
    return %c0_i32, %c0_i32_0, %c0_i32_1 : i32, i32, i32
  }
  func.func @transform_6(%arg0: i32) -> (i32, i32, i32) {
    %c0_i32 = arith.constant 0 : i32
    %c0_i32_0 = arith.constant 0 : i32
    %c0_i32_1 = arith.constant 0 : i32
    %c0_i32_2 = arith.constant 0 : i32
    return %c0_i32, %c0_i32_0, %c0_i32_1 : i32, i32, i32
  }
  func.func @transform_7(%arg0: i32) -> (i32, i32, i32) {
    %c0_i32 = arith.constant 0 : i32
    %c0_i32_0 = arith.constant 0 : i32
    %c0_i32_1 = arith.constant 0 : i32
    %c0_i32_2 = arith.constant 0 : i32
    return %c0_i32, %c0_i32_0, %c0_i32_1 : i32, i32, i32
  }
  func.func @transform_8(%arg0: i32) -> (i32, i32, i32, i32) {
    %c0_i32 = arith.constant 0 : i32
    %c0_i32_0 = arith.constant 0 : i32
    %c0_i32_1 = arith.constant 0 : i32
    %c0_i32_2 = arith.constant 0 : i32
    %c0_i32_3 = arith.constant 0 : i32
    return %c0_i32, %c0_i32_0, %c0_i32_1, %c0_i32_2 : i32, i32, i32, i32
  }
  func.func @transform_9(%arg0: i32) -> (i32, i32, i32) {
    %c0_i32 = arith.constant 0 : i32
    %c0_i32_0 = arith.constant 0 : i32
    %c0_i32_1 = arith.constant 0 : i32
    %c0_i32_2 = arith.constant 0 : i32
    return %c0_i32, %c0_i32_0, %c0_i32_1 : i32, i32, i32
  }
  func.func @transform_10(%arg0: i32) -> (i32, i32, i32) {
    %c0_i32 = arith.constant 0 : i32
    %c0_i32_0 = arith.constant 0 : i32
    %c0_i32_1 = arith.constant 0 : i32
    %c0_i32_2 = arith.constant 0 : i32
    return %c0_i32, %c0_i32_0, %c0_i32_1 : i32, i32, i32
  }
  func.func @transform_11(%arg0: i32) -> (i32, i32, i32) {
    %c0_i32 = arith.constant 0 : i32
    %c0_i32_0 = arith.constant 0 : i32
    %c0_i32_1 = arith.constant 0 : i32
    %c0_i32_2 = arith.constant 0 : i32
    return %c0_i32, %c0_i32_0, %c0_i32_1 : i32, i32, i32
  }
  func.func @transform_12(%arg0: i32) -> (i32, i32, i32) {
    %c0_i32 = arith.constant 0 : i32
    %c0_i32_0 = arith.constant 0 : i32
    %c0_i32_1 = arith.constant 0 : i32
    %c0_i32_2 = arith.constant 0 : i32
    return %c0_i32, %c0_i32_0, %c0_i32_1 : i32, i32, i32
  }
  func.func @transform_13(%arg0: i32) -> (i32, i32, i32) {
    %c0_i32 = arith.constant 0 : i32
    %c0_i32_0 = arith.constant 0 : i32
    %c0_i32_1 = arith.constant 0 : i32
    %c0_i32_2 = arith.constant 0 : i32
    return %c0_i32, %c0_i32_0, %c0_i32_1 : i32, i32, i32
  }
  func.func @transform_14(%arg0: i32) -> (i32, i32, i32) {
    %c0_i32 = arith.constant 0 : i32
    %c0_i32_0 = arith.constant 0 : i32
    %c0_i32_1 = arith.constant 0 : i32
    %c0_i32_2 = arith.constant 0 : i32
    return %c0_i32, %c0_i32_0, %c0_i32_1 : i32, i32, i32
  }
  func.func @transform_15(%arg0: i32) -> (i32, i32, i32) {
    %c0_i32 = arith.constant 0 : i32
    %c0_i32_0 = arith.constant 0 : i32
    %c0_i32_1 = arith.constant 0 : i32
    %c0_i32_2 = arith.constant 0 : i32
    return %c0_i32, %c0_i32_0, %c0_i32_1 : i32, i32, i32
  }
  func.func @transform_16(%arg0: i32) -> (i32, i32) {
    %c0_i32 = arith.constant 0 : i32
    %c0_i32_0 = arith.constant 0 : i32
    %c0_i32_1 = arith.constant 0 : i32
    return %c0_i32, %c0_i32_0 : i32, i32
  }
  func.func @transform_17(%arg0: i32) -> (i32, i32) {
    %c0_i32 = arith.constant 0 : i32
    %c0_i32_0 = arith.constant 0 : i32
    %c0_i32_1 = arith.constant 0 : i32
    return %c0_i32, %c0_i32_0 : i32, i32
  }
  func.func @transform_18(%arg0: i32) -> (i32, i32) {
    %c0_i32 = arith.constant 0 : i32
    %c0_i32_0 = arith.constant 0 : i32
    %c0_i32_1 = arith.constant 0 : i32
    return %c0_i32, %c0_i32_0 : i32, i32
  }
  func.func @transform_19(%arg0: i32) -> (i32, i32) {
    %c0_i32 = arith.constant 0 : i32
    %c0_i32_0 = arith.constant 0 : i32
    %c0_i32_1 = arith.constant 0 : i32
    return %c0_i32, %c0_i32_0 : i32, i32
  }
  func.func @transform_20(%arg0: i32) -> (i32, i32, i32) {
    %c0_i32 = arith.constant 0 : i32
    %c0_i32_0 = arith.constant 0 : i32
    %c0_i32_1 = arith.constant 0 : i32
    return %arg0, %c0_i32, %c0_i32_0 : i32, i32, i32
  }
}

</mosaic_0001>

<llo_original>
// kernel: trans_block_forward.1
$region0: #{trans_block_forward.1}
  #allocation0 [shape = 'u32[]', space=smem, size = 0x4, offset = 0x4, fixed_abs, tag = 'smem constant byte address 0x4 - core index']
  #allocation1 [shape = 'u32[72,128]{1,0:T(1,128)}', space=vmem, size = 0x9000, scoped, tag = 'internal scratch']
  %s0 = inlined_call_operand.vmem [shape: f32[2,8,16], index: 0, kind: input, shape index: {}]
  %s1 = inlined_call_operand.vmem [shape: bf16[16,32], index: 1, kind: input, shape index: {}]
  %s2 = inlined_call_operand.vmem [shape: f32[1,32], index: 2, kind: input, shape index: {}]
  %s3 = inlined_call_operand.vmem [shape: f32[8,32], index: 3, kind: input, shape index: {}]
  %s4 = inlined_call_operand.vmem [shape: f32[2,1,32], index: 4, kind: input, shape index: {}]
  %s5 = inlined_call_operand.vmem [shape: f32[2,1,32], index: 5, kind: input, shape index: {}]
  %s6 = inlined_call_operand.vmem [shape: bf16[2,32,96], index: 6, kind: input, shape index: {}]
  %s7 = inlined_call_operand.vmem [shape: f32[2,1,96], index: 7, kind: input, shape index: {}]
  %s8 = inlined_call_operand.vmem [shape: bf16[2,8,4,32], index: 8, kind: input, shape index: {}]
  %s9 = inlined_call_operand.vmem [shape: f32[2,1,32], index: 9, kind: input, shape index: {}]
  %s10 = inlined_call_operand.vmem [shape: f32[2,1,32], index: 10, kind: input, shape index: {}]
  %s11 = inlined_call_operand.vmem [shape: f32[2,1,32], index: 11, kind: input, shape index: {}]
  %s12 = inlined_call_operand.vmem [shape: bf16[2,32,128], index: 12, kind: input, shape index: {}]
  %s13 = inlined_call_operand.vmem [shape: f32[2,1,128], index: 13, kind: input, shape index: {}]
  %s14 = inlined_call_operand.vmem [shape: bf16[2,128,32], index: 14, kind: input, shape index: {}]
  %s15 = inlined_call_operand.vmem [shape: f32[2,1,32], index: 15, kind: input, shape index: {}]
  %s16 = inlined_call_operand.vmem [shape: f32[1,32], index: 16, kind: input, shape index: {}]
  %s17 = inlined_call_operand.vmem [shape: f32[1,32], index: 17, kind: input, shape index: {}]
  %s18 = inlined_call_operand.vmem [shape: bf16[32,16], index: 18, kind: input, shape index: {}]
  %s19 = inlined_call_operand.vmem [shape: f32[1,16], index: 19, kind: input, shape index: {}]
  %s20 = inlined_call_operand.hbm [shape: f32[2,8,16], index: 20, kind: output, shape index: {}]
  %s21 = sld [smem:[#allocation0]]
  $region113: #{trans_block_forward.1} parent=0
    _
  %s23 = ssub.s32 1, %s21
  %s24 = scalar_select 0, %s23, %s21
  $region1: #{trans_block_forward.1} parent=0
    #allocation2 [shape = 'u8[8192]{0}', space=vmem, size = 0x2000, scoped, tag = 'output window, operand 0']
    #allocation3 [shape = 's32[2]{0}', space=sflag, size = 0x8, scoped, tag = 'scoped memory for trans_block_forward.1']
    %25 = vsyncpa [#allocation3], 0
    %s26 = scalar_lea.sflag [#allocation3], 1
    %27 = vsyncpa %s26, 0
    loop: start=0, step=1, limit=4
    $region2: #{trans_block_forward.1} parent=1 // loop_pre_header
      _
    $region3: #{trans_block_forward.1} parent=1 // loop_header
      %s29 = sphi 0, %s33
      %p30 = scmp.ge.s32.totalorder %s29, 4
      %s39 = sphi 0, %s41
      %s42 = sphi 0, %s39
      %s43 = sphi 0, %s42
      %s59 = sphi 0, %s43
      %s63 = sphi 0, %s63
      %s65 = sphi 0, %s63
      %s66 = sphi 0, %s65
      %s80 = sphi 0, %s66
      %s84 = sphi 0, %s84
      %s86 = sphi 0, %s84
      %s87 = sphi 0, %s86
      %s101 = sphi 0, %s87
      %s105 = sphi 0, %s105
      %s107 = sphi 0, %s105
      %s108 = sphi 0, %s107
      %s122 = sphi 0, %s108
      %s126 = sphi 0, %s126
      %s128 = sphi 0, %s126
      %s129 = sphi 0, %s128
      %s143 = sphi 0, %s129
      %s147 = sphi 0, %s147
      %s149 = sphi 0, %s147
      %s150 = sphi 0, %s149
      %s164 = sphi 0, %s150
      %s168 = sphi 0, %s168
      %s170 = sphi 0, %s168
      %s171 = sphi 0, %s170
      %s185 = sphi 0, %s171
      %s189 = sphi 0, %s189
      %s191 = sphi 0, %s189
      %s192 = sphi 0, %s191
      %s206 = sphi 0, %s192
      %s210 = sphi 0, %s210
      %s212 = sphi 0, %s210
      %s213 = sphi 0, %s212
      %s227 = sphi 0, %s213
      %s231 = sphi 0, %s231
      %s233 = sphi 0, %s231
      %s234 = sphi 0, %s233
      %s248 = sphi 0, %s234
      %s252 = sphi 0, %s252
      %s254 = sphi 0, %s252
      %s255 = sphi 0, %s254
      %s269 = sphi 0, %s255
      %s273 = sphi 0, %s273
      %s275 = sphi 0, %s273
      %s276 = sphi 0, %s275
      %s290 = sphi 0, %s276
      %s294 = sphi 0, %s294
      %s296 = sphi 0, %s294
      %s297 = sphi 0, %s296
      %s311 = sphi 0, %s297
      %s315 = sphi 0, %s315
      %s317 = sphi 0, %s315
      %s318 = sphi 0, %s317
      %s332 = sphi 0, %s318
      %s336 = sphi 0, %s336
      %s338 = sphi 0, %s336
      %s339 = sphi 0, %s338
      %s353 = sphi 0, %s339
      %s357 = sphi 0, %s357
      %s359 = sphi 0, %s357
      %s360 = sphi 0, %s359
      %s374 = sphi 0, %s360
      %s378 = sphi 0, %s378
      %s380 = sphi 0, %s378
      %s381 = sphi 0, %s380
      %s395 = sphi 0, %s381
      %s399 = sphi 0, %s399
      %s401 = sphi 0, %s399
      %s402 = sphi 0, %s401
      %s416 = sphi 0, %s402
      %s420 = sphi 0, %s420
      %s422 = sphi 0, %s420
      %s423 = sphi 0, %s422
      %s437 = sphi 0, %s423
      %s441 = sphi 0, %s441
      %s443 = sphi 0, %s441
      %s444 = sphi 0, %s443
      %s458 = sphi 0, %s444
      %s464 = sphi 0, %s466
      %s467 = sphi 0, %s464
      %s468 = sphi 0, %s467
      %s484 = sphi 0, %s468
    $region4: #{trans_block_forward.1} parent=1 // loop_header_branch
      %32 = sbr.rel (%p30) target = $region8
    $region5: #{trans_block_forward.1} parent=1 // loop_body
      %s34 = ssub.s32 %s29, 1
      %s35 = ssub.s32 %s29, 2
      %s36 = sadd.s32 %s29, 1
      %s37 = ssub.s32 %s29, %s36
      %p38 = scmp.eq.s32.totalorder %s37, 0
      %s40 = sadd.s32 %s39, 1
      %s41 = scalar_select %p38, %s39, %s40
      %p44 = pneg %p38
      %p45 = scmp.eq.s32.totalorder %s29, 1
      %p46 = por %p44, %p45
      %p47 = scmp.ne.s32.totalorder %s39, %s42
      %p48 = scmp.eq.s32.totalorder %s29, 0
      %p49 = por %p47, %p48
      %p50 = scmp.ne.s32.totalorder %s39, %s42
      %p51 = scmp.eq.s32.totalorder %s34, 1
      %p52 = por %p50, %p51
      %p53 = scmp.ne.s32.totalorder %s42, %s43
      %p54 = scmp.eq.s32.totalorder %s34, 0
      %p55 = por %p53, %p54
      %p56 = scmp.ne.s32.totalorder %s42, %s43
      %p57 = scmp.eq.s32.totalorder %s35, 1
      %p58 = por %p56, %p57
      %p60 = scmp.ne.s32.totalorder %s43, %s59
      %p61 = scmp.eq.s32.totalorder %s35, 0
      %p62 = por %p60, %p61
      %s64 = sadd.s32 %s63, 1
      %p67 = scmp.eq.s32.totalorder %s29, 1
      %p68 = scmp.ne.s32.totalorder %s63, %s65
      %p69 = scmp.eq.s32.totalorder %s29, 0
      %p70 = por %p68, %p69
      %p71 = scmp.ne.s32.totalorder %s63, %s65
      %p72 = scmp.eq.s32.totalorder %s34, 1
      %p73 = por %p71, %p72
      %p74 = scmp.ne.s32.totalorder %s65, %s66
      %p75 = scmp.eq.s32.totalorder %s34, 0
      %p76 = por %p74, %p75
      %p77 = scmp.ne.s32.totalorder %s65, %s66
      %p78 = scmp.eq.s32.totalorder %s35, 1
      %p79 = por %p77, %p78
      %p81 = scmp.ne.s32.totalorder %s66, %s80
      %p82 = scmp.eq.s32.totalorder %s35, 0
      %p83 = por %p81, %p82
      %s85 = sadd.s32 %s84, 1
      %p88 = scmp.eq.s32.totalorder %s29, 1
      %p89 = scmp.ne.s32.totalorder %s84, %s86
      %p90 = scmp.eq.s32.totalorder %s29, 0
      %p91 = por %p89, %p90
      %p92 = scmp.ne.s32.totalorder %s84, %s86
      %p93 = scmp.eq.s32.totalorder %s34, 1
      %p94 = por %p92, %p93
      %p95 = scmp.ne.s32.totalorder %s86, %s87
      %p96 = scmp.eq.s32.totalorder %s34, 0
      %p97 = por %p95, %p96
      %p98 = scmp.ne.s32.totalorder %s86, %s87
      %p99 = scmp.eq.s32.totalorder %s35, 1
      %p100 = por %p98, %p99
      %p102 = scmp.ne.s32.totalorder %s87, %s101
      %p103 = scmp.eq.s32.totalorder %s35, 0
      %p104 = por %p102, %p103
      %s106 = sadd.s32 %s105, 1
      %p109 = scmp.eq.s32.totalorder %s29, 1
      %p110 = scmp.ne.s32.totalorder %s105, %s107
      %p111 = scmp.eq.s32.totalorder %s29, 0
      %p112 = por %p110, %p111
      %p113 = scmp.ne.s32.totalorder %s105, %s107
      %p114 = scmp.eq.s32.totalorder %s34, 1
      %p115 = por %p113, %p114
      %p116 = scmp.ne.s32.totalorder %s107, %s108
      %p117 = scmp.eq.s32.totalorder %s34, 0
      %p118 = por %p116, %p117
      %p119 = scmp.ne.s32.totalorder %s107, %s108
      %p120 = scmp.eq.s32.totalorder %s35, 1
      %p121 = por %p119, %p120
      %p123 = scmp.ne.s32.totalorder %s108, %s122
      %p124 = scmp.eq.s32.totalorder %s35, 0
      %p125 = por %p123, %p124
      %s127 = sadd.s32 %s126, 1
      %p130 = scmp.eq.s32.totalorder %s29, 1
      %p131 = scmp.ne.s32.totalorder %s126, %s128
      %p132 = scmp.eq.s32.totalorder %s29, 0
      %p133 = por %p131, %p132
      %p134 = scmp.ne.s32.totalorder %s126, %s128
      %p135 = scmp.eq.s32.totalorder %s34, 1
      %p136 = por %p134, %p135
      %p137 = scmp.ne.s32.totalorder %s128, %s129
      %p138 = scmp.eq.s32.totalorder %s34, 0
      %p139 = por %p137, %p138
      %p140 = scmp.ne.s32.totalorder %s128, %s129
      %p141 = scmp.eq.s32.totalorder %s35, 1
      %p142 = por %p140, %p141
      %p144 = scmp.ne.s32.totalorder %s129, %s143
      %p145 = scmp.eq.s32.totalorder %s35, 0
      %p146 = por %p144, %p145
      %s148 = sadd.s32 %s147, 1
      %p151 = scmp.eq.s32.totalorder %s29, 1
      %p152 = scmp.ne.s32.totalorder %s147, %s149
      %p153 = scmp.eq.s32.totalorder %s29, 0
      %p154 = por %p152, %p153
      %p155 = scmp.ne.s32.totalorder %s147, %s149
      %p156 = scmp.eq.s32.totalorder %s34, 1
      %p157 = por %p155, %p156
      %p158 = scmp.ne.s32.totalorder %s149, %s150
      %p159 = scmp.eq.s32.totalorder %s34, 0
      %p160 = por %p158, %p159
      %p161 = scmp.ne.s32.totalorder %s149, %s150
      %p162 = scmp.eq.s32.totalorder %s35, 1
      %p163 = por %p161, %p162
      %p165 = scmp.ne.s32.totalorder %s150, %s164
      %p166 = scmp.eq.s32.totalorder %s35, 0
      %p167 = por %p165, %p166
      %s169 = sadd.s32 %s168, 1
      %p172 = scmp.eq.s32.totalorder %s29, 1
      %p173 = scmp.ne.s32.totalorder %s168, %s170
      %p174 = scmp.eq.s32.totalorder %s29, 0
      %p175 = por %p173, %p174
      %p176 = scmp.ne.s32.totalorder %s168, %s170
      %p177 = scmp.eq.s32.totalorder %s34, 1
      %p178 = por %p176, %p177
      %p179 = scmp.ne.s32.totalorder %s170, %s171
      %p180 = scmp.eq.s32.totalorder %s34, 0
      %p181 = por %p179, %p180
      %p182 = scmp.ne.s32.totalorder %s170, %s171
      %p183 = scmp.eq.s32.totalorder %s35, 1
      %p184 = por %p182, %p183
      %p186 = scmp.ne.s32.totalorder %s171, %s185
      %p187 = scmp.eq.s32.totalorder %s35, 0
      %p188 = por %p186, %p187
      %s190 = sadd.s32 %s189, 1
      %p193 = scmp.eq.s32.totalorder %s29, 1
      %p194 = scmp.ne.s32.totalorder %s189, %s191
      %p195 = scmp.eq.s32.totalorder %s29, 0
      %p196 = por %p194, %p195
      %p197 = scmp.ne.s32.totalorder %s189, %s191
      %p198 = scmp.eq.s32.totalorder %s34, 1
      %p199 = por %p197, %p198
      %p200 = scmp.ne.s32.totalorder %s191, %s192
      %p201 = scmp.eq.s32.totalorder %s34, 0
      %p202 = por %p200, %p201
      %p203 = scmp.ne.s32.totalorder %s191, %s192
      %p204 = scmp.eq.s32.totalorder %s35, 1
      %p205 = por %p203, %p204
      %p207 = scmp.ne.s32.totalorder %s192, %s206
      %p208 = scmp.eq.s32.totalorder %s35, 0
      %p209 = por %p207, %p208
      %s211 = sadd.s32 %s210, 1
      %p214 = scmp.eq.s32.totalorder %s29, 1
      %p215 = scmp.ne.s32.totalorder %s210, %s212
      %p216 = scmp.eq.s32.totalorder %s29, 0
      %p217 = por %p215, %p216
      %p218 = scmp.ne.s32.totalorder %s210, %s212
      %p219 = scmp.eq.s32.totalorder %s34, 1
      %p220 = por %p218, %p219
      %p221 = scmp.ne.s32.totalorder %s212, %s213
      %p222 = scmp.eq.s32.totalorder %s34, 0
      %p223 = por %p221, %p222
      %p224 = scmp.ne.s32.totalorder %s212, %s213
      %p225 = scmp.eq.s32.totalorder %s35, 1
      %p226 = por %p224, %p225
      %p228 = scmp.ne.s32.totalorder %s213, %s227
      %p229 = scmp.eq.s32.totalorder %s35, 0
      %p230 = por %p228, %p229
      %s232 = sadd.s32 %s231, 1
      %p235 = scmp.eq.s32.totalorder %s29, 1
      %p236 = scmp.ne.s32.totalorder %s231, %s233
      %p237 = scmp.eq.s32.totalorder %s29, 0
      %p238 = por %p236, %p237
      %p239 = scmp.ne.s32.totalorder %s231, %s233
      %p240 = scmp.eq.s32.totalorder %s34, 1
      %p241 = por %p239, %p240
      %p242 = scmp.ne.s32.totalorder %s233, %s234
      %p243 = scmp.eq.s32.totalorder %s34, 0
      %p244 = por %p242, %p243
      %p245 = scmp.ne.s32.totalorder %s233, %s234
      %p246 = scmp.eq.s32.totalorder %s35, 1
      %p247 = por %p245, %p246
      %p249 = scmp.ne.s32.totalorder %s234, %s248
      %p250 = scmp.eq.s32.totalorder %s35, 0
      %p251 = por %p249, %p250
      %s253 = sadd.s32 %s252, 1
      %p256 = scmp.eq.s32.totalorder %s29, 1
      %p257 = scmp.ne.s32.totalorder %s252, %s254
      %p258 = scmp.eq.s32.totalorder %s29, 0
      %p259 = por %p257, %p258
      %p260 = scmp.ne.s32.totalorder %s252, %s254
      %p261 = scmp.eq.s32.totalorder %s34, 1
      %p262 = por %p260, %p261
      %p263 = scmp.ne.s32.totalorder %s254, %s255
      %p264 = scmp.eq.s32.totalorder %s34, 0
      %p265 = por %p263, %p264
      %p266 = scmp.ne.s32.totalorder %s254, %s255
      %p267 = scmp.eq.s32.totalorder %s35, 1
      %p268 = por %p266, %p267
      %p270 = scmp.ne.s32.totalorder %s255, %s269
      %p271 = scmp.eq.s32.totalorder %s35, 0
      %p272 = por %p270, %p271
      %s274 = sadd.s32 %s273, 1
      %p277 = scmp.eq.s32.totalorder %s29, 1
      %p278 = scmp.ne.s32.totalorder %s273, %s275
      %p279 = scmp.eq.s32.totalorder %s29, 0
      %p280 = por %p278, %p279
      %p281 = scmp.ne.s32.totalorder %s273, %s275
      %p282 = scmp.eq.s32.totalorder %s34, 1
      %p283 = por %p281, %p282
      %p284 = scmp.ne.s32.totalorder %s275, %s276
      %p285 = scmp.eq.s32.totalorder %s34, 0
      %p286 = por %p284, %p285
      %p287 = scmp.ne.s32.totalorder %s275, %s276
      %p288 = scmp.eq.s32.totalorder %s35, 1
      %p289 = por %p287, %p288
      %p291 = scmp.ne.s32.totalorder %s276, %s290
      %p292 = scmp.eq.s32.totalorder %s35, 0
      %p293 = por %p291, %p292
      %s295 = sadd.s32 %s294, 1
      %p298 = scmp.eq.s32.totalorder %s29, 1
      %p299 = scmp.ne.s32.totalorder %s294, %s296
      %p300 = scmp.eq.s32.totalorder %s29, 0
      %p301 = por %p299, %p300
      %p302 = scmp.ne.s32.totalorder %s294, %s296
      %p303 = scmp.eq.s32.totalorder %s34, 1
      %p304 = por %p302, %p303
      %p305 = scmp.ne.s32.totalorder %s296, %s297
      %p306 = scmp.eq.s32.totalorder %s34, 0
      %p307 = por %p305, %p306
      %p308 = scmp.ne.s32.totalorder %s296, %s297
      %p309 = scmp.eq.s32.totalorder %s35, 1
      %p310 = por %p308, %p309
      %p312 = scmp.ne.s32.totalorder %s297, %s311
      %p313 = scmp.eq.s32.totalorder %s35, 0
      %p314 = por %p312, %p313
      %s316 = sadd.s32 %s315, 1
      %p319 = scmp.eq.s32.totalorder %s29, 1
      %p320 = scmp.ne.s32.totalorder %s315, %s317
      %p321 = scmp.eq.s32.totalorder %s29, 0
      %p322 = por %p320, %p321
      %p323 = scmp.ne.s32.totalorder %s315, %s317
      %p324 = scmp.eq.s32.totalorder %s34, 1
      %p325 = por %p323, %p324
      %p326 = scmp.ne.s32.totalorder %s317, %s318
      %p327 = scmp.eq.s32.totalorder %s34, 0
      %p328 = por %p326, %p327
      %p329 = scmp.ne.s32.totalorder %s317, %s318
      %p330 = scmp.eq.s32.totalorder %s35, 1
      %p331 = por %p329, %p330
      %p333 = scmp.ne.s32.totalorder %s318, %s332
      %p334 = scmp.eq.s32.totalorder %s35, 0
      %p335 = por %p333, %p334
      %s337 = sadd.s32 %s336, 1
      %p340 = scmp.eq.s32.totalorder %s29, 1
      %p341 = scmp.ne.s32.totalorder %s336, %s338
      %p342 = scmp.eq.s32.totalorder %s29, 0
      %p343 = por %p341, %p342
      %p344 = scmp.ne.s32.totalorder %s336, %s338
      %p345 = scmp.eq.s32.totalorder %s34, 1
      %p346 = por %p344, %p345
      %p347 = scmp.ne.s32.totalorder %s338, %s339
      %p348 = scmp.eq.s32.totalorder %s34, 0
      %p349 = por %p347, %p348
      %p350 = scmp.ne.s32.totalorder %s338, %s339
      %p351 = scmp.eq.s32.totalorder %s35, 1
      %p352 = por %p350, %p351
      %p354 = scmp.ne.s32.totalorder %s339, %s353
      %p355 = scmp.eq.s32.totalorder %s35, 0
      %p356 = por %p354, %p355
      %s358 = sadd.s32 %s357, 1
      %p361 = scmp.eq.s32.totalorder %s29, 1
      %p362 = scmp.ne.s32.totalorder %s357, %s359
      %p363 = scmp.eq.s32.totalorder %s29, 0
      %p364 = por %p362, %p363
      %p365 = scmp.ne.s32.totalorder %s357, %s359
      %p366 = scmp.eq.s32.totalorder %s34, 1
      %p367 = por %p365, %p366
      %p368 = scmp.ne.s32.totalorder %s359, %s360
      %p369 = scmp.eq.s32.totalorder %s34, 0
      %p370 = por %p368, %p369
      %p371 = scmp.ne.s32.totalorder %s359, %s360
      %p372 = scmp.eq.s32.totalorder %s35, 1
      %p373 = por %p371, %p372
      %p375 = scmp.ne.s32.totalorder %s360, %s374
      %p376 = scmp.eq.s32.totalorder %s35, 0
      %p377 = por %p375, %p376
      %s379 = sadd.s32 %s378, 1
      %p382 = scmp.eq.s32.totalorder %s29, 1
      %p383 = scmp.ne.s32.totalorder %s378, %s380
      %p384 = scmp.eq.s32.totalorder %s29, 0
      %p385 = por %p383, %p384
      %p386 = scmp.ne.s32.totalorder %s378, %s380
      %p387 = scmp.eq.s32.totalorder %s34, 1
      %p388 = por %p386, %p387
      %p389 = scmp.ne.s32.totalorder %s380, %s381
      %p390 = scmp.eq.s32.totalorder %s34, 0
      %p391 = por %p389, %p390
      %p392 = scmp.ne.s32.totalorder %s380, %s381
      %p393 = scmp.eq.s32.totalorder %s35, 1
      %p394 = por %p392, %p393
      %p396 = scmp.ne.s32.totalorder %s381, %s395
      %p397 = scmp.eq.s32.totalorder %s35, 0
      %p398 = por %p396, %p397
      %s400 = sadd.s32 %s399, 1
      %p403 = scmp.eq.s32.totalorder %s29, 1
      %p404 = scmp.ne.s32.totalorder %s399, %s401
      %p405 = scmp.eq.s32.totalorder %s29, 0
      %p406 = por %p404, %p405
      %p407 = scmp.ne.s32.totalorder %s399, %s401
      %p408 = scmp.eq.s32.totalorder %s34, 1
      %p409 = por %p407, %p408
      %p410 = scmp.ne.s32.totalorder %s401, %s402
      %p411 = scmp.eq.s32.totalorder %s34, 0
      %p412 = por %p410, %p411
      %p413 = scmp.ne.s32.totalorder %s401, %s402
      %p414 = scmp.eq.s32.totalorder %s35, 1
      %p415 = por %p413, %p414
      %p417 = scmp.ne.s32.totalorder %s402, %s416
      %p418 = scmp.eq.s32.totalorder %s35, 0
      %p419 = por %p417, %p418
      %s421 = sadd.s32 %s420, 1
      %p424 = scmp.eq.s32.totalorder %s29, 1
      %p425 = scmp.ne.s32.totalorder %s420, %s422
      %p426 = scmp.eq.s32.totalorder %s29, 0
      %p427 = por %p425, %p426
      %p428 = scmp.ne.s32.totalorder %s420, %s422
      %p429 = scmp.eq.s32.totalorder %s34, 1
      %p430 = por %p428, %p429
      %p431 = scmp.ne.s32.totalorder %s422, %s423
      %p432 = scmp.eq.s32.totalorder %s34, 0
      %p433 = por %p431, %p432
      %p434 = scmp.ne.s32.totalorder %s422, %s423
      %p435 = scmp.eq.s32.totalorder %s35, 1
      %p436 = por %p434, %p435
      %p438 = scmp.ne.s32.totalorder %s423, %s437
      %p439 = scmp.eq.s32.totalorder %s35, 0
      %p440 = por %p438, %p439
      %s442 = sadd.s32 %s441, 1
      %p445 = scmp.eq.s32.totalorder %s29, 1
      %p446 = scmp.ne.s32.totalorder %s441, %s443
      %p447 = scmp.eq.s32.totalorder %s29, 0
      %p448 = por %p446, %p447
      %p449 = scmp.ne.s32.totalorder %s441, %s443
      %p450 = scmp.eq.s32.totalorder %s34, 1
      %p451 = por %p449, %p450
      %p452 = scmp.ne.s32.totalorder %s443, %s444
      %p453 = scmp.eq.s32.totalorder %s34, 0
      %p454 = por %p452, %p453
      %p455 = scmp.ne.s32.totalorder %s443, %s444
      %p456 = scmp.eq.s32.totalorder %s35, 1
      %p457 = por %p455, %p456
      %p459 = scmp.ne.s32.totalorder %s444, %s458
      %p460 = scmp.eq.s32.totalorder %s35, 0
      %p461 = por %p459, %p460
      %s462 = ssub.s32 %s29, %s36
      %p463 = scmp.eq.s32.totalorder %s462, 0
      %s465 = sadd.s32 %s464, 1
      %s466 = scalar_select %p463, %s464, %s465
      %p469 = pneg %p463
      %p470 = scmp.eq.s32.totalorder %s29, 1
      %p471 = por %p469, %p470
      %p472 = scmp.ne.s32.totalorder %s464, %s467
      %p473 = scmp.eq.s32.totalorder %s29, 0
      %p474 = por %p472, %p473
      %p475 = scmp.ne.s32.totalorder %s464, %s467
      %p476 = scmp.eq.s32.totalorder %s34, 1
      %p477 = por %p475, %p476
      %p478 = scmp.ne.s32.totalorder %s467, %s468
      %p479 = scmp.eq.s32.totalorder %s34, 0
      %p480 = por %p478, %p479
      %p481 = scmp.ne.s32.totalorder %s467, %s468
      %p482 = scmp.eq.s32.totalorder %s35, 1
      %p483 = por %p481, %p482
      %p485 = scmp.ne.s32.totalorder %s468, %s484
      %p486 = scmp.eq.s32.totalorder %s35, 0
      %p487 = por %p485, %p486
      %p488 = scmp.le.s32.totalorder 1, %s29
      %p489 = scmp.lt.s32.totalorder %s29, 3
      %p490 = pnand %p488, %p489
      %p491 = pneg %p490
      // Predicated region
      $region9: #{trans_block_forward.1} parent=5 // pred_check
        _
      $region10: #{trans_block_forward.1} parent=5 // pred_check_branch
        %493 = sbr.rel (%p490) target = $region12
      $region11: #{trans_block_forward.1} parent=5 // pred_region
        %s494 = ssub.s32 %s29, 1
        // Predicated region
        $region13: #{trans_block_forward.1} parent=11 // pred_check
          %p495 = pneg %p76
        $region14: #{trans_block_forward.1} parent=11 // pred_check_branch
          %497 = sbr.rel (%p495) target = $region16
        $region15: #{trans_block_forward.1} parent=11 // pred_region
          _
        $region16: #{trans_block_forward.1} parent=11 // pred_fallthru
          _
        // Predicated region
        $region17: #{trans_block_forward.1} parent=11 // pred_check
          %p498 = pneg %p97
        $region18: #{trans_block_forward.1} parent=11 // pred_check_branch
          %500 = sbr.rel (%p498) target = $region20
        $region19: #{trans_block_forward.1} parent=11 // pred_region
          _
        $region20: #{trans_block_forward.1} parent=11 // pred_fallthru
          _
        // Predicated region
        $region21: #{trans_block_forward.1} parent=11 // pred_check
          %p501 = pneg %p118
        $region22: #{trans_block_forward.1} parent=11 // pred_check_branch
          %503 = sbr.rel (%p501) target = $region24
        $region23: #{trans_block_forward.1} parent=11 // pred_region
          _
        $region24: #{trans_block_forward.1} parent=11 // pred_fallthru
          _
        // Predicated region
        $region25: #{trans_block_forward.1} parent=11 // pred_check
          %p504 = pneg %p139
        $region26: #{trans_block_forward.1} parent=11 // pred_check_branch
          %506 = sbr.rel (%p504) target = $region28
        $region27: #{trans_block_forward.1} parent=11 // pred_region
          _
        $region28: #{trans_block_forward.1} parent=11 // pred_fallthru
          _
        // Predicated region
        $region29: #{trans_block_forward.1} parent=11 // pred_check
          %p507 = pneg %p160
        $region30: #{trans_block_forward.1} parent=11 // pred_check_branch
          %509 = sbr.rel (%p507) target = $region32
        $region31: #{trans_block_forward.1} parent=11 // pred_region
          _
        $region32: #{trans_block_forward.1} parent=11 // pred_fallthru
          _
        // Predicated region
        $region33: #{trans_block_forward.1} parent=11 // pred_check
          %p510 = pneg %p181
        $region34: #{trans_block_forward.1} parent=11 // pred_check_branch
          %512 = sbr.rel (%p510) target = $region36
        $region35: #{trans_block_forward.1} parent=11 // pred_region
          _
        $region36: #{trans_block_forward.1} parent=11 // pred_fallthru
          _
        // Predicated region
        $region37: #{trans_block_forward.1} parent=11 // pred_check
          %p513 = pneg %p202
        $region38: #{trans_block_forward.1} parent=11 // pred_check_branch
          %515 = sbr.rel (%p513) target = $region40
        $region39: #{trans_block_forward.1} parent=11 // pred_region
          _
        $region40: #{trans_block_forward.1} parent=11 // pred_fallthru
          _
        // Predicated region
        $region41: #{trans_block_forward.1} parent=11 // pred_check
          %p516 = pneg %p223
        $region42: #{trans_block_forward.1} parent=11 // pred_check_branch
          %518 = sbr.rel (%p516) target = $region44
        $region43: #{trans_block_forward.1} parent=11 // pred_region
          _
        $region44: #{trans_block_forward.1} parent=11 // pred_fallthru
          _
        // Predicated region
        $region45: #{trans_block_forward.1} parent=11 // pred_check
          %p519 = pneg %p244
        $region46: #{trans_block_forward.1} parent=11 // pred_check_branch
          %521 = sbr.rel (%p519) target = $region48
        $region47: #{trans_block_forward.1} parent=11 // pred_region
          _
        $region48: #{trans_block_forward.1} parent=11 // pred_fallthru
          _
        // Predicated region
        $region49: #{trans_block_forward.1} parent=11 // pred_check
          %p522 = pneg %p265
        $region50: #{trans_block_forward.1} parent=11 // pred_check_branch
          %524 = sbr.rel (%p522) target = $region52
        $region51: #{trans_block_forward.1} parent=11 // pred_region
          _
        $region52: #{trans_block_forward.1} parent=11 // pred_fallthru
          _
        // Predicated region
        $region53: #{trans_block_forward.1} parent=11 // pred_check
          %p525 = pneg %p286
        $region54: #{trans_block_forward.1} parent=11 // pred_check_branch
          %527 = sbr.rel (%p525) target = $region56
        $region55: #{trans_block_forward.1} parent=11 // pred_region
          _
        $region56: #{trans_block_forward.1} parent=11 // pred_fallthru
          _
        // Predicated region
        $region57: #{trans_block_forward.1} parent=11 // pred_check
          %p528 = pneg %p307
        $region58: #{trans_block_forward.1} parent=11 // pred_check_branch
          %530 = sbr.rel (%p528) target = $region60
        $region59: #{trans_block_forward.1} parent=11 // pred_region
          _
        $region60: #{trans_block_forward.1} parent=11 // pred_fallthru
          _
        // Predicated region
        $region61: #{trans_block_forward.1} parent=11 // pred_check
          %p531 = pneg %p328
        $region62: #{trans_block_forward.1} parent=11 // pred_check_branch
          %533 = sbr.rel (%p531) target = $region64
        $region63: #{trans_block_forward.1} parent=11 // pred_region
          _
        $region64: #{trans_block_forward.1} parent=11 // pred_fallthru
          _
        // Predicated region
        $region65: #{trans_block_forward.1} parent=11 // pred_check
          %p534 = pneg %p349
        $region66: #{trans_block_forward.1} parent=11 // pred_check_branch
          %536 = sbr.rel (%p534) target = $region68
        $region67: #{trans_block_forward.1} parent=11 // pred_region
          _
        $region68: #{trans_block_forward.1} parent=11 // pred_fallthru
          _
        // Predicated region
        $region69: #{trans_block_forward.1} parent=11 // pred_check
          %p537 = pneg %p370
        $region70: #{trans_block_forward.1} parent=11 // pred_check_branch
          %539 = sbr.rel (%p537) target = $region72
        $region71: #{trans_block_forward.1} parent=11 // pred_region
          _
        $region72: #{trans_block_forward.1} parent=11 // pred_fallthru
          _
        // Predicated region
        $region73: #{trans_block_forward.1} parent=11 // pred_check
          %p540 = pneg %p391
        $region74: #{trans_block_forward.1} parent=11 // pred_check_branch
          %542 = sbr.rel (%p540) target = $region76
        $region75: #{trans_block_forward.1} parent=11 // pred_region
          _
        $region76: #{trans_block_forward.1} parent=11 // pred_fallthru
          _
        // Predicated region
        $region77: #{trans_block_forward.1} parent=11 // pred_check
          %p543 = pneg %p412
        $region78: #{trans_block_forward.1} parent=11 // pred_check_branch
          %545 = sbr.rel (%p543) target = $region80
        $region79: #{trans_block_forward.1} parent=11 // pred_region
          _
        $region80: #{trans_block_forward.1} parent=11 // pred_fallthru
          _
        // Predicated region
        $region81: #{trans_block_forward.1} parent=11 // pred_check
          %p546 = pneg %p433
        $region82: #{trans_block_forward.1} parent=11 // pred_check_branch
          %548 = sbr.rel (%p546) target = $region84
        $region83: #{trans_block_forward.1} parent=11 // pred_region
          _
        $region84: #{trans_block_forward.1} parent=11 // pred_fallthru
          _
        // Predicated region
        $region85: #{trans_block_forward.1} parent=11 // pred_check
          %p549 = pneg %p454
        $region86: #{trans_block_forward.1} parent=11 // pred_check_branch
          %551 = sbr.rel (%p549) target = $region88
        $region87: #{trans_block_forward.1} parent=11 // pred_region
          _
        $region88: #{trans_block_forward.1} parent=11 // pred_fallthru
          _
      $region12: #{trans_block_forward.1} parent=5 // pred_fallthru
        _
      %p552 = scmp.lt.s32.totalorder %s29, 2
      // Predicated region
      $region89: #{trans_block_forward.1} parent=5 // pred_check
        %p553 = pneg %p552
      $region90: #{trans_block_forward.1} parent=5 // pred_check_branch
        %555 = sbr.rel (%p553) target = $region92
      $region91: #{trans_block_forward.1} parent=5 // pred_region
        // Predicated region
        $region93: #{trans_block_forward.1} parent=91 // pred_check
          %p556 = pneg %p49
        $region94: #{trans_block_forward.1} parent=91 // pred_check_branch
          %558 = sbr.rel (%p556) target = $region96
        $region95: #{trans_block_forward.1} parent=91 // pred_region
          %p559 = scmp.lt.s32.totalorder %s29, 1
          %s560 = scalar_select %p559, %s29, 1
          %s561 = smul.addr %s560, 8
          %s562 = scalar_lea.vmem %s0, %s561
        $region96: #{trans_block_forward.1} parent=91 // pred_fallthru
          _
      $region92: #{trans_block_forward.1} parent=5 // pred_fallthru
        _
      %p563 = scmp.le.s32.totalorder 1, %s29
      %p564 = scmp.lt.s32.totalorder %s29, 3
      %p565 = pnand %p563, %p564
      %p566 = pneg %p565
      // Predicated region
      $region97: #{trans_block_forward.1} parent=5 // pred_check
        _
      $region98: #{trans_block_forward.1} parent=5 // pred_check_branch
        %568 = sbr.rel (%p565) target = $region100
      $region99: #{trans_block_forward.1} parent=5 // pred_region
        %s569 = ssub.s32 %s29, 1
        %p570 = scmp.lt.s32.totalorder %s34, 1
        %s571 = scalar_select %p570, %s34, 1
        %s572 = smul.addr %s571, 8
        %s573 = scalar_lea.vmem %s0, %s572
        %p574 = pneg %p55
        %p575 = pneg %p52
        %p576 = pneg %p76
        %p577 = pneg %p73
        %p578 = pneg %p97
        %p579 = pneg %p94
        %p580 = pneg %p118
        %p581 = pneg %p115
        %p582 = pneg %p139
        %p583 = pneg %p136
        %p584 = pneg %p160
        %p585 = pneg %p157
        %p586 = pneg %p181
        %p587 = pneg %p178
        %p588 = pneg %p202
        %p589 = pneg %p199
        %p590 = pneg %p223
        %p591 = pneg %p220
        %p592 = pneg %p244
        %p593 = pneg %p241
        %p594 = pneg %p265
        %p595 = pneg %p262
        %p596 = pneg %p286
        %p597 = pneg %p283
        %p598 = pneg %p307
        %p599 = pneg %p304
        %p600 = pneg %p328
        %p601 = pneg %p325
        %p602 = pneg %p349
        %p603 = pneg %p346
        %p604 = pneg %p370
        %p605 = pneg %p367
        %p606 = pneg %p391
        %p607 = pneg %p388
        %p608 = pneg %p412
        %p609 = pneg %p409
        %p610 = pneg %p433
        %p611 = pneg %p430
        %p612 = pneg %p454
        %p613 = pneg %p451
        %p614 = pneg %p480
        %p615 = pneg %p477
        %s616 = sand.u32 %s467, 1
        %s617 = scalar_lea.sflag [#allocation3], %s616
        %s618 = sand.u32 %s467, 1
        %s619 = smul.addr %s618, 8
        %s620 = scalar_lea.vmem [#allocation2], %s619
        %p621 = scmp.lt.s32.totalorder %s34, 1
        %s622 = scalar_select %p621, %s34, 1
        %s623 = smul.addr %s622, 8
        %s624 = scalar_lea.vmem %s0, %s623
        %v626 = vld [vmem:[%s624] sm:$0xff]
        %v627 = vld [vmem:[%s1] sm:$0xf]
        %v628 = vld [vmem:[%s1 + $0x4] sm:$0xf]
        %v629 = vpack.c.bf16 %v626, %v626
        %v630 = vld [vmem:[%s2] sm:$0x1]
        %v632 = vperm.slane %v630, 0
        %v636 = vunpack.c.l.b16 %v627
        %v637 = vunpack.c.l.b16 %v628
        %v638 = vpack.c.b16 %v637, %v636
        %vm640 = vcmask 130048
        %v642 = vsel %vm640, %v629, 0
        %644 = vmatpush.bf16.msra.mxu0 0
        %645 = vmatpush.bf16.msra.mxu0 0
        %646 = vmatpush.bf16.msra.mxu0 0
        %647 = vmatpush.bf16.msra.mxu0 0
        %648 = vmatpush.bf16.msra.mxu0 0
        %649 = vmatpush.bf16.msra.mxu0 0
        %650 = vmatpush.bf16.msra.mxu0 0
        %651 = vmatpush.bf16.msra.mxu0 %v638
        %652 = vmatmul.bf16.gmra.mxu0 %v642
        %v653 = vpop.f32.mrf.mxu0
        %v654 = vadd.f32 %v632, %v653
        %v655 = vpop.f32.mrf.mxu0
        %656 = vdwg.mxu0
        %v657 = vmul.f32 %v654, 5.656854
        %v658 = vld [vmem:[%s3] sm:$0xff]
        %v659 = vadd.f32 %v657, %v658
        %v660 = vld [vmem:[%s4] sm:$0x1]
        %v661 = vld [vmem:[%s5] sm:$0x1]
        %vm662 = vcmask 261120
        %v663 = vsel %vm662, %v659, 0.0
        %664 = vadd.xlane.f32.xlu0 %v663
        %v665 = vpop.xlane.xlu0 %664
        %v666 = vrcp.pop 32.0
        %v667 = vmul.f32 32.0, %v666
        %v668 = vsub.f32 1.0, %v667
        %v669 = vmul.f32 %v666, %v668
        %v670 = vadd.f32 %v666, %v669
        %vm671 = vweird.f32 %v666
        %v672 = vsel %vm671, %v666, %v670
        %v673 = vmul.f32 %v665, %v672
        %v674 = vsub.f32 %v659, %v673
        %v675 = vmul.f32 %v674, %v674
        %v676 = vsel %vm662, %v675, 0.0
        %677 = vadd.xlane.f32.xlu0 %v676
        %v678 = vpop.xlane.xlu0 %677
        %v679 = vmul.f32 %v678, %v672
        %v680 = vadd.f32 %v679, 1e-05
        %v681 = vrsqrt.pop %v680
        %v682 = vmul.f32 %v681, %v680
        %v683 = vmul.f32 %v682, %v681
        %v684 = vmul.f32 0.5, %v683
        %v685 = vsub.f32 1.5, %v684
        %v686 = vmul.f32 %v681, %v685
        %vm687 = vweird.f32 %v680
        %vm688 = vweird.f32 %v681
        %vm689 = vmor %vm687, %vm688
        %v690 = vsel %vm689, %v681, %v686
        %v691 = vmul.f32 %v674, %v690
        %v693 = vperm.slane %v660, 0
        %v695 = vmul.f32 %v691, %v693
        %v697 = vperm.slane %v661, 0
        %v699 = vadd.f32 %v695, %v697
        %v700 = vld [vmem:[%s6] sm:$0xf]
        %v701 = vld [vmem:[%s6 + $0x4] sm:$0xf]
        %v702 = vld [vmem:[%s6 + $0x8] sm:$0xf]
        %v703 = vld [vmem:[%s6 + $0xc] sm:$0xf]
        %v704 = vpack.c.bf16 %v699, %v699
        %v705 = vld [vmem:[%s7] sm:$0x1]
        %v707 = vperm.slane %v705, 0
        %v713 = vunpack.c.l.b16 %v700
        %v714 = vunpack.c.l.b16 %v701
        %v715 = vunpack.c.l.b16 %v702
        %v716 = vunpack.c.l.b16 %v703
        %v717 = vpack.c.b16 %v714, %v713
        %v718 = vpack.c.b16 %v716, %v715
        %v722 = vsel %vm662, %v704, 0
        %724 = vmatpush.bf16.msra.mxu0 0
        %725 = vmatpush.bf16.msra.mxu0 0
        %726 = vmatpush.bf16.msra.mxu0 0
        %727 = vmatpush.bf16.msra.mxu0 0
        %728 = vmatpush.bf16.msra.mxu0 0
        %729 = vmatpush.bf16.msra.mxu0 0
        %730 = vmatpush.bf16.msra.mxu0 %v718
        %731 = vmatpush.bf16.msra.mxu0 %v717
        %732 = vmatmul.bf16.gmra.mxu0 %v722
        %v733 = vpop.f32.mrf.mxu0
        %v734 = vadd.f32 %v707, %v733
        %v735 = vpop.f32.mrf.mxu0
        %736 = vdwg.mxu0
        %738 = vrot.lane.b32.xlu0 %v734, 96
        %v739 = vpop.permute.xlu0 %738
        %vm740 = vcmask 31744
        %v741 = vsel %vm740, %v734, 0
        %v743 = vsel %vm740, %v739, 0
        %745 = vmatpush.xpose.msra.mxu0 0.0
        %746 = vmatpush.xpose.msra.mxu0 0.0
        %747 = vmatpush.xpose.msra.mxu0 0.0
        %748 = vmatpush.xpose.msra.mxu0 0.0
        %749 = vmatpush.xpose.msra.mxu0 0.0
        %750 = vmatpush.xpose.msra.mxu0 0.0
        %751 = vmatpush.xpose.msra.mxu0 0.0
        %752 = vmatpush.xpose.msra.mxu0 0.0
        %753 = vmatpush.xpose.msra.mxu0 0.0
        %754 = vmatpush.xpose.msra.mxu0 0.0
        %755 = vmatpush.xpose.msra.mxu0 0.0
        %756 = vmatpush.xpose.msra.mxu0 0.0
        %757 = vmatpush.xpose.msra.mxu0 0.0
        %758 = vmatpush.xpose.msra.mxu0 0.0
        %759 = vmatpush.xpose.msra.mxu0 0.0
        %760 = vmatpush.xpose.msra.mxu0 %v743
        %761 = vmatmul.f32.gmra.mxu0 %v741
        %v762 = vpop.f32.mrf.mxu0
        %v763 = vadd.f32 0.0, %v762
        %764 = vdwg.mxu0
        %v765 = vmul.f32 %v763, 0.5
        %vm766 = vcmask 64512
        %v767 = vsel %vm766, %v765, -inf
        %768 = vmax.xlane.f32.xlu0 %v767
        %v769 = vpop.xlane.xlu0 %768
        %v770 = vsub.f32 %v765, %v769
        %v771 = vmul.f32 %v770, 1.442695
        %v772 = vpow.pop %v771
        %v773 = vsel %vm766, %v772, 0.0
        %774 = vadd.xlane.f32.xlu0 %v773
        %v775 = vpop.xlane.xlu0 %774
        %v776 = vrcp.pop %v775
        %v777 = vmul.f32 %v772, %v776
        %778 = vrot.lane.b32.xlu0 %v734, 64
        %v779 = vpop.permute.xlu0 %778
        %v782 = vsel %vm766, %v777, 0
        %784 = vmatpush.msra.mxu0 0.0
        %785 = vmatpush.msra.mxu0 0.0
        %786 = vmatpush.msra.mxu0 0.0
        %787 = vmatpush.msra.mxu0 0.0
        %788 = vmatpush.msra.mxu0 0.0
        %789 = vmatpush.msra.mxu0 0.0
        %790 = vmatpush.msra.mxu0 0.0
        %791 = vmatpush.msra.mxu0 0.0
        %792 = vmatpush.msra.mxu0 0.0
        %793 = vmatpush.msra.mxu0 0.0
        %794 = vmatpush.msra.mxu0 0.0
        %795 = vmatpush.msra.mxu0 0.0
        %796 = vmatpush.msra.mxu0 0.0
        %797 = vmatpush.msra.mxu0 0.0
        %798 = vmatpush.msra.mxu0 0.0
        %799 = vmatpush.msra.mxu0 %v779
        %800 = vmatmul.f32.gmra.mxu0 %v782
        %v801 = vpop.f32.mrf.mxu0
        %v802 = vadd.f32 0.0, %v801
        %803 = vdwg.mxu0
        %v804 = vld [vmem:[%s8] sm:$0x3]
        %v805 = vpack.c.bf16 %v802, %v802
        %806 = vrot.lane.b32.xlu0 %v734, 124
        %v807 = vpop.permute.xlu0 %806
        %808 = vrot.lane.b32.xlu0 %v734, 92
        %v809 = vpop.permute.xlu0 %808
        %v810 = vsel %vm740, %v807, 0
        %v812 = vsel %vm740, %v809, 0
        %814 = vmatpush.xpose.msra.mxu0 0.0
        %815 = vmatpush.xpose.msra.mxu0 0.0
        %816 = vmatpush.xpose.msra.mxu0 0.0
        %817 = vmatpush.xpose.msra.mxu0 0.0
        %818 = vmatpush.xpose.msra.mxu0 0.0
        %819 = vmatpush.xpose.msra.mxu0 0.0
        %820 = vmatpush.xpose.msra.mxu0 0.0
        %821 = vmatpush.xpose.msra.mxu0 0.0
        %822 = vmatpush.xpose.msra.mxu0 0.0
        %823 = vmatpush.xpose.msra.mxu0 0.0
        %824 = vmatpush.xpose.msra.mxu0 0.0
        %825 = vmatpush.xpose.msra.mxu0 0.0
        %826 = vmatpush.xpose.msra.mxu0 0.0
        %827 = vmatpush.xpose.msra.mxu0 0.0
        %828 = vmatpush.xpose.msra.mxu0 0.0
        %829 = vmatpush.xpose.msra.mxu0 %v812
        %830 = vmatmul.f32.gmra.mxu0 %v810
        %v831 = vpop.f32.mrf.mxu0
        %v832 = vadd.f32 0.0, %v831
        %833 = vdwg.mxu0
        %v834 = vmul.f32 %v832, 0.5
        %v835 = vsel %vm766, %v834, -inf
        %836 = vmax.xlane.f32.xlu0 %v835
        %v837 = vpop.xlane.xlu0 %836
        %v838 = vsub.f32 %v834, %v837
        %v839 = vmul.f32 %v838, 1.442695
        %v840 = vpow.pop %v839
        %v841 = vsel %vm766, %v840, 0.0
        %842 = vadd.xlane.f32.xlu0 %v841
        %v843 = vpop.xlane.xlu0 %842
        %v844 = vrcp.pop %v843
        %v845 = vmul.f32 %v840, %v844
        %846 = vrot.lane.b32.xlu0 %v734, 60
        %v847 = vpop.permute.xlu0 %846
        %v850 = vsel %vm766, %v845, 0
        %852 = vmatpush.msra.mxu0 0.0
        %853 = vmatpush.msra.mxu0 0.0
        %854 = vmatpush.msra.mxu0 0.0
        %855 = vmatpush.msra.mxu0 0.0
        %856 = vmatpush.msra.mxu0 0.0
        %857 = vmatpush.msra.mxu0 0.0
        %858 = vmatpush.msra.mxu0 0.0
        %859 = vmatpush.msra.mxu0 0.0
        %860 = vmatpush.msra.mxu0 0.0
        %861 = vmatpush.msra.mxu0 0.0
        %862 = vmatpush.msra.mxu0 0.0
        %863 = vmatpush.msra.mxu0 0.0
        %864 = vmatpush.msra.mxu0 0.0
        %865 = vmatpush.msra.mxu0 0.0
        %866 = vmatpush.msra.mxu0 0.0
        %867 = vmatpush.msra.mxu0 %v847
        %868 = vmatmul.f32.gmra.mxu0 %v850
        %v869 = vpop.f32.mrf.mxu0
        %v870 = vadd.f32 0.0, %v869
        %871 = vdwg.mxu0
        %s872 = scalar_lea.vmem %s8, 2
        %v873 = vld [vmem:[%s872] sm:$0x3]
        %v874 = vpack.c.bf16 %v870, %v870
        %v876 = vsel %vm740, %v874, 0
        %vm878 = vcmask 1041408
        %v880 = vsel %vm878, %v873, 0
        %882 = vmatpush.bf16.msra.mxu0 0
        %883 = vmatpush.bf16.msra.mxu0 0
        %884 = vmatpush.bf16.msra.mxu0 0
        %885 = vmatpush.bf16.msra.mxu0 0
        %886 = vmatpush.bf16.msra.mxu0 0
        %887 = vmatpush.bf16.msra.mxu0 0
        %888 = vmatpush.bf16.msra.mxu0 0
        %889 = vmatpush.bf16.msra.mxu0 %v880
        %890 = vmatmul.bf16.gmra.mxu0 %v876
        %v891 = vpop.f32.mrf.mxu0
        %v892 = vadd.f32 0.0, %v891
        %v893 = vpop.f32.mrf.mxu0
        %894 = vdwg.mxu0
        %v896 = vsel %vm740, %v805, 0
        %v899 = vsel %vm878, %v804, 0
        %901 = vmatpush.bf16.msra.mxu0 0
        %902 = vmatpush.bf16.msra.mxu0 0
        %903 = vmatpush.bf16.msra.mxu0 0
        %904 = vmatpush.bf16.msra.mxu0 0
        %905 = vmatpush.bf16.msra.mxu0 0
        %906 = vmatpush.bf16.msra.mxu0 0
        %907 = vmatpush.bf16.msra.mxu0 0
        %908 = vmatpush.bf16.msra.mxu0 %v899
        %909 = vmatmul.bf16.gmra.mxu0 %v896
        %v910 = vpop.f32.mrf.mxu0
        %v911 = vadd.f32 %v892, %v910
        %v912 = vpop.f32.mrf.mxu0
        %913 = vdwg.mxu0
        %914 = vrot.lane.b32.xlu0 %v734, 120
        %v915 = vpop.permute.xlu0 %914
        %916 = vrot.lane.b32.xlu0 %v734, 88
        %v917 = vpop.permute.xlu0 %916
        %v918 = vsel %vm740, %v915, 0
        %v920 = vsel %vm740, %v917, 0
        %922 = vmatpush.xpose.msra.mxu0 0.0
        %923 = vmatpush.xpose.msra.mxu0 0.0
        %924 = vmatpush.xpose.msra.mxu0 0.0
        %925 = vmatpush.xpose.msra.mxu0 0.0
        %926 = vmatpush.xpose.msra.mxu0 0.0
        %927 = vmatpush.xpose.msra.mxu0 0.0
        %928 = vmatpush.xpose.msra.mxu0 0.0
        %929 = vmatpush.xpose.msra.mxu0 0.0
        %930 = vmatpush.xpose.msra.mxu0 0.0
        %931 = vmatpush.xpose.msra.mxu0 0.0
        %932 = vmatpush.xpose.msra.mxu0 0.0
        %933 = vmatpush.xpose.msra.mxu0 0.0
        %934 = vmatpush.xpose.msra.mxu0 0.0
        %935 = vmatpush.xpose.msra.mxu0 0.0
        %936 = vmatpush.xpose.msra.mxu0 0.0
        %937 = vmatpush.xpose.msra.mxu0 %v920
        %938 = vmatmul.f32.gmra.mxu0 %v918
        %v939 = vpop.f32.mrf.mxu0
        %v940 = vadd.f32 0.0, %v939
        %941 = vdwg.mxu0
        %v942 = vmul.f32 %v940, 0.5
        %v943 = vsel %vm766, %v942, -inf
        %944 = vmax.xlane.f32.xlu0 %v943
        %v945 = vpop.xlane.xlu0 %944
        %v946 = vsub.f32 %v942, %v945
        %v947 = vmul.f32 %v946, 1.442695
        %v948 = vpow.pop %v947
        %v949 = vsel %vm766, %v948, 0.0
        %950 = vadd.xlane.f32.xlu0 %v949
        %v951 = vpop.xlane.xlu0 %950
        %v952 = vrcp.pop %v951
        %v953 = vmul.f32 %v948, %v952
        %954 = vrot.lane.b32.xlu0 %v734, 56
        %v955 = vpop.permute.xlu0 %954
        %v958 = vsel %vm766, %v953, 0
        %960 = vmatpush.msra.mxu0 0.0
        %961 = vmatpush.msra.mxu0 0.0
        %962 = vmatpush.msra.mxu0 0.0
        %963 = vmatpush.msra.mxu0 0.0
        %964 = vmatpush.msra.mxu0 0.0
        %965 = vmatpush.msra.mxu0 0.0
        %966 = vmatpush.msra.mxu0 0.0
        %967 = vmatpush.msra.mxu0 0.0
        %968 = vmatpush.msra.mxu0 0.0
        %969 = vmatpush.msra.mxu0 0.0
        %970 = vmatpush.msra.mxu0 0.0
        %971 = vmatpush.msra.mxu0 0.0
        %972 = vmatpush.msra.mxu0 0.0
        %973 = vmatpush.msra.mxu0 0.0
        %974 = vmatpush.msra.mxu0 0.0
        %975 = vmatpush.msra.mxu0 %v955
        %976 = vmatmul.f32.gmra.mxu0 %v958
        %v977 = vpop.f32.mrf.mxu0
        %v978 = vadd.f32 0.0, %v977
        %979 = vdwg.mxu0
        %s980 = scalar_lea.vmem %s8, 4
        %v981 = vld [vmem:[%s980] sm:$0x3]
        %v982 = vpack.c.bf16 %v978, %v978
        %v984 = vsel %vm740, %v982, 0
        %v987 = vsel %vm878, %v981, 0
        %989 = vmatpush.bf16.msra.mxu0 0
        %990 = vmatpush.bf16.msra.mxu0 0
        %991 = vmatpush.bf16.msra.mxu0 0
        %992 = vmatpush.bf16.msra.mxu0 0
        %993 = vmatpush.bf16.msra.mxu0 0
        %994 = vmatpush.bf16.msra.mxu0 0
        %995 = vmatpush.bf16.msra.mxu0 0
        %996 = vmatpush.bf16.msra.mxu0 %v987
        %997 = vmatmul.bf16.gmra.mxu0 %v984
        %v998 = vpop.f32.mrf.mxu0
        %v999 = vadd.f32 0.0, %v998
        %v1000 = vpop.f32.mrf.mxu0
        %1001 = vdwg.mxu0
        %v1002 = vadd.f32 %v911, %v999
        %1003 = vrot.lane.b32.xlu0 %v734, 116
        %v1004 = vpop.permute.xlu0 %1003
        %1005 = vrot.lane.b32.xlu0 %v734, 84
        %v1006 = vpop.permute.xlu0 %1005
        %v1007 = vsel %vm740, %v1004, 0
        %v1009 = vsel %vm740, %v1006, 0
        %1011 = vmatpush.xpose.msra.mxu0 0.0
        %1012 = vmatpush.xpose.msra.mxu0 0.0
        %1013 = vmatpush.xpose.msra.mxu0 0.0
        %1014 = vmatpush.xpose.msra.mxu0 0.0
        %1015 = vmatpush.xpose.msra.mxu0 0.0
        %1016 = vmatpush.xpose.msra.mxu0 0.0
        %1017 = vmatpush.xpose.msra.mxu0 0.0
        %1018 = vmatpush.xpose.msra.mxu0 0.0
        %1019 = vmatpush.xpose.msra.mxu0 0.0
        %1020 = vmatpush.xpose.msra.mxu0 0.0
        %1021 = vmatpush.xpose.msra.mxu0 0.0
        %1022 = vmatpush.xpose.msra.mxu0 0.0
        %1023 = vmatpush.xpose.msra.mxu0 0.0
        %1024 = vmatpush.xpose.msra.mxu0 0.0
        %1025 = vmatpush.xpose.msra.mxu0 0.0
        %1026 = vmatpush.xpose.msra.mxu0 %v1009
        %1027 = vmatmul.f32.gmra.mxu0 %v1007
        %v1028 = vpop.f32.mrf.mxu0
        %v1029 = vadd.f32 0.0, %v1028
        %1030 = vdwg.mxu0
        %v1031 = vmul.f32 %v1029, 0.5
        %v1032 = vsel %vm766, %v1031, -inf
        %1033 = vmax.xlane.f32.xlu0 %v1032
        %v1034 = vpop.xlane.xlu0 %1033
        %v1035 = vsub.f32 %v1031, %v1034
        %v1036 = vmul.f32 %v1035, 1.442695
        %v1037 = vpow.pop %v1036
        %v1038 = vsel %vm766, %v1037, 0.0
        %1039 = vadd.xlane.f32.xlu0 %v1038
        %v1040 = vpop.xlane.xlu0 %1039
        %v1041 = vrcp.pop %v1040
        %v1042 = vmul.f32 %v1037, %v1041
        %1043 = vrot.lane.b32.xlu0 %v734, 52
        %v1044 = vpop.permute.xlu0 %1043
        %v1047 = vsel %vm766, %v1042, 0
        %1049 = vmatpush.msra.mxu0 0.0
        %1050 = vmatpush.msra.mxu0 0.0
        %1051 = vmatpush.msra.mxu0 0.0
        %1052 = vmatpush.msra.mxu0 0.0
        %1053 = vmatpush.msra.mxu0 0.0
        %1054 = vmatpush.msra.mxu0 0.0
        %1055 = vmatpush.msra.mxu0 0.0
        %1056 = vmatpush.msra.mxu0 0.0
        %1057 = vmatpush.msra.mxu0 0.0
        %1058 = vmatpush.msra.mxu0 0.0
        %1059 = vmatpush.msra.mxu0 0.0
        %1060 = vmatpush.msra.mxu0 0.0
        %1061 = vmatpush.msra.mxu0 0.0
        %1062 = vmatpush.msra.mxu0 0.0
        %1063 = vmatpush.msra.mxu0 0.0
        %1064 = vmatpush.msra.mxu0 %v1044
        %1065 = vmatmul.f32.gmra.mxu0 %v1047
        %v1066 = vpop.f32.mrf.mxu0
        %v1067 = vadd.f32 0.0, %v1066
        %1068 = vdwg.mxu0
        %s1069 = scalar_lea.vmem %s8, 6
        %v1070 = vld [vmem:[%s1069] sm:$0x3]
        %v1071 = vpack.c.bf16 %v1067, %v1067
        %v1073 = vsel %vm740, %v1071, 0
        %v1076 = vsel %vm878, %v1070, 0
        %1078 = vmatpush.bf16.msra.mxu0 0
        %1079 = vmatpush.bf16.msra.mxu0 0
        %1080 = vmatpush.bf16.msra.mxu0 0
        %1081 = vmatpush.bf16.msra.mxu0 0
        %1082 = vmatpush.bf16.msra.mxu0 0
        %1083 = vmatpush.bf16.msra.mxu0 0
        %1084 = vmatpush.bf16.msra.mxu0 0
        %1085 = vmatpush.bf16.msra.mxu0 %v1076
        %1086 = vmatmul.bf16.gmra.mxu0 %v1073
        %v1087 = vpop.f32.mrf.mxu0
        %v1088 = vadd.f32 0.0, %v1087
        %v1089 = vpop.f32.mrf.mxu0
        %1090 = vdwg.mxu0
        %v1091 = vadd.f32 %v1002, %v1088
        %1092 = vrot.lane.b32.xlu0 %v734, 112
        %v1093 = vpop.permute.xlu0 %1092
        %1094 = vrot.lane.b32.xlu0 %v734, 80
        %v1095 = vpop.permute.xlu0 %1094
        %v1096 = vsel %vm740, %v1093, 0
        %v1098 = vsel %vm740, %v1095, 0
        %1100 = vmatpush.xpose.msra.mxu0 0.0
        %1101 = vmatpush.xpose.msra.mxu0 0.0
        %1102 = vmatpush.xpose.msra.mxu0 0.0
        %1103 = vmatpush.xpose.msra.mxu0 0.0
        %1104 = vmatpush.xpose.msra.mxu0 0.0
        %1105 = vmatpush.xpose.msra.mxu0 0.0
        %1106 = vmatpush.xpose.msra.mxu0 0.0
        %1107 = vmatpush.xpose.msra.mxu0 0.0
        %1108 = vmatpush.xpose.msra.mxu0 0.0
        %1109 = vmatpush.xpose.msra.mxu0 0.0
        %1110 = vmatpush.xpose.msra.mxu0 0.0
        %1111 = vmatpush.xpose.msra.mxu0 0.0
        %1112 = vmatpush.xpose.msra.mxu0 0.0
        %1113 = vmatpush.xpose.msra.mxu0 0.0
        %1114 = vmatpush.xpose.msra.mxu0 0.0
        %1115 = vmatpush.xpose.msra.mxu0 %v1098
        %1116 = vmatmul.f32.gmra.mxu0 %v1096
        %v1117 = vpop.f32.mrf.mxu0
        %v1118 = vadd.f32 0.0, %v1117
        %1119 = vdwg.mxu0
        %v1120 = vmul.f32 %v1118, 0.5
        %v1121 = vsel %vm766, %v1120, -inf
        %1122 = vmax.xlane.f32.xlu0 %v1121
        %v1123 = vpop.xlane.xlu0 %1122
        %v1124 = vsub.f32 %v1120, %v1123
        %v1125 = vmul.f32 %v1124, 1.442695
        %v1126 = vpow.pop %v1125
        %v1127 = vsel %vm766, %v1126, 0.0
        %1128 = vadd.xlane.f32.xlu0 %v1127
        %v1129 = vpop.xlane.xlu0 %1128
        %v1130 = vrcp.pop %v1129
        %v1131 = vmul.f32 %v1126, %v1130
        %1132 = vrot.lane.b32.xlu0 %v734, 48
        %v1133 = vpop.permute.xlu0 %1132
        %v1136 = vsel %vm766, %v1131, 0
        %1138 = vmatpush.msra.mxu0 0.0
        %1139 = vmatpush.msra.mxu0 0.0
        %1140 = vmatpush.msra.mxu0 0.0
        %1141 = vmatpush.msra.mxu0 0.0
        %1142 = vmatpush.msra.mxu0 0.0
        %1143 = vmatpush.msra.mxu0 0.0
        %1144 = vmatpush.msra.mxu0 0.0
        %1145 = vmatpush.msra.mxu0 0.0
        %1146 = vmatpush.msra.mxu0 0.0
        %1147 = vmatpush.msra.mxu0 0.0
        %1148 = vmatpush.msra.mxu0 0.0
        %1149 = vmatpush.msra.mxu0 0.0
        %1150 = vmatpush.msra.mxu0 0.0
        %1151 = vmatpush.msra.mxu0 0.0
        %1152 = vmatpush.msra.mxu0 0.0
        %1153 = vmatpush.msra.mxu0 %v1133
        %1154 = vmatmul.f32.gmra.mxu0 %v1136
        %v1155 = vpop.f32.mrf.mxu0
        %v1156 = vadd.f32 0.0, %v1155
        %1157 = vdwg.mxu0
        %s1158 = scalar_lea.vmem %s8, 8
        %v1159 = vld [vmem:[%s1158] sm:$0x3]
        %v1160 = vpack.c.bf16 %v1156, %v1156
        %v1162 = vsel %vm740, %v1160, 0
        %v1165 = vsel %vm878, %v1159, 0
        %1167 = vmatpush.bf16.msra.mxu0 0
        %1168 = vmatpush.bf16.msra.mxu0 0
        %1169 = vmatpush.bf16.msra.mxu0 0
        %1170 = vmatpush.bf16.msra.mxu0 0
        %1171 = vmatpush.bf16.msra.mxu0 0
        %1172 = vmatpush.bf16.msra.mxu0 0
        %1173 = vmatpush.bf16.msra.mxu0 0
        %1174 = vmatpush.bf16.msra.mxu0 %v1165
        %1175 = vmatmul.bf16.gmra.mxu0 %v1162
        %v1176 = vpop.f32.mrf.mxu0
        %v1177 = vadd.f32 0.0, %v1176
        %v1178 = vpop.f32.mrf.mxu0
        %1179 = vdwg.mxu0
        %v1180 = vadd.f32 %v1091, %v1177
        %1181 = vrot.lane.b32.xlu0 %v734, 108
        %v1182 = vpop.permute.xlu0 %1181
        %1183 = vrot.lane.b32.xlu0 %v734, 76
        %v1184 = vpop.permute.xlu0 %1183
        %v1185 = vsel %vm740, %v1182, 0
        %v1187 = vsel %vm740, %v1184, 0
        %1189 = vmatpush.xpose.msra.mxu0 0.0
        %1190 = vmatpush.xpose.msra.mxu0 0.0
        %1191 = vmatpush.xpose.msra.mxu0 0.0
        %1192 = vmatpush.xpose.msra.mxu0 0.0
        %1193 = vmatpush.xpose.msra.mxu0 0.0
        %1194 = vmatpush.xpose.msra.mxu0 0.0
        %1195 = vmatpush.xpose.msra.mxu0 0.0
        %1196 = vmatpush.xpose.msra.mxu0 0.0
        %1197 = vmatpush.xpose.msra.mxu0 0.0
        %1198 = vmatpush.xpose.msra.mxu0 0.0
        %1199 = vmatpush.xpose.msra.mxu0 0.0
        %1200 = vmatpush.xpose.msra.mxu0 0.0
        %1201 = vmatpush.xpose.msra.mxu0 0.0
        %1202 = vmatpush.xpose.msra.mxu0 0.0
        %1203 = vmatpush.xpose.msra.mxu0 0.0
        %1204 = vmatpush.xpose.msra.mxu0 %v1187
        %1205 = vmatmul.f32.gmra.mxu0 %v1185
        %v1206 = vpop.f32.mrf.mxu0
        %v1207 = vadd.f32 0.0, %v1206
        %1208 = vdwg.mxu0
        %v1209 = vmul.f32 %v1207, 0.5
        %v1210 = vsel %vm766, %v1209, -inf
        %1211 = vmax.xlane.f32.xlu0 %v1210
        %v1212 = vpop.xlane.xlu0 %1211
        %v1213 = vsub.f32 %v1209, %v1212
        %v1214 = vmul.f32 %v1213, 1.442695
        %v1215 = vpow.pop %v1214
        %v1216 = vsel %vm766, %v1215, 0.0
        %1217 = vadd.xlane.f32.xlu0 %v1216
        %v1218 = vpop.xlane.xlu0 %1217
        %v1219 = vrcp.pop %v1218
        %v1220 = vmul.f32 %v1215, %v1219
        %1221 = vrot.lane.b32.xlu0 %v734, 44
        %v1222 = vpop.permute.xlu0 %1221
        %v1225 = vsel %vm766, %v1220, 0
        %1227 = vmatpush.msra.mxu0 0.0
        %1228 = vmatpush.msra.mxu0 0.0
        %1229 = vmatpush.msra.mxu0 0.0
        %1230 = vmatpush.msra.mxu0 0.0
        %1231 = vmatpush.msra.mxu0 0.0
        %1232 = vmatpush.msra.mxu0 0.0
        %1233 = vmatpush.msra.mxu0 0.0
        %1234 = vmatpush.msra.mxu0 0.0
        %1235 = vmatpush.msra.mxu0 0.0
        %1236 = vmatpush.msra.mxu0 0.0
        %1237 = vmatpush.msra.mxu0 0.0
        %1238 = vmatpush.msra.mxu0 0.0
        %1239 = vmatpush.msra.mxu0 0.0
        %1240 = vmatpush.msra.mxu0 0.0
        %1241 = vmatpush.msra.mxu0 0.0
        %1242 = vmatpush.msra.mxu0 %v1222
        %1243 = vmatmul.f32.gmra.mxu0 %v1225
        %v1244 = vpop.f32.mrf.mxu0
        %v1245 = vadd.f32 0.0, %v1244
        %1246 = vdwg.mxu0
        %s1247 = scalar_lea.vmem %s8, 10
        %v1248 = vld [vmem:[%s1247] sm:$0x3]
        %v1249 = vpack.c.bf16 %v1245, %v1245
        %v1251 = vsel %vm740, %v1249, 0
        %v1254 = vsel %vm878, %v1248, 0
        %1256 = vmatpush.bf16.msra.mxu0 0
        %1257 = vmatpush.bf16.msra.mxu0 0
        %1258 = vmatpush.bf16.msra.mxu0 0
        %1259 = vmatpush.bf16.msra.mxu0 0
        %1260 = vmatpush.bf16.msra.mxu0 0
        %1261 = vmatpush.bf16.msra.mxu0 0
        %1262 = vmatpush.bf16.msra.mxu0 0
        %1263 = vmatpush.bf16.msra.mxu0 %v1254
        %1264 = vmatmul.bf16.gmra.mxu0 %v1251
        %v1265 = vpop.f32.mrf.mxu0
        %v1266 = vadd.f32 0.0, %v1265
        %v1267 = vpop.f32.mrf.mxu0
        %1268 = vdwg.mxu0
        %v1269 = vadd.f32 %v1180, %v1266
        %1270 = vrot.lane.b32.xlu0 %v734, 104
        %v1271 = vpop.permute.xlu0 %1270
        %1272 = vrot.lane.b32.xlu0 %v734, 72
        %v1273 = vpop.permute.xlu0 %1272
        %v1274 = vsel %vm740, %v1271, 0
        %v1276 = vsel %vm740, %v1273, 0
        %1278 = vmatpush.xpose.msra.mxu0 0.0
        %1279 = vmatpush.xpose.msra.mxu0 0.0
        %1280 = vmatpush.xpose.msra.mxu0 0.0
        %1281 = vmatpush.xpose.msra.mxu0 0.0
        %1282 = vmatpush.xpose.msra.mxu0 0.0
        %1283 = vmatpush.xpose.msra.mxu0 0.0
        %1284 = vmatpush.xpose.msra.mxu0 0.0
        %1285 = vmatpush.xpose.msra.mxu0 0.0
        %1286 = vmatpush.xpose.msra.mxu0 0.0
        %1287 = vmatpush.xpose.msra.mxu0 0.0
        %1288 = vmatpush.xpose.msra.mxu0 0.0
        %1289 = vmatpush.xpose.msra.mxu0 0.0
        %1290 = vmatpush.xpose.msra.mxu0 0.0
        %1291 = vmatpush.xpose.msra.mxu0 0.0
        %1292 = vmatpush.xpose.msra.mxu0 0.0
        %1293 = vmatpush.xpose.msra.mxu0 %v1276
        %1294 = vmatmul.f32.gmra.mxu0 %v1274
        %v1295 = vpop.f32.mrf.mxu0
        %v1296 = vadd.f32 0.0, %v1295
        %1297 = vdwg.mxu0
        %v1298 = vmul.f32 %v1296, 0.5
        %v1299 = vsel %vm766, %v1298, -inf
        %1300 = vmax.xlane.f32.xlu0 %v1299
        %v1301 = vpop.xlane.xlu0 %1300
        %v1302 = vsub.f32 %v1298, %v1301
        %v1303 = vmul.f32 %v1302, 1.442695
        %v1304 = vpow.pop %v1303
        %v1305 = vsel %vm766, %v1304, 0.0
        %1306 = vadd.xlane.f32.xlu0 %v1305
        %v1307 = vpop.xlane.xlu0 %1306
        %v1308 = vrcp.pop %v1307
        %v1309 = vmul.f32 %v1304, %v1308
        %1310 = vrot.lane.b32.xlu0 %v734, 40
        %v1311 = vpop.permute.xlu0 %1310
        %v1314 = vsel %vm766, %v1309, 0
        %1316 = vmatpush.msra.mxu0 0.0
        %1317 = vmatpush.msra.mxu0 0.0
        %1318 = vmatpush.msra.mxu0 0.0
        %1319 = vmatpush.msra.mxu0 0.0
        %1320 = vmatpush.msra.mxu0 0.0
        %1321 = vmatpush.msra.mxu0 0.0
        %1322 = vmatpush.msra.mxu0 0.0
        %1323 = vmatpush.msra.mxu0 0.0
        %1324 = vmatpush.msra.mxu0 0.0
        %1325 = vmatpush.msra.mxu0 0.0
        %1326 = vmatpush.msra.mxu0 0.0
        %1327 = vmatpush.msra.mxu0 0.0
        %1328 = vmatpush.msra.mxu0 0.0
        %1329 = vmatpush.msra.mxu0 0.0
        %1330 = vmatpush.msra.mxu0 0.0
        %1331 = vmatpush.msra.mxu0 %v1311
        %1332 = vmatmul.f32.gmra.mxu0 %v1314
        %v1333 = vpop.f32.mrf.mxu0
        %v1334 = vadd.f32 0.0, %v1333
        %1335 = vdwg.mxu0
        %s1336 = scalar_lea.vmem %s8, 12
        %v1337 = vld [vmem:[%s1336] sm:$0x3]
        %v1338 = vpack.c.bf16 %v1334, %v1334
        %v1340 = vsel %vm740, %v1338, 0
        %v1343 = vsel %vm878, %v1337, 0
        %1345 = vmatpush.bf16.msra.mxu0 0
        %1346 = vmatpush.bf16.msra.mxu0 0
        %1347 = vmatpush.bf16.msra.mxu0 0
        %1348 = vmatpush.bf16.msra.mxu0 0
        %1349 = vmatpush.bf16.msra.mxu0 0
        %1350 = vmatpush.bf16.msra.mxu0 0
        %1351 = vmatpush.bf16.msra.mxu0 0
        %1352 = vmatpush.bf16.msra.mxu0 %v1343
        %1353 = vmatmul.bf16.gmra.mxu0 %v1340
        %v1354 = vpop.f32.mrf.mxu0
        %v1355 = vadd.f32 0.0, %v1354
        %v1356 = vpop.f32.mrf.mxu0
        %1357 = vdwg.mxu0
        %v1358 = vadd.f32 %v1269, %v1355
        %1359 = vrot.lane.b32.xlu0 %v734, 100
        %v1360 = vpop.permute.xlu0 %1359
        %1361 = vrot.lane.b32.xlu0 %v734, 68
        %v1362 = vpop.permute.xlu0 %1361
        %v1363 = vsel %vm740, %v1360, 0
        %v1365 = vsel %vm740, %v1362, 0
        %1367 = vmatpush.xpose.msra.mxu0 0.0
        %1368 = vmatpush.xpose.msra.mxu0 0.0
        %1369 = vmatpush.xpose.msra.mxu0 0.0
        %1370 = vmatpush.xpose.msra.mxu0 0.0
        %1371 = vmatpush.xpose.msra.mxu0 0.0
        %1372 = vmatpush.xpose.msra.mxu0 0.0
        %1373 = vmatpush.xpose.msra.mxu0 0.0
        %1374 = vmatpush.xpose.msra.mxu0 0.0
        %1375 = vmatpush.xpose.msra.mxu0 0.0
        %1376 = vmatpush.xpose.msra.mxu0 0.0
        %1377 = vmatpush.xpose.msra.mxu0 0.0
        %1378 = vmatpush.xpose.msra.mxu0 0.0
        %1379 = vmatpush.xpose.msra.mxu0 0.0
        %1380 = vmatpush.xpose.msra.mxu0 0.0
        %1381 = vmatpush.xpose.msra.mxu0 0.0
        %1382 = vmatpush.xpose.msra.mxu0 %v1365
        %1383 = vmatmul.f32.gmra.mxu0 %v1363
        %v1384 = vpop.f32.mrf.mxu0
        %v1385 = vadd.f32 0.0, %v1384
        %1386 = vdwg.mxu0
        %v1387 = vmul.f32 %v1385, 0.5
        %v1388 = vsel %vm766, %v1387, -inf
        %1389 = vmax.xlane.f32.xlu0 %v1388
        %v1390 = vpop.xlane.xlu0 %1389
        %v1391 = vsub.f32 %v1387, %v1390
        %v1392 = vmul.f32 %v1391, 1.442695
        %v1393 = vpow.pop %v1392
        %v1394 = vsel %vm766, %v1393, 0.0
        %1395 = vadd.xlane.f32.xlu0 %v1394
        %v1396 = vpop.xlane.xlu0 %1395
        %v1397 = vrcp.pop %v1396
        %v1398 = vmul.f32 %v1393, %v1397
        %1399 = vrot.lane.b32.xlu0 %v734, 36
        %v1400 = vpop.permute.xlu0 %1399
        %v1403 = vsel %vm766, %v1398, 0
        %1405 = vmatpush.msra.mxu0 0.0
        %1406 = vmatpush.msra.mxu0 0.0
        %1407 = vmatpush.msra.mxu0 0.0
        %1408 = vmatpush.msra.mxu0 0.0
        %1409 = vmatpush.msra.mxu0 0.0
        %1410 = vmatpush.msra.mxu0 0.0
        %1411 = vmatpush.msra.mxu0 0.0
        %1412 = vmatpush.msra.mxu0 0.0
        %1413 = vmatpush.msra.mxu0 0.0
        %1414 = vmatpush.msra.mxu0 0.0
        %1415 = vmatpush.msra.mxu0 0.0
        %1416 = vmatpush.msra.mxu0 0.0
        %1417 = vmatpush.msra.mxu0 0.0
        %1418 = vmatpush.msra.mxu0 0.0
        %1419 = vmatpush.msra.mxu0 0.0
        %1420 = vmatpush.msra.mxu0 %v1400
        %1421 = vmatmul.f32.gmra.mxu0 %v1403
        %v1422 = vpop.f32.mrf.mxu0
        %v1423 = vadd.f32 0.0, %v1422
        %1424 = vdwg.mxu0
        %s1425 = scalar_lea.vmem %s8, 14
        %v1426 = vld [vmem:[%s1425] sm:$0x3]
        %v1427 = vpack.c.bf16 %v1423, %v1423
        %v1429 = vsel %vm740, %v1427, 0
        %v1432 = vsel %vm878, %v1426, 0
        %1434 = vmatpush.bf16.msra.mxu0 0
        %1435 = vmatpush.bf16.msra.mxu0 0
        %1436 = vmatpush.bf16.msra.mxu0 0
        %1437 = vmatpush.bf16.msra.mxu0 0
        %1438 = vmatpush.bf16.msra.mxu0 0
        %1439 = vmatpush.bf16.msra.mxu0 0
        %1440 = vmatpush.bf16.msra.mxu0 0
        %1441 = vmatpush.bf16.msra.mxu0 %v1432
        %1442 = vmatmul.bf16.gmra.mxu0 %v1429
        %v1443 = vpop.f32.mrf.mxu0
        %v1444 = vadd.f32 0.0, %v1443
        %v1445 = vpop.f32.mrf.mxu0
        %1446 = vdwg.mxu0
        %v1447 = vadd.f32 %v1358, %v1444
        %v1448 = vadd.f32 %v659, %v1447
        %v1449 = vld [vmem:[%s9] sm:$0x1]
        %v1451 = vperm.slane %v1449, 0
        %v1453 = vadd.f32 %v1448, %v1451
        %v1454 = vld [vmem:[%s10] sm:$0x1]
        %v1455 = vld [vmem:[%s11] sm:$0x1]
        %v1456 = vsel %vm662, %v1453, 0.0
        %1457 = vadd.xlane.f32.xlu0 %v1456
        %v1458 = vpop.xlane.xlu0 %1457
        %v1459 = vmul.f32 %v1458, %v672
        %v1460 = vsub.f32 %v1453, %v1459
        %v1461 = vmul.f32 %v1460, %v1460
        %v1462 = vsel %vm662, %v1461, 0.0
        %1463 = vadd.xlane.f32.xlu0 %v1462
        %v1464 = vpop.xlane.xlu0 %1463
        %v1465 = vmul.f32 %v1464, %v672
        %v1466 = vadd.f32 %v1465, 1e-05
        %v1467 = vrsqrt.pop %v1466
        %v1468 = vmul.f32 %v1467, %v1466
        %v1469 = vmul.f32 %v1468, %v1467
        %v1470 = vmul.f32 0.5, %v1469
        %v1471 = vsub.f32 1.5, %v1470
        %v1472 = vmul.f32 %v1467, %v1471
        %vm1473 = vweird.f32 %v1466
        %vm1474 = vweird.f32 %v1467
        %vm1475 = vmor %vm1473, %vm1474
        %v1476 = vsel %vm1475, %v1467, %v1472
        %v1477 = vmul.f32 %v1460, %v1476
        %v1479 = vperm.slane %v1454, 0
        %v1481 = vmul.f32 %v1477, %v1479
        %v1483 = vperm.slane %v1455, 0
        %v1485 = vadd.f32 %v1481, %v1483
        %v1486 = vld [vmem:[%s12] sm:$0xf]
        %v1487 = vld [vmem:[%s12 + $0x4] sm:$0xf]
        %v1488 = vld [vmem:[%s12 + $0x8] sm:$0xf]
        %v1489 = vld [vmem:[%s12 + $0xc] sm:$0xf]
        %v1490 = vpack.c.bf16 %v1485, %v1485
        %v1491 = vld [vmem:[%s13] sm:$0x1]
        %v1493 = vperm.slane %v1491, 0
        %v1499 = vunpack.c.l.b16 %v1486
        %v1500 = vunpack.c.l.b16 %v1487
        %v1501 = vunpack.c.l.b16 %v1488
        %v1502 = vunpack.c.l.b16 %v1489
        %v1503 = vpack.c.b16 %v1500, %v1499
        %v1504 = vpack.c.b16 %v1502, %v1501
        %v1508 = vsel %vm662, %v1490, 0
        %1510 = vmatpush.bf16.msra.mxu0 0
        %1511 = vmatpush.bf16.msra.mxu0 0
        %1512 = vmatpush.bf16.msra.mxu0 0
        %1513 = vmatpush.bf16.msra.mxu0 0
        %1514 = vmatpush.bf16.msra.mxu0 0
        %1515 = vmatpush.bf16.msra.mxu0 0
        %1516 = vmatpush.bf16.msra.mxu0 %v1504
        %1517 = vmatpush.bf16.msra.mxu0 %v1503
        %1518 = vmatmul.bf16.gmra.mxu0 %v1508
        %v1519 = vpop.f32.mrf.mxu0
        %v1520 = vadd.f32 %v1493, %v1519
        %v1521 = vpop.f32.mrf.mxu0
        %1522 = vdwg.mxu0
        %v1523 = vmax.f32 %v1520, 0.0
        %v1524 = vld [vmem:[%s14] sm:$0xf]
        %v1525 = vld [vmem:[%s14 + $0x4] sm:$0xf]
        %v1526 = vld [vmem:[%s14 + $0x8] sm:$0xf]
        %v1527 = vld [vmem:[%s14 + $0xc] sm:$0xf]
        %v1528 = vld [vmem:[%s14 + $0x10] sm:$0xf]
        %v1529 = vld [vmem:[%s14 + $0x14] sm:$0xf]
        %v1530 = vld [vmem:[%s14 + $0x18] sm:$0xf]
        %v1531 = vld [vmem:[%s14 + $0x1c] sm:$0xf]
        %v1532 = vld [vmem:[%s14 + $0x20] sm:$0xf]
        %v1533 = vld [vmem:[%s14 + $0x24] sm:$0xf]
        %v1534 = vld [vmem:[%s14 + $0x28] sm:$0xf]
        %v1535 = vld [vmem:[%s14 + $0x2c] sm:$0xf]
        %v1536 = vld [vmem:[%s14 + $0x30] sm:$0xf]
        %v1537 = vld [vmem:[%s14 + $0x34] sm:$0xf]
        %v1538 = vld [vmem:[%s14 + $0x38] sm:$0xf]
        %v1539 = vld [vmem:[%s14 + $0x3c] sm:$0xf]
        %v1540 = vpack.c.bf16 %v1523, %v1523
        %v1557 = vunpack.c.l.b16 %v1524
        %v1558 = vunpack.c.l.b16 %v1525
        %v1559 = vunpack.c.l.b16 %v1526
        %v1560 = vunpack.c.l.b16 %v1527
        %v1561 = vunpack.c.l.b16 %v1528
        %v1562 = vunpack.c.l.b16 %v1529
        %v1563 = vunpack.c.l.b16 %v1530
        %v1564 = vunpack.c.l.b16 %v1531
        %v1565 = vunpack.c.l.b16 %v1532
        %v1566 = vunpack.c.l.b16 %v1533
        %v1567 = vunpack.c.l.b16 %v1534
        %v1568 = vunpack.c.l.b16 %v1535
        %v1569 = vunpack.c.l.b16 %v1536
        %v1570 = vunpack.c.l.b16 %v1537
        %v1571 = vunpack.c.l.b16 %v1538
        %v1572 = vunpack.c.l.b16 %v1539
        %v1573 = vpack.c.b16 %v1558, %v1557
        %v1574 = vpack.c.b16 %v1560, %v1559
        %v1575 = vpack.c.b16 %v1562, %v1561
        %v1576 = vpack.c.b16 %v1564, %v1563
        %v1577 = vpack.c.b16 %v1566, %v1565
        %v1578 = vpack.c.b16 %v1568, %v1567
        %v1579 = vpack.c.b16 %v1570, %v1569
        %v1580 = vpack.c.b16 %v1572, %v1571
        %1589 = vmatpush.bf16.msra.mxu0 %v1580
        %1590 = vmatpush.bf16.msra.mxu0 %v1579
        %1591 = vmatpush.bf16.msra.mxu0 %v1578
        %1592 = vmatpush.bf16.msra.mxu0 %v1577
        %1593 = vmatpush.bf16.msra.mxu0 %v1576
        %1594 = vmatpush.bf16.msra.mxu0 %v1575
        %1595 = vmatpush.bf16.msra.mxu0 %v1574
        %1596 = vmatpush.bf16.msra.mxu0 %v1573
        %1597 = vmatmul.bf16.gmra.mxu0 %v1540
        %v1598 = vpop.f32.mrf.mxu0
        %v1599 = vadd.f32 0.0, %v1598
        %v1600 = vpop.f32.mrf.mxu0
        %1601 = vdwg.mxu0
        %v1602 = vadd.f32 %v1453, %v1599
        %v1603 = vld [vmem:[%s15] sm:$0x1]
        %v1605 = vperm.slane %v1603, 0
        %v1607 = vadd.f32 %v1602, %v1605
        %s1608 = scalar_lea.vmem %s4, 1
        %v1609 = vld [vmem:[%s1608] sm:$0x1]
        %s1610 = scalar_lea.vmem %s5, 1
        %v1611 = vld [vmem:[%s1610] sm:$0x1]
        %v1612 = vsel %vm662, %v1607, 0.0
        %1613 = vadd.xlane.f32.xlu0 %v1612
        %v1614 = vpop.xlane.xlu0 %1613
        %v1615 = vmul.f32 %v1614, %v672
        %v1616 = vsub.f32 %v1607, %v1615
        %v1617 = vmul.f32 %v1616, %v1616
        %v1618 = vsel %vm662, %v1617, 0.0
        %1619 = vadd.xlane.f32.xlu0 %v1618
        %v1620 = vpop.xlane.xlu0 %1619
        %v1621 = vmul.f32 %v1620, %v672
        %v1622 = vadd.f32 %v1621, 1e-05
        %v1623 = vrsqrt.pop %v1622
        %v1624 = vmul.f32 %v1623, %v1622
        %v1625 = vmul.f32 %v1624, %v1623
        %v1626 = vmul.f32 0.5, %v1625
        %v1627 = vsub.f32 1.5, %v1626
        %v1628 = vmul.f32 %v1623, %v1627
        %vm1629 = vweird.f32 %v1622
        %vm1630 = vweird.f32 %v1623
        %vm1631 = vmor %vm1629, %vm1630
        %v1632 = vsel %vm1631, %v1623, %v1628
        %v1633 = vmul.f32 %v1616, %v1632
        %v1635 = vperm.slane %v1609, 0
        %v1637 = vmul.f32 %v1633, %v1635
        %v1639 = vperm.slane %v1611, 0
        %v1641 = vadd.f32 %v1637, %v1639
        %s1642 = scalar_lea.vmem %s6, 16
        %v1643 = vld [vmem:[%s1642] sm:$0xf]
        %v1644 = vld [vmem:[%s1642 + $0x4] sm:$0xf]
        %v1645 = vld [vmem:[%s1642 + $0x8] sm:$0xf]
        %v1646 = vld [vmem:[%s1642 + $0xc] sm:$0xf]
        %v1647 = vpack.c.bf16 %v1641, %v1641
        %s1648 = scalar_lea.vmem %s7, 1
        %v1649 = vld [vmem:[%s1648] sm:$0x1]
        %v1651 = vperm.slane %v1649, 0
        %v1657 = vunpack.c.l.b16 %v1643
        %v1658 = vunpack.c.l.b16 %v1644
        %v1659 = vunpack.c.l.b16 %v1645
        %v1660 = vunpack.c.l.b16 %v1646
        %v1661 = vpack.c.b16 %v1658, %v1657
        %v1662 = vpack.c.b16 %v1660, %v1659
        %v1666 = vsel %vm662, %v1647, 0
        %1668 = vmatpush.bf16.msra.mxu0 0
        %1669 = vmatpush.bf16.msra.mxu0 0
        %1670 = vmatpush.bf16.msra.mxu0 0
        %1671 = vmatpush.bf16.msra.mxu0 0
        %1672 = vmatpush.bf16.msra.mxu0 0
        %1673 = vmatpush.bf16.msra.mxu0 0
        %1674 = vmatpush.bf16.msra.mxu0 %v1662
        %1675 = vmatpush.bf16.msra.mxu0 %v1661
        %1676 = vmatmul.bf16.gmra.mxu0 %v1666
        %v1677 = vpop.f32.mrf.mxu0
        %v1678 = vadd.f32 %v1651, %v1677
        %v1679 = vpop.f32.mrf.mxu0
        %1680 = vdwg.mxu0
        %1682 = vrot.lane.b32.xlu0 %v1678, 96
        %v1683 = vpop.permute.xlu0 %1682
        %v1684 = vsel %vm740, %v1678, 0
        %v1686 = vsel %vm740, %v1683, 0
        %1688 = vmatpush.xpose.msra.mxu0 0.0
        %1689 = vmatpush.xpose.msra.mxu0 0.0
        %1690 = vmatpush.xpose.msra.mxu0 0.0
        %1691 = vmatpush.xpose.msra.mxu0 0.0
        %1692 = vmatpush.xpose.msra.mxu0 0.0
        %1693 = vmatpush.xpose.msra.mxu0 0.0
        %1694 = vmatpush.xpose.msra.mxu0 0.0
        %1695 = vmatpush.xpose.msra.mxu0 0.0
        %1696 = vmatpush.xpose.msra.mxu0 0.0
        %1697 = vmatpush.xpose.msra.mxu0 0.0
        %1698 = vmatpush.xpose.msra.mxu0 0.0
        %1699 = vmatpush.xpose.msra.mxu0 0.0
        %1700 = vmatpush.xpose.msra.mxu0 0.0
        %1701 = vmatpush.xpose.msra.mxu0 0.0
        %1702 = vmatpush.xpose.msra.mxu0 0.0
        %1703 = vmatpush.xpose.msra.mxu0 %v1686
        %1704 = vmatmul.f32.gmra.mxu0 %v1684
        %v1705 = vpop.f32.mrf.mxu0
        %v1706 = vadd.f32 0.0, %v1705
        %1707 = vdwg.mxu0
        %v1708 = vmul.f32 %v1706, 0.5
        %v1709 = vsel %vm766, %v1708, -inf
        %1710 = vmax.xlane.f32.xlu0 %v1709
        %v1711 = vpop.xlane.xlu0 %1710
        %v1712 = vsub.f32 %v1708, %v1711
        %v1713 = vmul.f32 %v1712, 1.442695
        %v1714 = vpow.pop %v1713
        %v1715 = vsel %vm766, %v1714, 0.0
        %1716 = vadd.xlane.f32.xlu0 %v1715
        %v1717 = vpop.xlane.xlu0 %1716
        %v1718 = vrcp.pop %v1717
        %v1719 = vmul.f32 %v1714, %v1718
        %1720 = vrot.lane.b32.xlu0 %v1678, 64
        %v1721 = vpop.permute.xlu0 %1720
        %v1724 = vsel %vm766, %v1719, 0
        %1726 = vmatpush.msra.mxu0 0.0
        %1727 = vmatpush.msra.mxu0 0.0
        %1728 = vmatpush.msra.mxu0 0.0
        %1729 = vmatpush.msra.mxu0 0.0
        %1730 = vmatpush.msra.mxu0 0.0
        %1731 = vmatpush.msra.mxu0 0.0
        %1732 = vmatpush.msra.mxu0 0.0
        %1733 = vmatpush.msra.mxu0 0.0
        %1734 = vmatpush.msra.mxu0 0.0
        %1735 = vmatpush.msra.mxu0 0.0
        %1736 = vmatpush.msra.mxu0 0.0
        %1737 = vmatpush.msra.mxu0 0.0
        %1738 = vmatpush.msra.mxu0 0.0
        %1739 = vmatpush.msra.mxu0 0.0
        %1740 = vmatpush.msra.mxu0 0.0
        %1741 = vmatpush.msra.mxu0 %v1721
        %1742 = vmatmul.f32.gmra.mxu0 %v1724
        %v1743 = vpop.f32.mrf.mxu0
        %v1744 = vadd.f32 0.0, %v1743
        %1745 = vdwg.mxu0
        %s1746 = scalar_lea.vmem %s8, 16
        %v1747 = vld [vmem:[%s1746] sm:$0x3]
        %v1748 = vpack.c.bf16 %v1744, %v1744
        %1749 = vrot.lane.b32.xlu0 %v1678, 124
        %v1750 = vpop.permute.xlu0 %1749
        %1751 = vrot.lane.b32.xlu0 %v1678, 92
        %v1752 = vpop.permute.xlu0 %1751
        %v1753 = vsel %vm740, %v1750, 0
        %v1755 = vsel %vm740, %v1752, 0
        %1757 = vmatpush.xpose.msra.mxu0 0.0
        %1758 = vmatpush.xpose.msra.mxu0 0.0
        %1759 = vmatpush.xpose.msra.mxu0 0.0
        %1760 = vmatpush.xpose.msra.mxu0 0.0
        %1761 = vmatpush.xpose.msra.mxu0 0.0
        %1762 = vmatpush.xpose.msra.mxu0 0.0
        %1763 = vmatpush.xpose.msra.mxu0 0.0
        %1764 = vmatpush.xpose.msra.mxu0 0.0
        %1765 = vmatpush.xpose.msra.mxu0 0.0
        %1766 = vmatpush.xpose.msra.mxu0 0.0
        %1767 = vmatpush.xpose.msra.mxu0 0.0
        %1768 = vmatpush.xpose.msra.mxu0 0.0
        %1769 = vmatpush.xpose.msra.mxu0 0.0
        %1770 = vmatpush.xpose.msra.mxu0 0.0
        %1771 = vmatpush.xpose.msra.mxu0 0.0
        %1772 = vmatpush.xpose.msra.mxu0 %v1755
        %1773 = vmatmul.f32.gmra.mxu0 %v1753
        %v1774 = vpop.f32.mrf.mxu0
        %v1775 = vadd.f32 0.0, %v1774
        %1776 = vdwg.mxu0
        %v1777 = vmul.f32 %v1775, 0.5
        %v1778 = vsel %vm766, %v1777, -inf
        %1779 = vmax.xlane.f32.xlu0 %v1778
        %v1780 = vpop.xlane.xlu0 %1779
        %v1781 = vsub.f32 %v1777, %v1780
        %v1782 = vmul.f32 %v1781, 1.442695
        %v1783 = vpow.pop %v1782
        %v1784 = vsel %vm766, %v1783, 0.0
        %1785 = vadd.xlane.f32.xlu0 %v1784
        %v1786 = vpop.xlane.xlu0 %1785
        %v1787 = vrcp.pop %v1786
        %v1788 = vmul.f32 %v1783, %v1787
        %1789 = vrot.lane.b32.xlu0 %v1678, 60
        %v1790 = vpop.permute.xlu0 %1789
        %v1793 = vsel %vm766, %v1788, 0
        %1795 = vmatpush.msra.mxu0 0.0
        %1796 = vmatpush.msra.mxu0 0.0
        %1797 = vmatpush.msra.mxu0 0.0
        %1798 = vmatpush.msra.mxu0 0.0
        %1799 = vmatpush.msra.mxu0 0.0
        %1800 = vmatpush.msra.mxu0 0.0
        %1801 = vmatpush.msra.mxu0 0.0
        %1802 = vmatpush.msra.mxu0 0.0
        %1803 = vmatpush.msra.mxu0 0.0
        %1804 = vmatpush.msra.mxu0 0.0
        %1805 = vmatpush.msra.mxu0 0.0
        %1806 = vmatpush.msra.mxu0 0.0
        %1807 = vmatpush.msra.mxu0 0.0
        %1808 = vmatpush.msra.mxu0 0.0
        %1809 = vmatpush.msra.mxu0 0.0
        %1810 = vmatpush.msra.mxu0 %v1790
        %1811 = vmatmul.f32.gmra.mxu0 %v1793
        %v1812 = vpop.f32.mrf.mxu0
        %v1813 = vadd.f32 0.0, %v1812
        %1814 = vdwg.mxu0
        %s1815 = scalar_lea.vmem %s8, 18
        %v1816 = vld [vmem:[%s1815] sm:$0x3]
        %v1817 = vpack.c.bf16 %v1813, %v1813
        %v1819 = vsel %vm740, %v1817, 0
        %v1822 = vsel %vm878, %v1816, 0
        %1824 = vmatpush.bf16.msra.mxu0 0
        %1825 = vmatpush.bf16.msra.mxu0 0
        %1826 = vmatpush.bf16.msra.mxu0 0
        %1827 = vmatpush.bf16.msra.mxu0 0
        %1828 = vmatpush.bf16.msra.mxu0 0
        %1829 = vmatpush.bf16.msra.mxu0 0
        %1830 = vmatpush.bf16.msra.mxu0 0
        %1831 = vmatpush.bf16.msra.mxu0 %v1822
        %1832 = vmatmul.bf16.gmra.mxu0 %v1819
        %v1833 = vpop.f32.mrf.mxu0
        %v1834 = vadd.f32 0.0, %v1833
        %v1835 = vpop.f32.mrf.mxu0
        %1836 = vdwg.mxu0
        %v1838 = vsel %vm740, %v1748, 0
        %v1841 = vsel %vm878, %v1747, 0
        %1843 = vmatpush.bf16.msra.mxu0 0
        %1844 = vmatpush.bf16.msra.mxu0 0
        %1845 = vmatpush.bf16.msra.mxu0 0
        %1846 = vmatpush.bf16.msra.mxu0 0
        %1847 = vmatpush.bf16.msra.mxu0 0
        %1848 = vmatpush.bf16.msra.mxu0 0
        %1849 = vmatpush.bf16.msra.mxu0 0
        %1850 = vmatpush.bf16.msra.mxu0 %v1841
        %1851 = vmatmul.bf16.gmra.mxu0 %v1838
        %v1852 = vpop.f32.mrf.mxu0
        %v1853 = vadd.f32 %v1834, %v1852
        %v1854 = vpop.f32.mrf.mxu0
        %1855 = vdwg.mxu0
        %1856 = vrot.lane.b32.xlu0 %v1678, 120
        %v1857 = vpop.permute.xlu0 %1856
        %1858 = vrot.lane.b32.xlu0 %v1678, 88
        %v1859 = vpop.permute.xlu0 %1858
        %v1860 = vsel %vm740, %v1857, 0
        %v1862 = vsel %vm740, %v1859, 0
        %1864 = vmatpush.xpose.msra.mxu0 0.0
        %1865 = vmatpush.xpose.msra.mxu0 0.0
        %1866 = vmatpush.xpose.msra.mxu0 0.0
        %1867 = vmatpush.xpose.msra.mxu0 0.0
        %1868 = vmatpush.xpose.msra.mxu0 0.0
        %1869 = vmatpush.xpose.msra.mxu0 0.0
        %1870 = vmatpush.xpose.msra.mxu0 0.0
        %1871 = vmatpush.xpose.msra.mxu0 0.0
        %1872 = vmatpush.xpose.msra.mxu0 0.0
        %1873 = vmatpush.xpose.msra.mxu0 0.0
        %1874 = vmatpush.xpose.msra.mxu0 0.0
        %1875 = vmatpush.xpose.msra.mxu0 0.0
        %1876 = vmatpush.xpose.msra.mxu0 0.0
        %1877 = vmatpush.xpose.msra.mxu0 0.0
        %1878 = vmatpush.xpose.msra.mxu0 0.0
        %1879 = vmatpush.xpose.msra.mxu0 %v1862
        %1880 = vmatmul.f32.gmra.mxu0 %v1860
        %v1881 = vpop.f32.mrf.mxu0
        %v1882 = vadd.f32 0.0, %v1881
        %1883 = vdwg.mxu0
        %v1884 = vmul.f32 %v1882, 0.5
        %v1885 = vsel %vm766, %v1884, -inf
        %1886 = vmax.xlane.f32.xlu0 %v1885
        %v1887 = vpop.xlane.xlu0 %1886
        %v1888 = vsub.f32 %v1884, %v1887
        %v1889 = vmul.f32 %v1888, 1.442695
        %v1890 = vpow.pop %v1889
        %v1891 = vsel %vm766, %v1890, 0.0
        %1892 = vadd.xlane.f32.xlu0 %v1891
        %v1893 = vpop.xlane.xlu0 %1892
        %v1894 = vrcp.pop %v1893
        %v1895 = vmul.f32 %v1890, %v1894
        %1896 = vrot.lane.b32.xlu0 %v1678, 56
        %v1897 = vpop.permute.xlu0 %1896
        %v1900 = vsel %vm766, %v1895, 0
        %1902 = vmatpush.msra.mxu0 0.0
        %1903 = vmatpush.msra.mxu0 0.0
        %1904 = vmatpush.msra.mxu0 0.0
        %1905 = vmatpush.msra.mxu0 0.0
        %1906 = vmatpush.msra.mxu0 0.0
        %1907 = vmatpush.msra.mxu0 0.0
        %1908 = vmatpush.msra.mxu0 0.0
        %1909 = vmatpush.msra.mxu0 0.0
        %1910 = vmatpush.msra.mxu0 0.0
        %1911 = vmatpush.msra.mxu0 0.0
        %1912 = vmatpush.msra.mxu0 0.0
        %1913 = vmatpush.msra.mxu0 0.0
        %1914 = vmatpush.msra.mxu0 0.0
        %1915 = vmatpush.msra.mxu0 0.0
        %1916 = vmatpush.msra.mxu0 0.0
        %1917 = vmatpush.msra.mxu0 %v1897
        %1918 = vmatmul.f32.gmra.mxu0 %v1900
        %v1919 = vpop.f32.mrf.mxu0
        %v1920 = vadd.f32 0.0, %v1919
        %1921 = vdwg.mxu0
        %s1922 = scalar_lea.vmem %s8, 20
        %v1923 = vld [vmem:[%s1922] sm:$0x3]
        %v1924 = vpack.c.bf16 %v1920, %v1920
        %v1926 = vsel %vm740, %v1924, 0
        %v1929 = vsel %vm878, %v1923, 0
        %1931 = vmatpush.bf16.msra.mxu0 0
        %1932 = vmatpush.bf16.msra.mxu0 0
        %1933 = vmatpush.bf16.msra.mxu0 0
        %1934 = vmatpush.bf16.msra.mxu0 0
        %1935 = vmatpush.bf16.msra.mxu0 0
        %1936 = vmatpush.bf16.msra.mxu0 0
        %1937 = vmatpush.bf16.msra.mxu0 0
        %1938 = vmatpush.bf16.msra.mxu0 %v1929
        %1939 = vmatmul.bf16.gmra.mxu0 %v1926
        %v1940 = vpop.f32.mrf.mxu0
        %v1941 = vadd.f32 0.0, %v1940
        %v1942 = vpop.f32.mrf.mxu0
        %1943 = vdwg.mxu0
        %v1944 = vadd.f32 %v1853, %v1941
        %1945 = vrot.lane.b32.xlu0 %v1678, 116
        %v1946 = vpop.permute.xlu0 %1945
        %1947 = vrot.lane.b32.xlu0 %v1678, 84
        %v1948 = vpop.permute.xlu0 %1947
        %v1949 = vsel %vm740, %v1946, 0
        %v1951 = vsel %vm740, %v1948, 0
        %1953 = vmatpush.xpose.msra.mxu0 0.0
        %1954 = vmatpush.xpose.msra.mxu0 0.0
        %1955 = vmatpush.xpose.msra.mxu0 0.0
        %1956 = vmatpush.xpose.msra.mxu0 0.0
        %1957 = vmatpush.xpose.msra.mxu0 0.0
        %1958 = vmatpush.xpose.msra.mxu0 0.0
        %1959 = vmatpush.xpose.msra.mxu0 0.0
        %1960 = vmatpush.xpose.msra.mxu0 0.0
        %1961 = vmatpush.xpose.msra.mxu0 0.0
        %1962 = vmatpush.xpose.msra.mxu0 0.0
        %1963 = vmatpush.xpose.msra.mxu0 0.0
        %1964 = vmatpush.xpose.msra.mxu0 0.0
        %1965 = vmatpush.xpose.msra.mxu0 0.0
        %1966 = vmatpush.xpose.msra.mxu0 0.0
        %1967 = vmatpush.xpose.msra.mxu0 0.0
        %1968 = vmatpush.xpose.msra.mxu0 %v1951
        %1969 = vmatmul.f32.gmra.mxu0 %v1949
        %v1970 = vpop.f32.mrf.mxu0
        %v1971 = vadd.f32 0.0, %v1970
        %1972 = vdwg.mxu0
        %v1973 = vmul.f32 %v1971, 0.5
        %v1974 = vsel %vm766, %v1973, -inf
        %1975 = vmax.xlane.f32.xlu0 %v1974
        %v1976 = vpop.xlane.xlu0 %1975
        %v1977 = vsub.f32 %v1973, %v1976
        %v1978 = vmul.f32 %v1977, 1.442695
        %v1979 = vpow.pop %v1978
        %v1980 = vsel %vm766, %v1979, 0.0
        %1981 = vadd.xlane.f32.xlu0 %v1980
        %v1982 = vpop.xlane.xlu0 %1981
        %v1983 = vrcp.pop %v1982
        %v1984 = vmul.f32 %v1979, %v1983
        %1985 = vrot.lane.b32.xlu0 %v1678, 52
        %v1986 = vpop.permute.xlu0 %1985
        %v1989 = vsel %vm766, %v1984, 0
        %1991 = vmatpush.msra.mxu0 0.0
        %1992 = vmatpush.msra.mxu0 0.0
        %1993 = vmatpush.msra.mxu0 0.0
        %1994 = vmatpush.msra.mxu0 0.0
        %1995 = vmatpush.msra.mxu0 0.0
        %1996 = vmatpush.msra.mxu0 0.0
        %1997 = vmatpush.msra.mxu0 0.0
        %1998 = vmatpush.msra.mxu0 0.0
        %1999 = vmatpush.msra.mxu0 0.0
        %2000 = vmatpush.msra.mxu0 0.0
        %2001 = vmatpush.msra.mxu0 0.0
        %2002 = vmatpush.msra.mxu0 0.0
        %2003 = vmatpush.msra.mxu0 0.0
        %2004 = vmatpush.msra.mxu0 0.0
        %2005 = vmatpush.msra.mxu0 0.0
        %2006 = vmatpush.msra.mxu0 %v1986
        %2007 = vmatmul.f32.gmra.mxu0 %v1989
        %v2008 = vpop.f32.mrf.mxu0
        %v2009 = vadd.f32 0.0, %v2008
        %2010 = vdwg.mxu0
        %s2011 = scalar_lea.vmem %s8, 22
        %v2012 = vld [vmem:[%s2011] sm:$0x3]
        %v2013 = vpack.c.bf16 %v2009, %v2009
        %v2015 = vsel %vm740, %v2013, 0
        %v2018 = vsel %vm878, %v2012, 0
        %2020 = vmatpush.bf16.msra.mxu0 0
        %2021 = vmatpush.bf16.msra.mxu0 0
        %2022 = vmatpush.bf16.msra.mxu0 0
        %2023 = vmatpush.bf16.msra.mxu0 0
        %2024 = vmatpush.bf16.msra.mxu0 0
        %2025 = vmatpush.bf16.msra.mxu0 0
        %2026 = vmatpush.bf16.msra.mxu0 0
        %2027 = vmatpush.bf16.msra.mxu0 %v2018
        %2028 = vmatmul.bf16.gmra.mxu0 %v2015
        %v2029 = vpop.f32.mrf.mxu0
        %v2030 = vadd.f32 0.0, %v2029
        %v2031 = vpop.f32.mrf.mxu0
        %2032 = vdwg.mxu0
        %v2033 = vadd.f32 %v1944, %v2030
        %2034 = vrot.lane.b32.xlu0 %v1678, 112
        %v2035 = vpop.permute.xlu0 %2034
        %2036 = vrot.lane.b32.xlu0 %v1678, 80
        %v2037 = vpop.permute.xlu0 %2036
        %v2038 = vsel %vm740, %v2035, 0
        %v2040 = vsel %vm740, %v2037, 0
        %2042 = vmatpush.xpose.msra.mxu0 0.0
        %2043 = vmatpush.xpose.msra.mxu0 0.0
        %2044 = vmatpush.xpose.msra.mxu0 0.0
        %2045 = vmatpush.xpose.msra.mxu0 0.0
        %2046 = vmatpush.xpose.msra.mxu0 0.0
        %2047 = vmatpush.xpose.msra.mxu0 0.0
        %2048 = vmatpush.xpose.msra.mxu0 0.0
        %2049 = vmatpush.xpose.msra.mxu0 0.0
        %2050 = vmatpush.xpose.msra.mxu0 0.0
        %2051 = vmatpush.xpose.msra.mxu0 0.0
        %2052 = vmatpush.xpose.msra.mxu0 0.0
        %2053 = vmatpush.xpose.msra.mxu0 0.0
        %2054 = vmatpush.xpose.msra.mxu0 0.0
        %2055 = vmatpush.xpose.msra.mxu0 0.0
        %2056 = vmatpush.xpose.msra.mxu0 0.0
        %2057 = vmatpush.xpose.msra.mxu0 %v2040
        %2058 = vmatmul.f32.gmra.mxu0 %v2038
        %v2059 = vpop.f32.mrf.mxu0
        %v2060 = vadd.f32 0.0, %v2059
        %2061 = vdwg.mxu0
        %v2062 = vmul.f32 %v2060, 0.5
        %v2063 = vsel %vm766, %v2062, -inf
        %2064 = vmax.xlane.f32.xlu0 %v2063
        %v2065 = vpop.xlane.xlu0 %2064
        %v2066 = vsub.f32 %v2062, %v2065
        %v2067 = vmul.f32 %v2066, 1.442695
        %v2068 = vpow.pop %v2067
        %v2069 = vsel %vm766, %v2068, 0.0
        %2070 = vadd.xlane.f32.xlu0 %v2069
        %v2071 = vpop.xlane.xlu0 %2070
        %v2072 = vrcp.pop %v2071
        %v2073 = vmul.f32 %v2068, %v2072
        %2074 = vrot.lane.b32.xlu0 %v1678, 48
        %v2075 = vpop.permute.xlu0 %2074
        %v2078 = vsel %vm766, %v2073, 0
        %2080 = vmatpush.msra.mxu0 0.0
        %2081 = vmatpush.msra.mxu0 0.0
        %2082 = vmatpush.msra.mxu0 0.0
        %2083 = vmatpush.msra.mxu0 0.0
        %2084 = vmatpush.msra.mxu0 0.0
        %2085 = vmatpush.msra.mxu0 0.0
        %2086 = vmatpush.msra.mxu0 0.0
        %2087 = vmatpush.msra.mxu0 0.0
        %2088 = vmatpush.msra.mxu0 0.0
        %2089 = vmatpush.msra.mxu0 0.0
        %2090 = vmatpush.msra.mxu0 0.0
        %2091 = vmatpush.msra.mxu0 0.0
        %2092 = vmatpush.msra.mxu0 0.0
        %2093 = vmatpush.msra.mxu0 0.0
        %2094 = vmatpush.msra.mxu0 0.0
        %2095 = vmatpush.msra.mxu0 %v2075
        %2096 = vmatmul.f32.gmra.mxu0 %v2078
        %v2097 = vpop.f32.mrf.mxu0
        %v2098 = vadd.f32 0.0, %v2097
        %2099 = vdwg.mxu0
        %s2100 = scalar_lea.vmem %s8, 24
        %v2101 = vld [vmem:[%s2100] sm:$0x3]
        %v2102 = vpack.c.bf16 %v2098, %v2098
        %v2104 = vsel %vm740, %v2102, 0
        %v2107 = vsel %vm878, %v2101, 0
        %2109 = vmatpush.bf16.msra.mxu0 0
        %2110 = vmatpush.bf16.msra.mxu0 0
        %2111 = vmatpush.bf16.msra.mxu0 0
        %2112 = vmatpush.bf16.msra.mxu0 0
        %2113 = vmatpush.bf16.msra.mxu0 0
        %2114 = vmatpush.bf16.msra.mxu0 0
        %2115 = vmatpush.bf16.msra.mxu0 0
        %2116 = vmatpush.bf16.msra.mxu0 %v2107
        %2117 = vmatmul.bf16.gmra.mxu0 %v2104
        %v2118 = vpop.f32.mrf.mxu0
        %v2119 = vadd.f32 0.0, %v2118
        %v2120 = vpop.f32.mrf.mxu0
        %2121 = vdwg.mxu0
        %v2122 = vadd.f32 %v2033, %v2119
        %2123 = vrot.lane.b32.xlu0 %v1678, 108
        %v2124 = vpop.permute.xlu0 %2123
        %2125 = vrot.lane.b32.xlu0 %v1678, 76
        %v2126 = vpop.permute.xlu0 %2125
        %v2127 = vsel %vm740, %v2124, 0
        %v2129 = vsel %vm740, %v2126, 0
        %2131 = vmatpush.xpose.msra.mxu0 0.0
        %2132 = vmatpush.xpose.msra.mxu0 0.0
        %2133 = vmatpush.xpose.msra.mxu0 0.0
        %2134 = vmatpush.xpose.msra.mxu0 0.0
        %2135 = vmatpush.xpose.msra.mxu0 0.0
        %2136 = vmatpush.xpose.msra.mxu0 0.0
        %2137 = vmatpush.xpose.msra.mxu0 0.0
        %2138 = vmatpush.xpose.msra.mxu0 0.0
        %2139 = vmatpush.xpose.msra.mxu0 0.0
        %2140 = vmatpush.xpose.msra.mxu0 0.0
        %2141 = vmatpush.xpose.msra.mxu0 0.0
        %2142 = vmatpush.xpose.msra.mxu0 0.0
        %2143 = vmatpush.xpose.msra.mxu0 0.0
        %2144 = vmatpush.xpose.msra.mxu0 0.0
        %2145 = vmatpush.xpose.msra.mxu0 0.0
        %2146 = vmatpush.xpose.msra.mxu0 %v2129
        %2147 = vmatmul.f32.gmra.mxu0 %v2127
        %v2148 = vpop.f32.mrf.mxu0
        %v2149 = vadd.f32 0.0, %v2148
        %2150 = vdwg.mxu0
        %v2151 = vmul.f32 %v2149, 0.5
        %v2152 = vsel %vm766, %v2151, -inf
        %2153 = vmax.xlane.f32.xlu0 %v2152
        %v2154 = vpop.xlane.xlu0 %2153
        %v2155 = vsub.f32 %v2151, %v2154
        %v2156 = vmul.f32 %v2155, 1.442695
        %v2157 = vpow.pop %v2156
        %v2158 = vsel %vm766, %v2157, 0.0
        %2159 = vadd.xlane.f32.xlu0 %v2158
        %v2160 = vpop.xlane.xlu0 %2159
        %v2161 = vrcp.pop %v2160
        %v2162 = vmul.f32 %v2157, %v2161
        %2163 = vrot.lane.b32.xlu0 %v1678, 44
        %v2164 = vpop.permute.xlu0 %2163
        %v2167 = vsel %vm766, %v2162, 0
        %2169 = vmatpush.msra.mxu0 0.0
        %2170 = vmatpush.msra.mxu0 0.0
        %2171 = vmatpush.msra.mxu0 0.0
        %2172 = vmatpush.msra.mxu0 0.0
        %2173 = vmatpush.msra.mxu0 0.0
        %2174 = vmatpush.msra.mxu0 0.0
        %2175 = vmatpush.msra.mxu0 0.0
        %2176 = vmatpush.msra.mxu0 0.0
        %2177 = vmatpush.msra.mxu0 0.0
        %2178 = vmatpush.msra.mxu0 0.0
        %2179 = vmatpush.msra.mxu0 0.0
        %2180 = vmatpush.msra.mxu0 0.0
        %2181 = vmatpush.msra.mxu0 0.0
        %2182 = vmatpush.msra.mxu0 0.0
        %2183 = vmatpush.msra.mxu0 0.0
        %2184 = vmatpush.msra.mxu0 %v2164
        %2185 = vmatmul.f32.gmra.mxu0 %v2167
        %v2186 = vpop.f32.mrf.mxu0
        %v2187 = vadd.f32 0.0, %v2186
        %2188 = vdwg.mxu0
        %s2189 = scalar_lea.vmem %s8, 26
        %v2190 = vld [vmem:[%s2189] sm:$0x3]
        %v2191 = vpack.c.bf16 %v2187, %v2187
        %v2193 = vsel %vm740, %v2191, 0
        %v2196 = vsel %vm878, %v2190, 0
        %2198 = vmatpush.bf16.msra.mxu0 0
        %2199 = vmatpush.bf16.msra.mxu0 0
        %2200 = vmatpush.bf16.msra.mxu0 0
        %2201 = vmatpush.bf16.msra.mxu0 0
        %2202 = vmatpush.bf16.msra.mxu0 0
        %2203 = vmatpush.bf16.msra.mxu0 0
        %2204 = vmatpush.bf16.msra.mxu0 0
        %2205 = vmatpush.bf16.msra.mxu0 %v2196
        %2206 = vmatmul.bf16.gmra.mxu0 %v2193
        %v2207 = vpop.f32.mrf.mxu0
        %v2208 = vadd.f32 0.0, %v2207
        %v2209 = vpop.f32.mrf.mxu0
        %2210 = vdwg.mxu0
        %v2211 = vadd.f32 %v2122, %v2208
        %2212 = vrot.lane.b32.xlu0 %v1678, 104
        %v2213 = vpop.permute.xlu0 %2212
        %2214 = vrot.lane.b32.xlu0 %v1678, 72
        %v2215 = vpop.permute.xlu0 %2214
        %v2216 = vsel %vm740, %v2213, 0
        %v2218 = vsel %vm740, %v2215, 0
        %2220 = vmatpush.xpose.msra.mxu0 0.0
        %2221 = vmatpush.xpose.msra.mxu0 0.0
        %2222 = vmatpush.xpose.msra.mxu0 0.0
        %2223 = vmatpush.xpose.msra.mxu0 0.0
        %2224 = vmatpush.xpose.msra.mxu0 0.0
        %2225 = vmatpush.xpose.msra.mxu0 0.0
        %2226 = vmatpush.xpose.msra.mxu0 0.0
        %2227 = vmatpush.xpose.msra.mxu0 0.0
        %2228 = vmatpush.xpose.msra.mxu0 0.0
        %2229 = vmatpush.xpose.msra.mxu0 0.0
        %2230 = vmatpush.xpose.msra.mxu0 0.0
        %2231 = vmatpush.xpose.msra.mxu0 0.0
        %2232 = vmatpush.xpose.msra.mxu0 0.0
        %2233 = vmatpush.xpose.msra.mxu0 0.0
        %2234 = vmatpush.xpose.msra.mxu0 0.0
        %2235 = vmatpush.xpose.msra.mxu0 %v2218
        %2236 = vmatmul.f32.gmra.mxu0 %v2216
        %v2237 = vpop.f32.mrf.mxu0
        %v2238 = vadd.f32 0.0, %v2237
        %2239 = vdwg.mxu0
        %v2240 = vmul.f32 %v2238, 0.5
        %v2241 = vsel %vm766, %v2240, -inf
        %2242 = vmax.xlane.f32.xlu0 %v2241
        %v2243 = vpop.xlane.xlu0 %2242
        %v2244 = vsub.f32 %v2240, %v2243
        %v2245 = vmul.f32 %v2244, 1.442695
        %v2246 = vpow.pop %v2245
        %v2247 = vsel %vm766, %v2246, 0.0
        %2248 = vadd.xlane.f32.xlu0 %v2247
        %v2249 = vpop.xlane.xlu0 %2248
        %v2250 = vrcp.pop %v2249
        %v2251 = vmul.f32 %v2246, %v2250
        %2252 = vrot.lane.b32.xlu0 %v1678, 40
        %v2253 = vpop.permute.xlu0 %2252
        %v2256 = vsel %vm766, %v2251, 0
        %2258 = vmatpush.msra.mxu0 0.0
        %2259 = vmatpush.msra.mxu0 0.0
        %2260 = vmatpush.msra.mxu0 0.0
        %2261 = vmatpush.msra.mxu0 0.0
        %2262 = vmatpush.msra.mxu0 0.0
        %2263 = vmatpush.msra.mxu0 0.0
        %2264 = vmatpush.msra.mxu0 0.0
        %2265 = vmatpush.msra.mxu0 0.0
        %2266 = vmatpush.msra.mxu0 0.0
        %2267 = vmatpush.msra.mxu0 0.0
        %2268 = vmatpush.msra.mxu0 0.0
        %2269 = vmatpush.msra.mxu0 0.0
        %2270 = vmatpush.msra.mxu0 0.0
        %2271 = vmatpush.msra.mxu0 0.0
        %2272 = vmatpush.msra.mxu0 0.0
        %2273 = vmatpush.msra.mxu0 %v2253
        %2274 = vmatmul.f32.gmra.mxu0 %v2256
        %v2275 = vpop.f32.mrf.mxu0
        %v2276 = vadd.f32 0.0, %v2275
        %2277 = vdwg.mxu0
        %s2278 = scalar_lea.vmem %s8, 28
        %v2279 = vld [vmem:[%s2278] sm:$0x3]
        %v2280 = vpack.c.bf16 %v2276, %v2276
        %v2282 = vsel %vm740, %v2280, 0
        %v2285 = vsel %vm878, %v2279, 0
        %2287 = vmatpush.bf16.msra.mxu0 0
        %2288 = vmatpush.bf16.msra.mxu0 0
        %2289 = vmatpush.bf16.msra.mxu0 0
        %2290 = vmatpush.bf16.msra.mxu0 0
        %2291 = vmatpush.bf16.msra.mxu0 0
        %2292 = vmatpush.bf16.msra.mxu0 0
        %2293 = vmatpush.bf16.msra.mxu0 0
        %2294 = vmatpush.bf16.msra.mxu0 %v2285
        %2295 = vmatmul.bf16.gmra.mxu0 %v2282
        %v2296 = vpop.f32.mrf.mxu0
        %v2297 = vadd.f32 0.0, %v2296
        %v2298 = vpop.f32.mrf.mxu0
        %2299 = vdwg.mxu0
        %v2300 = vadd.f32 %v2211, %v2297
        %2301 = vrot.lane.b32.xlu0 %v1678, 100
        %v2302 = vpop.permute.xlu0 %2301
        %2303 = vrot.lane.b32.xlu0 %v1678, 68
        %v2304 = vpop.permute.xlu0 %2303
        %v2305 = vsel %vm740, %v2302, 0
        %v2307 = vsel %vm740, %v2304, 0
        %2309 = vmatpush.xpose.msra.mxu0 0.0
        %2310 = vmatpush.xpose.msra.mxu0 0.0
        %2311 = vmatpush.xpose.msra.mxu0 0.0
        %2312 = vmatpush.xpose.msra.mxu0 0.0
        %2313 = vmatpush.xpose.msra.mxu0 0.0
        %2314 = vmatpush.xpose.msra.mxu0 0.0
        %2315 = vmatpush.xpose.msra.mxu0 0.0
        %2316 = vmatpush.xpose.msra.mxu0 0.0
        %2317 = vmatpush.xpose.msra.mxu0 0.0
        %2318 = vmatpush.xpose.msra.mxu0 0.0
        %2319 = vmatpush.xpose.msra.mxu0 0.0
        %2320 = vmatpush.xpose.msra.mxu0 0.0
        %2321 = vmatpush.xpose.msra.mxu0 0.0
        %2322 = vmatpush.xpose.msra.mxu0 0.0
        %2323 = vmatpush.xpose.msra.mxu0 0.0
        %2324 = vmatpush.xpose.msra.mxu0 %v2307
        %2325 = vmatmul.f32.gmra.mxu0 %v2305
        %v2326 = vpop.f32.mrf.mxu0
        %v2327 = vadd.f32 0.0, %v2326
        %2328 = vdwg.mxu0
        %v2329 = vmul.f32 %v2327, 0.5
        %v2330 = vsel %vm766, %v2329, -inf
        %2331 = vmax.xlane.f32.xlu0 %v2330
        %v2332 = vpop.xlane.xlu0 %2331
        %v2333 = vsub.f32 %v2329, %v2332
        %v2334 = vmul.f32 %v2333, 1.442695
        %v2335 = vpow.pop %v2334
        %v2336 = vsel %vm766, %v2335, 0.0
        %2337 = vadd.xlane.f32.xlu0 %v2336
        %v2338 = vpop.xlane.xlu0 %2337
        %v2339 = vrcp.pop %v2338
        %v2340 = vmul.f32 %v2335, %v2339
        %2341 = vrot.lane.b32.xlu0 %v1678, 36
        %v2342 = vpop.permute.xlu0 %2341
        %v2345 = vsel %vm766, %v2340, 0
        %2347 = vmatpush.msra.mxu0 0.0
        %2348 = vmatpush.msra.mxu0 0.0
        %2349 = vmatpush.msra.mxu0 0.0
        %2350 = vmatpush.msra.mxu0 0.0
        %2351 = vmatpush.msra.mxu0 0.0
        %2352 = vmatpush.msra.mxu0 0.0
        %2353 = vmatpush.msra.mxu0 0.0
        %2354 = vmatpush.msra.mxu0 0.0
        %2355 = vmatpush.msra.mxu0 0.0
        %2356 = vmatpush.msra.mxu0 0.0
        %2357 = vmatpush.msra.mxu0 0.0
        %2358 = vmatpush.msra.mxu0 0.0
        %2359 = vmatpush.msra.mxu0 0.0
        %2360 = vmatpush.msra.mxu0 0.0
        %2361 = vmatpush.msra.mxu0 0.0
        %2362 = vmatpush.msra.mxu0 %v2342
        %2363 = vmatmul.f32.gmra.mxu0 %v2345
        %v2364 = vpop.f32.mrf.mxu0
        %v2365 = vadd.f32 0.0, %v2364
        %2366 = vdwg.mxu0
        %s2367 = scalar_lea.vmem %s8, 30
        %v2368 = vld [vmem:[%s2367] sm:$0x3]
        %v2369 = vpack.c.bf16 %v2365, %v2365
        %v2371 = vsel %vm740, %v2369, 0
        %v2374 = vsel %vm878, %v2368, 0
        %2376 = vmatpush.bf16.msra.mxu0 0
        %2377 = vmatpush.bf16.msra.mxu0 0
        %2378 = vmatpush.bf16.msra.mxu0 0
        %2379 = vmatpush.bf16.msra.mxu0 0
        %2380 = vmatpush.bf16.msra.mxu0 0
        %2381 = vmatpush.bf16.msra.mxu0 0
        %2382 = vmatpush.bf16.msra.mxu0 0
        %2383 = vmatpush.bf16.msra.mxu0 %v2374
        %2384 = vmatmul.bf16.gmra.mxu0 %v2371
        %v2385 = vpop.f32.mrf.mxu0
        %v2386 = vadd.f32 0.0, %v2385
        %v2387 = vpop.f32.mrf.mxu0
        %2388 = vdwg.mxu0
        %v2389 = vadd.f32 %v2300, %v2386
        %v2390 = vadd.f32 %v1607, %v2389
        %s2391 = scalar_lea.vmem %s9, 1
        %v2392 = vld [vmem:[%s2391] sm:$0x1]
        %v2394 = vperm.slane %v2392, 0
        %v2396 = vadd.f32 %v2390, %v2394
        %s2397 = scalar_lea.vmem %s10, 1
        %v2398 = vld [vmem:[%s2397] sm:$0x1]
        %s2399 = scalar_lea.vmem %s11, 1
        %v2400 = vld [vmem:[%s2399] sm:$0x1]
        %v2401 = vsel %vm662, %v2396, 0.0
        %2402 = vadd.xlane.f32.xlu0 %v2401
        %v2403 = vpop.xlane.xlu0 %2402
        %v2404 = vmul.f32 %v2403, %v672
        %v2405 = vsub.f32 %v2396, %v2404
        %v2406 = vmul.f32 %v2405, %v2405
        %v2407 = vsel %vm662, %v2406, 0.0
        %2408 = vadd.xlane.f32.xlu0 %v2407
        %v2409 = vpop.xlane.xlu0 %2408
        %v2410 = vmul.f32 %v2409, %v672
        %v2411 = vadd.f32 %v2410, 1e-05
        %v2412 = vrsqrt.pop %v2411
        %v2413 = vmul.f32 %v2412, %v2411
        %v2414 = vmul.f32 %v2413, %v2412
        %v2415 = vmul.f32 0.5, %v2414
        %v2416 = vsub.f32 1.5, %v2415
        %v2417 = vmul.f32 %v2412, %v2416
        %vm2418 = vweird.f32 %v2411
        %vm2419 = vweird.f32 %v2412
        %vm2420 = vmor %vm2418, %vm2419
        %v2421 = vsel %vm2420, %v2412, %v2417
        %v2422 = vmul.f32 %v2405, %v2421
        %v2424 = vperm.slane %v2398, 0
        %v2426 = vmul.f32 %v2422, %v2424
        %v2428 = vperm.slane %v2400, 0
        %v2430 = vadd.f32 %v2426, %v2428
        %s2431 = scalar_lea.vmem %s12, 16
        %v2432 = vld [vmem:[%s2431] sm:$0xf]
        %v2433 = vld [vmem:[%s2431 + $0x4] sm:$0xf]
        %v2434 = vld [vmem:[%s2431 + $0x8] sm:$0xf]
        %v2435 = vld [vmem:[%s2431 + $0xc] sm:$0xf]
        %v2436 = vpack.c.bf16 %v2430, %v2430
        %s2437 = scalar_lea.vmem %s13, 1
        %v2438 = vld [vmem:[%s2437] sm:$0x1]
        %v2440 = vperm.slane %v2438, 0
        %v2446 = vunpack.c.l.b16 %v2432
        %v2447 = vunpack.c.l.b16 %v2433
        %v2448 = vunpack.c.l.b16 %v2434
        %v2449 = vunpack.c.l.b16 %v2435
        %v2450 = vpack.c.b16 %v2447, %v2446
        %v2451 = vpack.c.b16 %v2449, %v2448
        %v2455 = vsel %vm662, %v2436, 0
        %2457 = vmatpush.bf16.msra.mxu0 0
        %2458 = vmatpush.bf16.msra.mxu0 0
        %2459 = vmatpush.bf16.msra.mxu0 0
        %2460 = vmatpush.bf16.msra.mxu0 0
        %2461 = vmatpush.bf16.msra.mxu0 0
        %2462 = vmatpush.bf16.msra.mxu0 0
        %2463 = vmatpush.bf16.msra.mxu0 %v2451
        %2464 = vmatpush.bf16.msra.mxu0 %v2450
        %2465 = vmatmul.bf16.gmra.mxu0 %v2455
        %v2466 = vpop.f32.mrf.mxu0
        %v2467 = vadd.f32 %v2440, %v2466
        %v2468 = vpop.f32.mrf.mxu0
        %2469 = vdwg.mxu0
        %v2470 = vmax.f32 %v2467, 0.0
        %s2471 = scalar_lea.vmem %s14, 64
        %v2472 = vld [vmem:[%s2471] sm:$0xf]
        %v2473 = vld [vmem:[%s2471 + $0x4] sm:$0xf]
        %v2474 = vld [vmem:[%s2471 + $0x8] sm:$0xf]
        %v2475 = vld [vmem:[%s2471 + $0xc] sm:$0xf]
        %v2476 = vld [vmem:[%s2471 + $0x10] sm:$0xf]
        %v2477 = vld [vmem:[%s2471 + $0x14] sm:$0xf]
        %v2478 = vld [vmem:[%s2471 + $0x18] sm:$0xf]
        %v2479 = vld [vmem:[%s2471 + $0x1c] sm:$0xf]
        %v2480 = vld [vmem:[%s2471 + $0x20] sm:$0xf]
        %v2481 = vld [vmem:[%s2471 + $0x24] sm:$0xf]
        %v2482 = vld [vmem:[%s2471 + $0x28] sm:$0xf]
        %v2483 = vld [vmem:[%s2471 + $0x2c] sm:$0xf]
        %v2484 = vld [vmem:[%s2471 + $0x30] sm:$0xf]
        %v2485 = vld [vmem:[%s2471 + $0x34] sm:$0xf]
        %v2486 = vld [vmem:[%s2471 + $0x38] sm:$0xf]
        %v2487 = vld [vmem:[%s2471 + $0x3c] sm:$0xf]
        %v2488 = vpack.c.bf16 %v2470, %v2470
        %v2505 = vunpack.c.l.b16 %v2472
        %v2506 = vunpack.c.l.b16 %v2473
        %v2507 = vunpack.c.l.b16 %v2474
        %v2508 = vunpack.c.l.b16 %v2475
        %v2509 = vunpack.c.l.b16 %v2476
        %v2510 = vunpack.c.l.b16 %v2477
        %v2511 = vunpack.c.l.b16 %v2478
        %v2512 = vunpack.c.l.b16 %v2479
        %v2513 = vunpack.c.l.b16 %v2480
        %v2514 = vunpack.c.l.b16 %v2481
        %v2515 = vunpack.c.l.b16 %v2482
        %v2516 = vunpack.c.l.b16 %v2483
        %v2517 = vunpack.c.l.b16 %v2484
        %v2518 = vunpack.c.l.b16 %v2485
        %v2519 = vunpack.c.l.b16 %v2486
        %v2520 = vunpack.c.l.b16 %v2487
        %v2521 = vpack.c.b16 %v2506, %v2505
        %v2522 = vpack.c.b16 %v2508, %v2507
        %v2523 = vpack.c.b16 %v2510, %v2509
        %v2524 = vpack.c.b16 %v2512, %v2511
        %v2525 = vpack.c.b16 %v2514, %v2513
        %v2526 = vpack.c.b16 %v2516, %v2515
        %v2527 = vpack.c.b16 %v2518, %v2517
        %v2528 = vpack.c.b16 %v2520, %v2519
        %2537 = vmatpush.bf16.msra.mxu0 %v2528
        %2538 = vmatpush.bf16.msra.mxu0 %v2527
        %2539 = vmatpush.bf16.msra.mxu0 %v2526
        %2540 = vmatpush.bf16.msra.mxu0 %v2525
        %2541 = vmatpush.bf16.msra.mxu0 %v2524
        %2542 = vmatpush.bf16.msra.mxu0 %v2523
        %2543 = vmatpush.bf16.msra.mxu0 %v2522
        %2544 = vmatpush.bf16.msra.mxu0 %v2521
        %2545 = vmatmul.bf16.gmra.mxu0 %v2488
        %v2546 = vpop.f32.mrf.mxu0
        %v2547 = vadd.f32 0.0, %v2546
        %v2548 = vpop.f32.mrf.mxu0
        %2549 = vdwg.mxu0
        %v2550 = vadd.f32 %v2396, %v2547
        %s2551 = scalar_lea.vmem %s15, 1
        %v2552 = vld [vmem:[%s2551] sm:$0x1]
        %v2554 = vperm.slane %v2552, 0
        %v2556 = vadd.f32 %v2550, %v2554
        %v2557 = vld [vmem:[%s16] sm:$0x1]
        %v2558 = vld [vmem:[%s17] sm:$0x1]
        %v2559 = vsel %vm662, %v2556, 0.0
        %2560 = vadd.xlane.f32.xlu0 %v2559
        %v2561 = vpop.xlane.xlu0 %2560
        %v2562 = vmul.f32 %v2561, %v672
        %v2563 = vsub.f32 %v2556, %v2562
        %v2564 = vmul.f32 %v2563, %v2563
        %v2565 = vsel %vm662, %v2564, 0.0
        %2566 = vadd.xlane.f32.xlu0 %v2565
        %v2567 = vpop.xlane.xlu0 %2566
        %v2568 = vmul.f32 %v2567, %v672
        %v2569 = vadd.f32 %v2568, 1e-05
        %v2570 = vrsqrt.pop %v2569
        %v2571 = vmul.f32 %v2570, %v2569
        %v2572 = vmul.f32 %v2571, %v2570
        %v2573 = vmul.f32 0.5, %v2572
        %v2574 = vsub.f32 1.5, %v2573
        %v2575 = vmul.f32 %v2570, %v2574
        %vm2576 = vweird.f32 %v2569
        %vm2577 = vweird.f32 %v2570
        %vm2578 = vmor %vm2576, %vm2577
        %v2579 = vsel %vm2578, %v2570, %v2575
        %v2580 = vmul.f32 %v2563, %v2579
        %v2582 = vperm.slane %v2557, 0
        %v2584 = vmul.f32 %v2580, %v2582
        %v2586 = vperm.slane %v2558, 0
        %v2588 = vadd.f32 %v2584, %v2586
        %v2589 = vld [vmem:[%s18] sm:$0xf]
        %v2590 = vld [vmem:[%s18 + $0x4] sm:$0xf]
        %v2591 = vld [vmem:[%s18 + $0x8] sm:$0xf]
        %v2592 = vld [vmem:[%s18 + $0xc] sm:$0xf]
        %v2593 = vpack.c.bf16 %v2588, %v2588
        %v2594 = vld [vmem:[%s19] sm:$0x1]
        %v2596 = vperm.slane %v2594, 0
        %v2602 = vunpack.c.l.b16 %v2589
        %v2603 = vunpack.c.l.b16 %v2590
        %v2604 = vunpack.c.l.b16 %v2591
        %v2605 = vunpack.c.l.b16 %v2592
        %v2606 = vpack.c.b16 %v2603, %v2602
        %v2607 = vpack.c.b16 %v2605, %v2604
        %v2611 = vsel %vm662, %v2593, 0
        %2613 = vmatpush.bf16.msra.mxu0 0
        %2614 = vmatpush.bf16.msra.mxu0 0
        %2615 = vmatpush.bf16.msra.mxu0 0
        %2616 = vmatpush.bf16.msra.mxu0 0
        %2617 = vmatpush.bf16.msra.mxu0 0
        %2618 = vmatpush.bf16.msra.mxu0 0
        %2619 = vmatpush.bf16.msra.mxu0 %v2607
        %2620 = vmatpush.bf16.msra.mxu0 %v2606
        %2621 = vmatmul.bf16.gmra.mxu0 %v2611
        %v2622 = vpop.f32.mrf.mxu0
        %v2623 = vadd.f32 %v2596, %v2622
        %v2624 = vpop.f32.mrf.mxu0
        %2625 = vdwg.mxu0
        %2626 = vst.msk [vmem:[%s620] sm:$0xff] %vm640, %v2623
        %s2627 = sand.u32 %s467, 1
        %s2628 = scalar_lea.sflag [#allocation3], %s2627
        %s2629 = sand.u32 %s467, 1
        %s2630 = smul.addr %s2629, 8
        %s2631 = scalar_lea.vmem [#allocation2], %s2630
        // Predicated region
        $region101: #{trans_block_forward.1} parent=99 // pred_check
          %p2632 = pneg %p477
        $region102: #{trans_block_forward.1} parent=99 // pred_check_branch
          %2634 = sbr.rel (%p2632) target = $region104
        $region103: #{trans_block_forward.1} parent=99 // pred_region
          %2636 = vsyncadd %s2628, 0
          %s2637 = smul.addr %s34, 8
          %s2638 = scalar_lea.hbm %s20, %s2637
          %s2640 = sshll.u32 %s2631, 4
          %s2641 = int_to_ptr.vmem [resolvable:$true] %s2640
          %s2642 = sshll.u32 %s2638, 4
          %s2643 = int_to_ptr.hbm [resolvable:$true] %s2642
          %2645 = dma.vmem_to_hbm [thread:$0]  %s2641, 128, %s2643, %s2628
        $region104: #{trans_block_forward.1} parent=99 // pred_fallthru
          _
      $region100: #{trans_block_forward.1} parent=5 // pred_fallthru
        _
      %p2646 = scmp.le.s32.totalorder 2, %s29
      // Predicated region
      $region105: #{trans_block_forward.1} parent=5 // pred_check
        %p2647 = pneg %p2646
      $region106: #{trans_block_forward.1} parent=5 // pred_check_branch
        %2649 = sbr.rel (%p2647) target = $region108
      $region107: #{trans_block_forward.1} parent=5 // pred_region
        %s2650 = ssub.s32 %s29, 2
        // Predicated region
        $region109: #{trans_block_forward.1} parent=107 // pred_check
          %p2651 = pneg %p483
        $region110: #{trans_block_forward.1} parent=107 // pred_check_branch
          %2653 = sbr.rel (%p2651) target = $region112
        $region111: #{trans_block_forward.1} parent=107 // pred_region
          %s2654 = sand.u32 %s468, 1
          %s2655 = scalar_lea.sflag [#allocation3], %s2654
          %s2656 = sand.u32 %s468, 1
          %s2657 = smul.addr %s2656, 8
          %s2658 = scalar_lea.vmem [#allocation2], %s2657
          %2660 = dma.done %s2655, 128
        $region112: #{trans_block_forward.1} parent=107 // pred_fallthru
          _
      $region108: #{trans_block_forward.1} parent=5 // pred_fallthru
        _
    $region6: #{trans_block_forward.1} parent=1 // loop_footer
      %s33 = sadd.s32 1, %s29
    $region7: #{trans_block_forward.1} parent=1 // loop_footer_branch
      %28 = sbr.rel target = $region3
    $region8: #{trans_block_forward.1} parent=1 // loop_exit
      _
    %2661 = vsyncpa [#allocation3], 1
    %s2662 = scalar_lea.sflag [#allocation3], 1
    %2663 = vsyncpa %s2662, 1

</llo_original>
